<compile_context>
chip_gen: v7x
topology: tpu7x:2x2x1
jax: 0.10.0
libtpu: 0.0.40
codegen_flags: <defaults>
</compile_context>

<pallas_src>
import math

import jax
import jax.numpy as jnp
from jax.experimental import pallas as pl
from jax.experimental.pallas import tpu as pltpu

# ---------------------------------------------------------------------------
# Block config: (from_, block, args)   args for Conv = [c_in, c_out, k, stride]
# ---------------------------------------------------------------------------
BLOCK_CFG = [
    (-1,        "Conv",   [3, 16, 3, 2]),   # 0: stem, /2
    (-1,        "Conv",   [16, 32, 3, 2]),  # 1: /4
    (-1,        "Conv",   [32, 32, 1, 1]),  # 2: CSP branch a (cv1)
    (1,         "Conv",   [32, 32, 1, 1]),  # 3: CSP branch b (cv2, routed from layer 1)
    ([-1, 2],   "Concat", [1]),             # 4: concat branches along channels -> 64
    (-1,        "Conv",   [64, 64, 1, 1]),  # 5: merge conv
]

# Replicates: save.extend(x % i for x in from_ list if x != -1)
SAVE = sorted({(x % i) for i, (f, _, _) in enumerate(BLOCK_CFG)
               for x in ([f] if isinstance(f, int) else f) if x != -1})


def _round_up(x, m):
    return ((x + m - 1) // m) * m


def _silu(y):
    # SiLU with the divide moved onto the EUP reciprocal slot (review item).
    return y * pl.reciprocal(1.0 + jnp.exp(-y), approx=True)


# ---------------------------------------------------------------------------
# 3x3 stride-2 Conv + folded BN + SiLU  (layers 0 and 1)
# ---------------------------------------------------------------------------
def conv3x3_s2(x_nhwc, p):
    """3x3/s2/p1 conv via in-kernel patch assembly (no HBM im2col inflation)."""
    n, h, w, cin = x_nhwc.shape
    ho, wo = h // 2, w // 2
    hq, wq = ho + 1, wo + 1            # parity-component spatial extent (h, w even)
    cout = p["w2d"].shape[1]
    mrows = ho * wq                    # rows computed at full component width;
                                       # the extra "wrap" column is dropped afterwards

    # Pad + parity split (space-to-depth): a 1x rearrangement instead of a k*k im2col
    # copy.  Component (ph, pw) holds x_pad[:, 2q+ph, 2r+pw, :].
    xp = jnp.pad(x_nhwc, ((0, 0), (1, 1), (1, 1), (0, 0)))
    comps = [xp[:, ph::2, pw::2, :] for ph in (0, 1) for pw in (0, 1)]
    rows_p = _round_up(hq * wq + 1, 8)          # +1 headroom for the wrap-around tap
    x4 = jnp.stack(comps, axis=1).reshape(n, 4, hq * wq, cin)
    x4 = jnp.pad(x4, ((0, 0), (0, 0), (0, rows_p - hq * wq), (0, 0)))
    x4 = x4.reshape(n, 4 * rows_p, cin)         # f32 in HBM; bf16 cast happens in-kernel

    def kernel(x4_ref, w_ref, b_ref, o_ref):
        acc = jnp.zeros((mrows, cout), jnp.float32)
        for di in range(3):
            for dj in range(3):
                t = di * 3 + dj
                comp = 2 * (di % 2) + (dj % 2)
                start = comp * rows_p + (di // 2) * wq + (dj // 2)
                lhs = x4_ref[0, start:start + mrows, :].astype(jnp.bfloat16)
                acc = acc + jnp.dot(lhs, w_ref[t * cin:(t + 1) * cin, :],
                                    preferred_element_type=jnp.float32)
        y = acc + b_ref[...]                    # folded-BN bias (scale already in W)
        o_ref[0] = _silu(y).astype(o_ref.dtype)

    out_full = pl.pallas_call(
        kernel,
        out_shape=jax.ShapeDtypeStruct((n, mrows, cout), jnp.float32),
        grid=(n,),
        in_specs=[
            pl.BlockSpec((1, 4 * rows_p, cin), lambda i: (i, 0, 0)),
            pl.BlockSpec((9 * cin, cout), lambda i: (0, 0)),
            pl.BlockSpec((1, cout), lambda i: (0, 0)),
        ],
        out_specs=pl.BlockSpec((1, mrows, cout), lambda i: (i, 0, 0)),
        compiler_params=pltpu.CompilerParams(dimension_semantics=("parallel",)),
    )(x4, p["w2d"], p["bias"])

    # TODO(synk): for large resolutions add an output-row-band grid axis (toy sizes fit
    # the whole per-batch block in VMEM easily).
    return out_full.reshape(n, ho, wq, cout)[:, :, :wo, :]   # drop the wrap column


# ---------------------------------------------------------------------------
# Fused CSP tail: blocks 2+3 (branch 1x1 convs) + 4 (concat) + 5 (merge) + sigmoid
# ---------------------------------------------------------------------------
def csp_tail_fused(x1_nhwc, wb, bb, wm, bm):
    n, h, w, cin = x1_nhwc.shape
    m = n * h * w
    cmid, cout = wb.shape[1], wm.shape[1]
    x2d = x1_nhwc.reshape(m, cin)
    tm = m if m <= 512 else 512        # large row tiles; ragged last block is masked

    def kernel(x_ref, wb_ref, bb_ref, wm_ref, bm_ref, o_ref):
        x = x_ref[...].astype(jnp.bfloat16)
        # branch convs 2 & 3 on the shared input == one matmul against [W3 | W2];
        # the channel Concat of block 4 is free (it is the column layout).
        y = jnp.dot(x, wb_ref[...], preferred_element_type=jnp.float32) + bb_ref[...]
        y = _silu(y)
        # block 5 merge conv
        y = jnp.dot(y.astype(jnp.bfloat16), wm_ref[...],
                    preferred_element_type=jnp.float32) + bm_ref[...]
        y = _silu(y)
        # trailing nn.Sigmoid of CSPDarknet.forward, fused into the epilogue
        o_ref[...] = pl.reciprocal(1.0 + jnp.exp(-y), approx=False)

    out2d = pl.pallas_call(
        kernel,
        out_shape=jax.ShapeDtypeStruct((m, cout), jnp.float32),
        grid=(pl.cdiv(m, tm),),
        in_specs=[
            pl.BlockSpec((tm, cin), lambda i: (i, 0)),
            pl.BlockSpec((cin, cmid), lambda i: (0, 0)),
            pl.BlockSpec((1, cmid), lambda i: (0, 0)),
            pl.BlockSpec((cmid, cout), lambda i: (0, 0)),
            pl.BlockSpec((1, cout), lambda i: (0, 0)),
        ],
        out_specs=pl.BlockSpec((tm, cout), lambda i: (i, 0)),
        compiler_params=pltpu.CompilerParams(dimension_semantics=("parallel",)),
    )(x2d, wb, bb, wm, bm)
    return out2d.reshape(n, h, w, cout)


# ---------------------------------------------------------------------------
# Parameter init (deterministic; BN folded into the weights, eps = 1e-3)
# ---------------------------------------------------------------------------
def init_params(key):
    params = {}
    for i, (_f, btype, args) in enumerate(BLOCK_CFG):
        if btype != "Conv":
            params[i] = None
            continue
        cin, cout, k, _s = args
        key, k1, k2, k3, k4, k5 = jax.random.split(key, 6)
        fan_in = cin * k * k
        w = jax.random.normal(k1, (k, k, cin, cout), jnp.float32) / math.sqrt(fan_in)
        gamma = 1.0 + 0.1 * jax.random.normal(k2, (cout,), jnp.float32)
        beta = 0.1 * jax.random.normal(k3, (cout,), jnp.float32)
        mean = 0.1 * jax.random.normal(k4, (cout,), jnp.float32)
        var = 1.0 + 0.1 * jax.random.uniform(k5, (cout,), jnp.float32)
        eps = 1e-3                      # initialize_weights() sets BatchNorm2d.eps=1e-3
        scale = gamma / jnp.sqrt(var + eps)
        params[i] = dict(
            # BN scale folded into the weight columns (bias-only kernel epilogue);
            # weights stored bf16 for the MXU, bias kept f32 for the VPU epilogue.
            w2d=(w * scale).reshape(k * k * cin, cout).astype(jnp.bfloat16),
            bias=(beta - mean * scale).reshape(1, cout).astype(jnp.float32),
        )
    return params


# ---------------------------------------------------------------------------
# Forward pass (same semantics as CSPDarknet.forward for this BLOCK_CFG)
# ---------------------------------------------------------------------------
def csp_darknet_forward(x_nchw, params):
    x = jnp.transpose(x_nchw, (0, 2, 3, 1))     # NCHW -> NHWC for kernel compute
    x = conv3x3_s2(x, params[0])                # block 0
    x1 = conv3x3_s2(x, params[1])               # block 1 (== cache[1] in the torch code)
    # Blocks 2, 3, 4, 5 + final sigmoid fused into one kernel.  Valid because block 2
    # (from_=-1 -> layer 1) and block 3 (from_=1) consume the SAME tensor, so
    # concat([out3, out2]) == x1 @ [W3 | W2] with block-3 columns first ([-1, 2] order).
    wb = jnp.concatenate([params[3]["w2d"], params[2]["w2d"]], axis=1)
    bb = jnp.concatenate([params[3]["bias"], params[2]["bias"]], axis=1)
    y = csp_tail_fused(x1, wb, bb, params[5]["w2d"], params[5]["bias"])
    # TODO(synk): Detect head / _initialize_biases omitted -- this config has no Detect
    # block (detector_index == -1), so those branches never execute in the reference.
    return [jnp.transpose(y, (0, 3, 1, 2))]     # out = [sigmoid(last_output)], NCHW


# ---------------------------------------------------------------------------
# Reference (plain JAX, mirrors the PyTorch routing/cache/save logic)
# ---------------------------------------------------------------------------
def _ref_conv(x_nhwc, p, k, s):
    cin = x_nhwc.shape[-1]
    w = p["w2d"].reshape(k, k, cin, -1)         # bf16, BN-folded
    y = jax.lax.conv_general_dilated(
        x_nhwc.astype(jnp.bfloat16), w, (s, s),
        ((k // 2, k // 2), (k // 2, k // 2)),
        dimension_numbers=("NHWC", "HWIO", "NHWC"),
        preferred_element_type=jnp.float32)
    y = y + p["bias"].reshape(1, 1, 1, -1)
    return y * jax.nn.sigmoid(y)


def ref_forward(x_nchw, params):
    x = jnp.transpose(x_nchw, (0, 2, 3, 1))
    cache = []
    for i, (from_, btype, args) in enumerate(BLOCK_CFG):
        if from_ != -1:
            x = cache[from_] if isinstance(from_, int) else \
                [x if j == -1 else cache[j] for j in from_]
        if btype == "Conv":
            x = _ref_conv(x, params[i], args[2], args[3])
        elif btype == "Concat":
            x = jnp.concatenate(x, axis=-1)     # channel concat (axis=1 in NCHW)
        cache.append(x if i in SAVE else None)
    return [jnp.transpose(jax.nn.sigmoid(x), (0, 3, 1, 2))]


# ---------------------------------------------------------------------------
if __name__ == "__main__":
    key = jax.random.PRNGKey(0)
    kx, kp = jax.random.split(key)
    x = jax.random.normal(kx, (2, 3, 32, 32), jnp.float32)   # NCHW, like the torch input
    params = init_params(kp)

    fwd = jax.jit(csp_darknet_forward)
    out = [jax.block_until_ready(o) for o in fwd(x, params)]

    ref = ref_forward(x, params)
    # bf16 MXU operands + EUP-approx reciprocal in SiLU vs an f32-accurate lax.conv
    # reference (which shares only the bf16 operand casts) -> compare at 2e-2.
    for o, r in zip(out, ref):
        assert o.shape == r.shape, (o.shape, r.shape)
        assert jnp.allclose(o, r, rtol=2e-2, atol=2e-2), "mismatch vs reference"
    print("KERNEL_OK")
</pallas_src>

<mosaic_0001>
module attributes {stable_mosaic.version = 11 : i64} {
  func.func @kernel(%arg0: i32, %arg1: memref<1x1184x3xf32, #tpu.memory_space<vmem>>, %arg2: memref<27x16xbf16, #tpu.memory_space<vmem>>, %arg3: memref<1x16xf32, #tpu.memory_space<vmem>>, %arg4: memref<1x272x16xf32, #tpu.memory_space<vmem>>) attributes {dimension_semantics = [#tpu.dimension_semantics<parallel>], iteration_bounds = array<i64: 2>, scalar_prefetch = 0 : i64, scratch_operands = 0 : i64, tpu.core_type = #tpu.core_type<tc>, window_params = [{transform_indices = @transform_0, window_bounds = array<i64: 1, 1184, 3>}, {pipeline_mode = #tpu.pipeline_mode<synchronous>, transform_indices = @transform_1, window_bounds = array<i64: 27, 16>}, {pipeline_mode = #tpu.pipeline_mode<synchronous>, transform_indices = @transform_2, window_bounds = array<i64: 1, 16>}, {transform_indices = @transform_3, window_bounds = array<i64: 1, 272, 16>}]} {
    %cst = arith.constant 0.000000e+00 : f32
    %0 = vector.broadcast %cst : f32 to vector<272x16xf32>
    %c0 = arith.constant 0 : index
    %c0_0 = arith.constant 0 : index
    %c0_1 = arith.constant 0 : index
    %1 = vector.load %arg1[%c0, %c0_0, %c0_1] : memref<1x1184x3xf32, #tpu.memory_space<vmem>>, vector<1x272x3xf32>
    %2 = vector.shape_cast %1 : vector<1x272x3xf32> to vector<272x3xf32>
    %3 = arith.truncf %2 : vector<272x3xf32> to vector<272x3xbf16>
    %c0_2 = arith.constant 0 : index
    %c0_3 = arith.constant 0 : index
    %4 = vector.load %arg2[%c0_2, %c0_3] : memref<27x16xbf16, #tpu.memory_space<vmem>>, vector<3x16xbf16>
    %cst_4 = arith.constant dense<0.000000e+00> : vector<272x16xf32>
    %5 = tpu.matmul %3, %4, %cst_4 {dimension_numbers = #tpu.dot_dimension_numbers<[1], [0], [0], [1], [0, 0, 1, 1], [], []>} : vector<272x3xbf16>, vector<3x16xbf16>, vector<272x16xf32> -> vector<272x16xf32>
    %6 = arith.addf %0, %5 : vector<272x16xf32>
    %c0_5 = arith.constant 0 : index
    %c296 = arith.constant 296 : index
    %c0_6 = arith.constant 0 : index
    %7 = vector.load %arg1[%c0_5, %c296, %c0_6] : memref<1x1184x3xf32, #tpu.memory_space<vmem>>, vector<1x272x3xf32>
    %8 = vector.shape_cast %7 : vector<1x272x3xf32> to vector<272x3xf32>
    %9 = arith.truncf %8 : vector<272x3xf32> to vector<272x3xbf16>
    %c3 = arith.constant 3 : index
    %c0_7 = arith.constant 0 : index
    %10 = vector.load %arg2[%c3, %c0_7] : memref<27x16xbf16, #tpu.memory_space<vmem>>, vector<3x16xbf16>
    %cst_8 = arith.constant dense<0.000000e+00> : vector<272x16xf32>
    %11 = tpu.matmul %9, %10, %cst_8 {dimension_numbers = #tpu.dot_dimension_numbers<[1], [0], [0], [1], [0, 0, 1, 1], [], []>} : vector<272x3xbf16>, vector<3x16xbf16>, vector<272x16xf32> -> vector<272x16xf32>
    %12 = arith.addf %6, %11 : vector<272x16xf32>
    %c0_9 = arith.constant 0 : index
    %c1 = arith.constant 1 : index
    %c0_10 = arith.constant 0 : index
    %13 = vector.load %arg1[%c0_9, %c1, %c0_10] : memref<1x1184x3xf32, #tpu.memory_space<vmem>>, vector<1x272x3xf32>
    %14 = vector.shape_cast %13 : vector<1x272x3xf32> to vector<272x3xf32>
    %15 = arith.truncf %14 : vector<272x3xf32> to vector<272x3xbf16>
    %c6 = arith.constant 6 : index
    %c0_11 = arith.constant 0 : index
    %16 = vector.load %arg2[%c6, %c0_11] : memref<27x16xbf16, #tpu.memory_space<vmem>>, vector<3x16xbf16>
    %cst_12 = arith.constant dense<0.000000e+00> : vector<272x16xf32>
    %17 = tpu.matmul %15, %16, %cst_12 {dimension_numbers = #tpu.dot_dimension_numbers<[1], [0], [0], [1], [0, 0, 1, 1], [], []>} : vector<272x3xbf16>, vector<3x16xbf16>, vector<272x16xf32> -> vector<272x16xf32>
    %18 = arith.addf %12, %17 : vector<272x16xf32>
    %c0_13 = arith.constant 0 : index
    %c592 = arith.constant 592 : index
    %c0_14 = arith.constant 0 : index
    %19 = vector.load %arg1[%c0_13, %c592, %c0_14] : memref<1x1184x3xf32, #tpu.memory_space<vmem>>, vector<1x272x3xf32>
    %20 = vector.shape_cast %19 : vector<1x272x3xf32> to vector<272x3xf32>
    %21 = arith.truncf %20 : vector<272x3xf32> to vector<272x3xbf16>
    %c9 = arith.constant 9 : index
    %c0_15 = arith.constant 0 : index
    %22 = vector.load %arg2[%c9, %c0_15] : memref<27x16xbf16, #tpu.memory_space<vmem>>, vector<3x16xbf16>
    %cst_16 = arith.constant dense<0.000000e+00> : vector<272x16xf32>
    %23 = tpu.matmul %21, %22, %cst_16 {dimension_numbers = #tpu.dot_dimension_numbers<[1], [0], [0], [1], [0, 0, 1, 1], [], []>} : vector<272x3xbf16>, vector<3x16xbf16>, vector<272x16xf32> -> vector<272x16xf32>
    %24 = arith.addf %18, %23 : vector<272x16xf32>
    %c0_17 = arith.constant 0 : index
    %c888 = arith.constant 888 : index
    %c0_18 = arith.constant 0 : index
    %25 = vector.load %arg1[%c0_17, %c888, %c0_18] : memref<1x1184x3xf32, #tpu.memory_space<vmem>>, vector<1x272x3xf32>
    %26 = vector.shape_cast %25 : vector<1x272x3xf32> to vector<272x3xf32>
    %27 = arith.truncf %26 : vector<272x3xf32> to vector<272x3xbf16>
    %c12 = arith.constant 12 : index
    %c0_19 = arith.constant 0 : index
    %28 = vector.load %arg2[%c12, %c0_19] : memref<27x16xbf16, #tpu.memory_space<vmem>>, vector<3x16xbf16>
    %cst_20 = arith.constant dense<0.000000e+00> : vector<272x16xf32>
    %29 = tpu.matmul %27, %28, %cst_20 {dimension_numbers = #tpu.dot_dimension_numbers<[1], [0], [0], [1], [0, 0, 1, 1], [], []>} : vector<272x3xbf16>, vector<3x16xbf16>, vector<272x16xf32> -> vector<272x16xf32>
    %30 = arith.addf %24, %29 : vector<272x16xf32>
    %c0_21 = arith.constant 0 : index
    %c593 = arith.constant 593 : index
    %c0_22 = arith.constant 0 : index
    %31 = vector.load %arg1[%c0_21, %c593, %c0_22] : memref<1x1184x3xf32, #tpu.memory_space<vmem>>, vector<1x272x3xf32>
    %32 = vector.shape_cast %31 : vector<1x272x3xf32> to vector<272x3xf32>
    %33 = arith.truncf %32 : vector<272x3xf32> to vector<272x3xbf16>
    %c15 = arith.constant 15 : index
    %c0_23 = arith.constant 0 : index
    %34 = vector.load %arg2[%c15, %c0_23] : memref<27x16xbf16, #tpu.memory_space<vmem>>, vector<3x16xbf16>
    %cst_24 = arith.constant dense<0.000000e+00> : vector<272x16xf32>
    %35 = tpu.matmul %33, %34, %cst_24 {dimension_numbers = #tpu.dot_dimension_numbers<[1], [0], [0], [1], [0, 0, 1, 1], [], []>} : vector<272x3xbf16>, vector<3x16xbf16>, vector<272x16xf32> -> vector<272x16xf32>
    %36 = arith.addf %30, %35 : vector<272x16xf32>
    %c0_25 = arith.constant 0 : index
    %c17 = arith.constant 17 : index
    %c0_26 = arith.constant 0 : index
    %37 = vector.load %arg1[%c0_25, %c17, %c0_26] : memref<1x1184x3xf32, #tpu.memory_space<vmem>>, vector<1x272x3xf32>
    %38 = vector.shape_cast %37 : vector<1x272x3xf32> to vector<272x3xf32>
    %39 = arith.truncf %38 : vector<272x3xf32> to vector<272x3xbf16>
    %c18 = arith.constant 18 : index
    %c0_27 = arith.constant 0 : index
    %40 = vector.load %arg2[%c18, %c0_27] : memref<27x16xbf16, #tpu.memory_space<vmem>>, vector<3x16xbf16>
    %cst_28 = arith.constant dense<0.000000e+00> : vector<272x16xf32>
    %41 = tpu.matmul %39, %40, %cst_28 {dimension_numbers = #tpu.dot_dimension_numbers<[1], [0], [0], [1], [0, 0, 1, 1], [], []>} : vector<272x3xbf16>, vector<3x16xbf16>, vector<272x16xf32> -> vector<272x16xf32>
    %42 = arith.addf %36, %41 : vector<272x16xf32>
    %c0_29 = arith.constant 0 : index
    %c313 = arith.constant 313 : index
    %c0_30 = arith.constant 0 : index
    %43 = vector.load %arg1[%c0_29, %c313, %c0_30] : memref<1x1184x3xf32, #tpu.memory_space<vmem>>, vector<1x272x3xf32>
    %44 = vector.shape_cast %43 : vector<1x272x3xf32> to vector<272x3xf32>
    %45 = arith.truncf %44 : vector<272x3xf32> to vector<272x3xbf16>
    %c21 = arith.constant 21 : index
    %c0_31 = arith.constant 0 : index
    %46 = vector.load %arg2[%c21, %c0_31] : memref<27x16xbf16, #tpu.memory_space<vmem>>, vector<3x16xbf16>
    %cst_32 = arith.constant dense<0.000000e+00> : vector<272x16xf32>
    %47 = tpu.matmul %45, %46, %cst_32 {dimension_numbers = #tpu.dot_dimension_numbers<[1], [0], [0], [1], [0, 0, 1, 1], [], []>} : vector<272x3xbf16>, vector<3x16xbf16>, vector<272x16xf32> -> vector<272x16xf32>
    %48 = arith.addf %42, %47 : vector<272x16xf32>
    %c0_33 = arith.constant 0 : index
    %c18_34 = arith.constant 18 : index
    %c0_35 = arith.constant 0 : index
    %49 = vector.load %arg1[%c0_33, %c18_34, %c0_35] : memref<1x1184x3xf32, #tpu.memory_space<vmem>>, vector<1x272x3xf32>
    %50 = vector.shape_cast %49 : vector<1x272x3xf32> to vector<272x3xf32>
    %51 = arith.truncf %50 : vector<272x3xf32> to vector<272x3xbf16>
    %c24 = arith.constant 24 : index
    %c0_36 = arith.constant 0 : index
    %52 = vector.load %arg2[%c24, %c0_36] : memref<27x16xbf16, #tpu.memory_space<vmem>>, vector<3x16xbf16>
    %cst_37 = arith.constant dense<0.000000e+00> : vector<272x16xf32>
    %53 = tpu.matmul %51, %52, %cst_37 {dimension_numbers = #tpu.dot_dimension_numbers<[1], [0], [0], [1], [0, 0, 1, 1], [], []>} : vector<272x3xbf16>, vector<3x16xbf16>, vector<272x16xf32> -> vector<272x16xf32>
    %54 = arith.addf %48, %53 : vector<272x16xf32>
    %c0_38 = arith.constant 0 : index
    %c0_39 = arith.constant 0 : index
    %55 = vector.load %arg3[%c0_38, %c0_39] : memref<1x16xf32, #tpu.memory_space<vmem>>, vector<1x16xf32>
    %56 = vector.broadcast %55 : vector<1x16xf32> to vector<272x16xf32>
    %57 = arith.addf %54, %56 : vector<272x16xf32>
    %cst_40 = arith.constant 0.000000e+00 : f32
    %58 = vector.broadcast %cst_40 : f32 to vector<272x16xf32>
    %59 = arith.subf %58, %57 : vector<272x16xf32>
    %60 = math.exp %59 : vector<272x16xf32>
    %cst_41 = arith.constant 1.000000e+00 : f32
    %61 = vector.broadcast %cst_41 : f32 to vector<272x16xf32>
    %62 = arith.addf %61, %60 : vector<272x16xf32>
    %63 = tpu.reciprocal %62 {approx = true} : vector<272x16xf32> -> vector<272x16xf32>
    %64 = arith.mulf %57, %63 : vector<272x16xf32>
    %c0_42 = arith.constant 0 : index
    %c0_43 = arith.constant 0 : index
    %c0_44 = arith.constant 0 : index
    %65 = vector.load %arg4[%c0_42, %c0_43, %c0_44] : memref<1x272x16xf32, #tpu.memory_space<vmem>>, vector<1x272x16xf32>
    %66 = vector.shape_cast %65 : vector<1x272x16xf32> to vector<272x16xf32>
    %67 = vector.shape_cast %64 : vector<272x16xf32> to vector<1x272x16xf32>
    tpu.vector_store %arg4[%c0_42, %c0_43, %c0_44], %67 {strides = array<i32>} : memref<1x272x16xf32, #tpu.memory_space<vmem>>, vector<1x272x16xf32>,
    return
  }
  func.func @transform_0(%arg0: i32) -> (i32, i32, i32) {
    %c0_i32 = arith.constant 0 : i32
    %c0_i32_0 = arith.constant 0 : i32
    %c0_i32_1 = arith.constant 0 : i32
    return %arg0, %c0_i32, %c0_i32_0 : i32, i32, i32
  }
  func.func @transform_1(%arg0: i32) -> (i32, i32) {
    %c0_i32 = arith.constant 0 : i32
    %c0_i32_0 = arith.constant 0 : i32
    %c0_i32_1 = arith.constant 0 : i32
    return %c0_i32, %c0_i32_0 : i32, i32
  }
  func.func @transform_2(%arg0: i32) -> (i32, i32) {
    %c0_i32 = arith.constant 0 : i32
    %c0_i32_0 = arith.constant 0 : i32
    %c0_i32_1 = arith.constant 0 : i32
    return %c0_i32, %c0_i32_0 : i32, i32
  }
  func.func @transform_3(%arg0: i32) -> (i32, i32, i32) {
    %c0_i32 = arith.constant 0 : i32
    %c0_i32_0 = arith.constant 0 : i32
    %c0_i32_1 = arith.constant 0 : i32
    return %arg0, %c0_i32, %c0_i32_0 : i32, i32, i32
  }
}

module attributes {stable_mosaic.version = 11 : i64} {
  func.func @kernel(%arg0: i32, %arg1: memref<1x352x16xf32, #tpu.memory_space<vmem>>, %arg2: memref<144x32xbf16, #tpu.memory_space<vmem>>, %arg3: memref<1x32xf32, #tpu.memory_space<vmem>>, %arg4: memref<1x72x32xf32, #tpu.memory_space<vmem>>) attributes {dimension_semantics = [#tpu.dimension_semantics<parallel>], iteration_bounds = array<i64: 2>, scalar_prefetch = 0 : i64, scratch_operands = 0 : i64, tpu.core_type = #tpu.core_type<tc>, window_params = [{transform_indices = @transform_0, window_bounds = array<i64: 1, 352, 16>}, {pipeline_mode = #tpu.pipeline_mode<synchronous>, transform_indices = @transform_1, window_bounds = array<i64: 144, 32>}, {pipeline_mode = #tpu.pipeline_mode<synchronous>, transform_indices = @transform_2, window_bounds = array<i64: 1, 32>}, {transform_indices = @transform_3, window_bounds = array<i64: 1, 72, 32>}]} {
    %cst = arith.constant 0.000000e+00 : f32
    %0 = vector.broadcast %cst : f32 to vector<72x32xf32>
    %c0 = arith.constant 0 : index
    %c0_0 = arith.constant 0 : index
    %c0_1 = arith.constant 0 : index
    %1 = vector.load %arg1[%c0, %c0_0, %c0_1] : memref<1x352x16xf32, #tpu.memory_space<vmem>>, vector<1x72x16xf32>
    %2 = vector.shape_cast %1 : vector<1x72x16xf32> to vector<72x16xf32>
    %3 = arith.truncf %2 : vector<72x16xf32> to vector<72x16xbf16>
    %c0_2 = arith.constant 0 : index
    %c0_3 = arith.constant 0 : index
    %4 = vector.load %arg2[%c0_2, %c0_3] : memref<144x32xbf16, #tpu.memory_space<vmem>>, vector<16x32xbf16>
    %cst_4 = arith.constant dense<0.000000e+00> : vector<72x32xf32>
    %5 = tpu.matmul %3, %4, %cst_4 {dimension_numbers = #tpu.dot_dimension_numbers<[1], [0], [0], [1], [0, 0, 1, 1], [], []>} : vector<72x16xbf16>, vector<16x32xbf16>, vector<72x32xf32> -> vector<72x32xf32>
    %6 = arith.addf %0, %5 : vector<72x32xf32>
    %c0_5 = arith.constant 0 : index
    %c88 = arith.constant 88 : index
    %c0_6 = arith.constant 0 : index
    %7 = vector.load %arg1[%c0_5, %c88, %c0_6] : memref<1x352x16xf32, #tpu.memory_space<vmem>>, vector<1x72x16xf32>
    %8 = vector.shape_cast %7 : vector<1x72x16xf32> to vector<72x16xf32>
    %9 = arith.truncf %8 : vector<72x16xf32> to vector<72x16xbf16>
    %c16 = arith.constant 16 : index
    %c0_7 = arith.constant 0 : index
    %10 = vector.load %arg2[%c16, %c0_7] : memref<144x32xbf16, #tpu.memory_space<vmem>>, vector<16x32xbf16>
    %cst_8 = arith.constant dense<0.000000e+00> : vector<72x32xf32>
    %11 = tpu.matmul %9, %10, %cst_8 {dimension_numbers = #tpu.dot_dimension_numbers<[1], [0], [0], [1], [0, 0, 1, 1], [], []>} : vector<72x16xbf16>, vector<16x32xbf16>, vector<72x32xf32> -> vector<72x32xf32>
    %12 = arith.addf %6, %11 : vector<72x32xf32>
    %c0_9 = arith.constant 0 : index
    %c1 = arith.constant 1 : index
    %c0_10 = arith.constant 0 : index
    %13 = vector.load %arg1[%c0_9, %c1, %c0_10] : memref<1x352x16xf32, #tpu.memory_space<vmem>>, vector<1x72x16xf32>
    %14 = vector.shape_cast %13 : vector<1x72x16xf32> to vector<72x16xf32>
    %15 = arith.truncf %14 : vector<72x16xf32> to vector<72x16xbf16>
    %c32 = arith.constant 32 : index
    %c0_11 = arith.constant 0 : index
    %16 = vector.load %arg2[%c32, %c0_11] : memref<144x32xbf16, #tpu.memory_space<vmem>>, vector<16x32xbf16>
    %cst_12 = arith.constant dense<0.000000e+00> : vector<72x32xf32>
    %17 = tpu.matmul %15, %16, %cst_12 {dimension_numbers = #tpu.dot_dimension_numbers<[1], [0], [0], [1], [0, 0, 1, 1], [], []>} : vector<72x16xbf16>, vector<16x32xbf16>, vector<72x32xf32> -> vector<72x32xf32>
    %18 = arith.addf %12, %17 : vector<72x32xf32>
    %c0_13 = arith.constant 0 : index
    %c176 = arith.constant 176 : index
    %c0_14 = arith.constant 0 : index
    %19 = vector.load %arg1[%c0_13, %c176, %c0_14] : memref<1x352x16xf32, #tpu.memory_space<vmem>>, vector<1x72x16xf32>
    %20 = vector.shape_cast %19 : vector<1x72x16xf32> to vector<72x16xf32>
    %21 = arith.truncf %20 : vector<72x16xf32> to vector<72x16xbf16>
    %c48 = arith.constant 48 : index
    %c0_15 = arith.constant 0 : index
    %22 = vector.load %arg2[%c48, %c0_15] : memref<144x32xbf16, #tpu.memory_space<vmem>>, vector<16x32xbf16>
    %cst_16 = arith.constant dense<0.000000e+00> : vector<72x32xf32>
    %23 = tpu.matmul %21, %22, %cst_16 {dimension_numbers = #tpu.dot_dimension_numbers<[1], [0], [0], [1], [0, 0, 1, 1], [], []>} : vector<72x16xbf16>, vector<16x32xbf16>, vector<72x32xf32> -> vector<72x32xf32>
    %24 = arith.addf %18, %23 : vector<72x32xf32>
    %c0_17 = arith.constant 0 : index
    %c264 = arith.constant 264 : index
    %c0_18 = arith.constant 0 : index
    %25 = vector.load %arg1[%c0_17, %c264, %c0_18] : memref<1x352x16xf32, #tpu.memory_space<vmem>>, vector<1x72x16xf32>
    %26 = vector.shape_cast %25 : vector<1x72x16xf32> to vector<72x16xf32>
    %27 = arith.truncf %26 : vector<72x16xf32> to vector<72x16xbf16>
    %c64 = arith.constant 64 : index
    %c0_19 = arith.constant 0 : index
    %28 = vector.load %arg2[%c64, %c0_19] : memref<144x32xbf16, #tpu.memory_space<vmem>>, vector<16x32xbf16>
    %cst_20 = arith.constant dense<0.000000e+00> : vector<72x32xf32>
    %29 = tpu.matmul %27, %28, %cst_20 {dimension_numbers = #tpu.dot_dimension_numbers<[1], [0], [0], [1], [0, 0, 1, 1], [], []>} : vector<72x16xbf16>, vector<16x32xbf16>, vector<72x32xf32> -> vector<72x32xf32>
    %30 = arith.addf %24, %29 : vector<72x32xf32>
    %c0_21 = arith.constant 0 : index
    %c177 = arith.constant 177 : index
    %c0_22 = arith.constant 0 : index
    %31 = vector.load %arg1[%c0_21, %c177, %c0_22] : memref<1x352x16xf32, #tpu.memory_space<vmem>>, vector<1x72x16xf32>
    %32 = vector.shape_cast %31 : vector<1x72x16xf32> to vector<72x16xf32>
    %33 = arith.truncf %32 : vector<72x16xf32> to vector<72x16xbf16>
    %c80 = arith.constant 80 : index
    %c0_23 = arith.constant 0 : index
    %34 = vector.load %arg2[%c80, %c0_23] : memref<144x32xbf16, #tpu.memory_space<vmem>>, vector<16x32xbf16>
    %cst_24 = arith.constant dense<0.000000e+00> : vector<72x32xf32>
    %35 = tpu.matmul %33, %34, %cst_24 {dimension_numbers = #tpu.dot_dimension_numbers<[1], [0], [0], [1], [0, 0, 1, 1], [], []>} : vector<72x16xbf16>, vector<16x32xbf16>, vector<72x32xf32> -> vector<72x32xf32>
    %36 = arith.addf %30, %35 : vector<72x32xf32>
    %c0_25 = arith.constant 0 : index
    %c9 = arith.constant 9 : index
    %c0_26 = arith.constant 0 : index
    %37 = vector.load %arg1[%c0_25, %c9, %c0_26] : memref<1x352x16xf32, #tpu.memory_space<vmem>>, vector<1x72x16xf32>
    %38 = vector.shape_cast %37 : vector<1x72x16xf32> to vector<72x16xf32>
    %39 = arith.truncf %38 : vector<72x16xf32> to vector<72x16xbf16>
    %c96 = arith.constant 96 : index
    %c0_27 = arith.constant 0 : index
    %40 = vector.load %arg2[%c96, %c0_27] : memref<144x32xbf16, #tpu.memory_space<vmem>>, vector<16x32xbf16>
    %cst_28 = arith.constant dense<0.000000e+00> : vector<72x32xf32>
    %41 = tpu.matmul %39, %40, %cst_28 {dimension_numbers = #tpu.dot_dimension_numbers<[1], [0], [0], [1], [0, 0, 1, 1], [], []>} : vector<72x16xbf16>, vector<16x32xbf16>, vector<72x32xf32> -> vector<72x32xf32>
    %42 = arith.addf %36, %41 : vector<72x32xf32>
    %c0_29 = arith.constant 0 : index
    %c97 = arith.constant 97 : index
    %c0_30 = arith.constant 0 : index
    %43 = vector.load %arg1[%c0_29, %c97, %c0_30] : memref<1x352x16xf32, #tpu.memory_space<vmem>>, vector<1x72x16xf32>
    %44 = vector.shape_cast %43 : vector<1x72x16xf32> to vector<72x16xf32>
    %45 = arith.truncf %44 : vector<72x16xf32> to vector<72x16xbf16>
    %c112 = arith.constant 112 : index
    %c0_31 = arith.constant 0 : index
    %46 = vector.load %arg2[%c112, %c0_31] : memref<144x32xbf16, #tpu.memory_space<vmem>>, vector<16x32xbf16>
    %cst_32 = arith.constant dense<0.000000e+00> : vector<72x32xf32>
    %47 = tpu.matmul %45, %46, %cst_32 {dimension_numbers = #tpu.dot_dimension_numbers<[1], [0], [0], [1], [0, 0, 1, 1], [], []>} : vector<72x16xbf16>, vector<16x32xbf16>, vector<72x32xf32> -> vector<72x32xf32>
    %48 = arith.addf %42, %47 : vector<72x32xf32>
    %c0_33 = arith.constant 0 : index
    %c10 = arith.constant 10 : index
    %c0_34 = arith.constant 0 : index
    %49 = vector.load %arg1[%c0_33, %c10, %c0_34] : memref<1x352x16xf32, #tpu.memory_space<vmem>>, vector<1x72x16xf32>
    %50 = vector.shape_cast %49 : vector<1x72x16xf32> to vector<72x16xf32>
    %51 = arith.truncf %50 : vector<72x16xf32> to vector<72x16xbf16>
    %c128 = arith.constant 128 : index
    %c0_35 = arith.constant 0 : index
    %52 = vector.load %arg2[%c128, %c0_35] : memref<144x32xbf16, #tpu.memory_space<vmem>>, vector<16x32xbf16>
    %cst_36 = arith.constant dense<0.000000e+00> : vector<72x32xf32>
    %53 = tpu.matmul %51, %52, %cst_36 {dimension_numbers = #tpu.dot_dimension_numbers<[1], [0], [0], [1], [0, 0, 1, 1], [], []>} : vector<72x16xbf16>, vector<16x32xbf16>, vector<72x32xf32> -> vector<72x32xf32>
    %54 = arith.addf %48, %53 : vector<72x32xf32>
    %c0_37 = arith.constant 0 : index
    %c0_38 = arith.constant 0 : index
    %55 = vector.load %arg3[%c0_37, %c0_38] : memref<1x32xf32, #tpu.memory_space<vmem>>, vector<1x32xf32>
    %56 = vector.broadcast %55 : vector<1x32xf32> to vector<72x32xf32>
    %57 = arith.addf %54, %56 : vector<72x32xf32>
    %cst_39 = arith.constant 0.000000e+00 : f32
    %58 = vector.broadcast %cst_39 : f32 to vector<72x32xf32>
    %59 = arith.subf %58, %57 : vector<72x32xf32>
    %60 = math.exp %59 : vector<72x32xf32>
    %cst_40 = arith.constant 1.000000e+00 : f32
    %61 = vector.broadcast %cst_40 : f32 to vector<72x32xf32>
    %62 = arith.addf %61, %60 : vector<72x32xf32>
    %63 = tpu.reciprocal %62 {approx = true} : vector<72x32xf32> -> vector<72x32xf32>
    %64 = arith.mulf %57, %63 : vector<72x32xf32>
    %c0_41 = arith.constant 0 : index
    %c0_42 = arith.constant 0 : index
    %c0_43 = arith.constant 0 : index
    %65 = vector.load %arg4[%c0_41, %c0_42, %c0_43] : memref<1x72x32xf32, #tpu.memory_space<vmem>>, vector<1x72x32xf32>
    %66 = vector.shape_cast %65 : vector<1x72x32xf32> to vector<72x32xf32>
    %67 = vector.shape_cast %64 : vector<72x32xf32> to vector<1x72x32xf32>
    tpu.vector_store %arg4[%c0_41, %c0_42, %c0_43], %67 {strides = array<i32>} : memref<1x72x32xf32, #tpu.memory_space<vmem>>, vector<1x72x32xf32>,
    return
  }
  func.func @transform_0(%arg0: i32) -> (i32, i32, i32) {
    %c0_i32 = arith.constant 0 : i32
    %c0_i32_0 = arith.constant 0 : i32
    %c0_i32_1 = arith.constant 0 : i32
    return %arg0, %c0_i32, %c0_i32_0 : i32, i32, i32
  }
  func.func @transform_1(%arg0: i32) -> (i32, i32) {
    %c0_i32 = arith.constant 0 : i32
    %c0_i32_0 = arith.constant 0 : i32
    %c0_i32_1 = arith.constant 0 : i32
    return %c0_i32, %c0_i32_0 : i32, i32
  }
  func.func @transform_2(%arg0: i32) -> (i32, i32) {
    %c0_i32 = arith.constant 0 : i32
    %c0_i32_0 = arith.constant 0 : i32
    %c0_i32_1 = arith.constant 0 : i32
    return %c0_i32, %c0_i32_0 : i32, i32
  }
  func.func @transform_3(%arg0: i32) -> (i32, i32, i32) {
    %c0_i32 = arith.constant 0 : i32
    %c0_i32_0 = arith.constant 0 : i32
    %c0_i32_1 = arith.constant 0 : i32
    return %arg0, %c0_i32, %c0_i32_0 : i32, i32, i32
  }
}

module attributes {stable_mosaic.version = 11 : i64} {
  func.func @kernel(%arg0: i32, %arg1: memref<128x32xf32, #tpu.memory_space<vmem>>, %arg2: memref<32x64xbf16, #tpu.memory_space<vmem>>, %arg3: memref<1x64xf32, #tpu.memory_space<vmem>>, %arg4: memref<64x64xbf16, #tpu.memory_space<vmem>>, %arg5: memref<1x64xf32, #tpu.memory_space<vmem>>, %arg6: memref<128x64xf32, #tpu.memory_space<vmem>>) attributes {dimension_semantics = [#tpu.dimension_semantics<parallel>], iteration_bounds = array<i64: 1>, scalar_prefetch = 0 : i64, scratch_operands = 0 : i64, tpu.core_type = #tpu.core_type<tc>, window_params = [{transform_indices = @transform_0, window_bounds = array<i64: 128, 32>}, {pipeline_mode = #tpu.pipeline_mode<synchronous>, transform_indices = @transform_1, window_bounds = array<i64: 32, 64>}, {pipeline_mode = #tpu.pipeline_mode<synchronous>, transform_indices = @transform_2, window_bounds = array<i64: 1, 64>}, {pipeline_mode = #tpu.pipeline_mode<synchronous>, transform_indices = @transform_3, window_bounds = array<i64: 64, 64>}, {pipeline_mode = #tpu.pipeline_mode<synchronous>, transform_indices = @transform_4, window_bounds = array<i64: 1, 64>}, {transform_indices = @transform_5, window_bounds = array<i64: 128, 64>}]} {
    %c0 = arith.constant 0 : index
    %c0_0 = arith.constant 0 : index
    %0 = vector.load %arg1[%c0, %c0_0] : memref<128x32xf32, #tpu.memory_space<vmem>>, vector<128x32xf32>
    %1 = arith.truncf %0 : vector<128x32xf32> to vector<128x32xbf16>
    %c0_1 = arith.constant 0 : index
    %c0_2 = arith.constant 0 : index
    %2 = vector.load %arg2[%c0_1, %c0_2] : memref<32x64xbf16, #tpu.memory_space<vmem>>, vector<32x64xbf16>
    %cst = arith.constant dense<0.000000e+00> : vector<128x64xf32>
    %3 = tpu.matmul %1, %2, %cst {dimension_numbers = #tpu.dot_dimension_numbers<[1], [0], [0], [1], [0, 0, 1, 1], [], []>} : vector<128x32xbf16>, vector<32x64xbf16>, vector<128x64xf32> -> vector<128x64xf32>
    %c0_3 = arith.constant 0 : index
    %c0_4 = arith.constant 0 : index
    %4 = vector.load %arg3[%c0_3, %c0_4] : memref<1x64xf32, #tpu.memory_space<vmem>>, vector<1x64xf32>
    %5 = vector.broadcast %4 : vector<1x64xf32> to vector<128x64xf32>
    %6 = arith.addf %3, %5 : vector<128x64xf32>
    %cst_5 = arith.constant 0.000000e+00 : f32
    %7 = vector.broadcast %cst_5 : f32 to vector<128x64xf32>
    %8 = arith.subf %7, %6 : vector<128x64xf32>
    %9 = math.exp %8 : vector<128x64xf32>
    %cst_6 = arith.constant 1.000000e+00 : f32
    %10 = vector.broadcast %cst_6 : f32 to vector<128x64xf32>
    %11 = arith.addf %10, %9 : vector<128x64xf32>
    %12 = tpu.reciprocal %11 {approx = true} : vector<128x64xf32> -> vector<128x64xf32>
    %13 = arith.mulf %6, %12 : vector<128x64xf32>
    %14 = arith.truncf %13 : vector<128x64xf32> to vector<128x64xbf16>
    %c0_7 = arith.constant 0 : index
    %c0_8 = arith.constant 0 : index
    %15 = vector.load %arg4[%c0_7, %c0_8] : memref<64x64xbf16, #tpu.memory_space<vmem>>, vector<64x64xbf16>
    %cst_9 = arith.constant dense<0.000000e+00> : vector<128x64xf32>
    %16 = tpu.matmul %14, %15, %cst_9 {dimension_numbers = #tpu.dot_dimension_numbers<[1], [0], [0], [1], [0, 0, 1, 1], [], []>} : vector<128x64xbf16>, vector<64x64xbf16>, vector<128x64xf32> -> vector<128x64xf32>
    %c0_10 = arith.constant 0 : index
    %c0_11 = arith.constant 0 : index
    %17 = vector.load %arg5[%c0_10, %c0_11] : memref<1x64xf32, #tpu.memory_space<vmem>>, vector<1x64xf32>
    %18 = vector.broadcast %17 : vector<1x64xf32> to vector<128x64xf32>
    %19 = arith.addf %16, %18 : vector<128x64xf32>
    %cst_12 = arith.constant 0.000000e+00 : f32
    %20 = vector.broadcast %cst_12 : f32 to vector<128x64xf32>
    %21 = arith.subf %20, %19 : vector<128x64xf32>
    %22 = math.exp %21 : vector<128x64xf32>
    %cst_13 = arith.constant 1.000000e+00 : f32
    %23 = vector.broadcast %cst_13 : f32 to vector<128x64xf32>
    %24 = arith.addf %23, %22 : vector<128x64xf32>
    %25 = tpu.reciprocal %24 {approx = true} : vector<128x64xf32> -> vector<128x64xf32>
    %26 = arith.mulf %19, %25 : vector<128x64xf32>
    %cst_14 = arith.constant 0.000000e+00 : f32
    %27 = vector.broadcast %cst_14 : f32 to vector<128x64xf32>
    %28 = arith.subf %27, %26 : vector<128x64xf32>
    %29 = math.exp %28 : vector<128x64xf32>
    %cst_15 = arith.constant 1.000000e+00 : f32
    %30 = vector.broadcast %cst_15 : f32 to vector<128x64xf32>
    %31 = arith.addf %30, %29 : vector<128x64xf32>
    %32 = tpu.reciprocal %31 : vector<128x64xf32> -> vector<128x64xf32>
    %c0_16 = arith.constant 0 : index
    %c0_17 = arith.constant 0 : index
    %33 = vector.load %arg6[%c0_16, %c0_17] : memref<128x64xf32, #tpu.memory_space<vmem>>, vector<128x64xf32>
    tpu.vector_store %arg6[%c0_16, %c0_17], %32 {strides = array<i32>} : memref<128x64xf32, #tpu.memory_space<vmem>>, vector<128x64xf32>,
    return
  }
  func.func @transform_0(%arg0: i32) -> (i32, i32) {
    %c0_i32 = arith.constant 0 : i32
    %c0_i32_0 = arith.constant 0 : i32
    return %arg0, %c0_i32 : i32, i32
  }
  func.func @transform_1(%arg0: i32) -> (i32, i32) {
    %c0_i32 = arith.constant 0 : i32
    %c0_i32_0 = arith.constant 0 : i32
    %c0_i32_1 = arith.constant 0 : i32
    return %c0_i32, %c0_i32_0 : i32, i32
  }
  func.func @transform_2(%arg0: i32) -> (i32, i32) {
    %c0_i32 = arith.constant 0 : i32
    %c0_i32_0 = arith.constant 0 : i32
    %c0_i32_1 = arith.constant 0 : i32
    return %c0_i32, %c0_i32_0 : i32, i32
  }
  func.func @transform_3(%arg0: i32) -> (i32, i32) {
    %c0_i32 = arith.constant 0 : i32
    %c0_i32_0 = arith.constant 0 : i32
    %c0_i32_1 = arith.constant 0 : i32
    return %c0_i32, %c0_i32_0 : i32, i32
  }
  func.func @transform_4(%arg0: i32) -> (i32, i32) {
    %c0_i32 = arith.constant 0 : i32
    %c0_i32_0 = arith.constant 0 : i32
    %c0_i32_1 = arith.constant 0 : i32
    return %c0_i32, %c0_i32_0 : i32, i32
  }
  func.func @transform_5(%arg0: i32) -> (i32, i32) {
    %c0_i32 = arith.constant 0 : i32
    %c0_i32_0 = arith.constant 0 : i32
    return %arg0, %c0_i32 : i32, i32
  }
}

</mosaic_0001>

<llo_original>
// kernel: csp_darknet_forward.3
$region0: #{csp_darknet_forward.3}
  #allocation0 [shape = 'u32[]', space=smem, size = 0x4, offset = 0x4, fixed_abs, tag = 'smem constant byte address 0x4 - core index']
  #allocation1 [shape = 'u32[144,128]{1,0:T(1,128)}', space=vmem, size = 0x12000, scoped, tag = 'internal scratch']
  %s0 = inlined_call_operand.vmem [shape: f32[2,1184,3], index: 0, kind: input, shape index: {}]
  %s1 = inlined_call_operand.vmem [shape: bf16[27,16], index: 1, kind: input, shape index: {}]
  %s2 = inlined_call_operand.vmem [shape: f32[1,16], index: 2, kind: input, shape index: {}]
  %s3 = inlined_call_operand.vmem [shape: f32[2,272,16], index: 3, kind: output, shape index: {}]
  %s4 = sld [smem:[#allocation0]]
  $region45: #{csp_darknet_forward.3} parent=0
    _
  %s6 = ssub.s32 1, %s4
  %s7 = scalar_select 0, %s6, %s4
  loop: start=0, step=1, limit=4
  $region2: #{csp_darknet_forward.3} parent=0 // loop_pre_header
    _
  $region3: #{csp_darknet_forward.3} parent=0 // loop_header
    %s9 = sphi 0, %s13
    %p10 = scmp.ge.s32.totalorder %s9, 4
    %s19 = sphi 0, %s21
    %s22 = sphi 0, %s19
    %s23 = sphi 0, %s22
    %s39 = sphi 0, %s23
    %s43 = sphi 0, %s43
    %s45 = sphi 0, %s43
    %s46 = sphi 0, %s45
    %s60 = sphi 0, %s46
    %s64 = sphi 0, %s64
    %s66 = sphi 0, %s64
    %s67 = sphi 0, %s66
    %s81 = sphi 0, %s67
    %s87 = sphi 0, %s89
    %s90 = sphi 0, %s87
    %s91 = sphi 0, %s90
    %s107 = sphi 0, %s91
  $region4: #{csp_darknet_forward.3} parent=0 // loop_header_branch
    %12 = sbr.rel (%p10) target = $region8
  $region5: #{csp_darknet_forward.3} parent=0 // loop_body
    %s14 = ssub.s32 %s9, 1
    %s15 = ssub.s32 %s9, 2
    %s16 = sadd.s32 %s9, 1
    %s17 = ssub.s32 %s9, %s16
    %p18 = scmp.eq.s32.totalorder %s17, 0
    %s20 = sadd.s32 %s19, 1
    %s21 = scalar_select %p18, %s19, %s20
    %p24 = pneg %p18
    %p25 = scmp.eq.s32.totalorder %s9, 1
    %p26 = por %p24, %p25
    %p27 = scmp.ne.s32.totalorder %s19, %s22
    %p28 = scmp.eq.s32.totalorder %s9, 0
    %p29 = por %p27, %p28
    %p30 = scmp.ne.s32.totalorder %s19, %s22
    %p31 = scmp.eq.s32.totalorder %s14, 1
    %p32 = por %p30, %p31
    %p33 = scmp.ne.s32.totalorder %s22, %s23
    %p34 = scmp.eq.s32.totalorder %s14, 0
    %p35 = por %p33, %p34
    %p36 = scmp.ne.s32.totalorder %s22, %s23
    %p37 = scmp.eq.s32.totalorder %s15, 1
    %p38 = por %p36, %p37
    %p40 = scmp.ne.s32.totalorder %s23, %s39
    %p41 = scmp.eq.s32.totalorder %s15, 0
    %p42 = por %p40, %p41
    %s44 = sadd.s32 %s43, 1
    %p47 = scmp.eq.s32.totalorder %s9, 1
    %p48 = scmp.ne.s32.totalorder %s43, %s45
    %p49 = scmp.eq.s32.totalorder %s9, 0
    %p50 = por %p48, %p49
    %p51 = scmp.ne.s32.totalorder %s43, %s45
    %p52 = scmp.eq.s32.totalorder %s14, 1
    %p53 = por %p51, %p52
    %p54 = scmp.ne.s32.totalorder %s45, %s46
    %p55 = scmp.eq.s32.totalorder %s14, 0
    %p56 = por %p54, %p55
    %p57 = scmp.ne.s32.totalorder %s45, %s46
    %p58 = scmp.eq.s32.totalorder %s15, 1
    %p59 = por %p57, %p58
    %p61 = scmp.ne.s32.totalorder %s46, %s60
    %p62 = scmp.eq.s32.totalorder %s15, 0
    %p63 = por %p61, %p62
    %s65 = sadd.s32 %s64, 1
    %p68 = scmp.eq.s32.totalorder %s9, 1
    %p69 = scmp.ne.s32.totalorder %s64, %s66
    %p70 = scmp.eq.s32.totalorder %s9, 0
    %p71 = por %p69, %p70
    %p72 = scmp.ne.s32.totalorder %s64, %s66
    %p73 = scmp.eq.s32.totalorder %s14, 1
    %p74 = por %p72, %p73
    %p75 = scmp.ne.s32.totalorder %s66, %s67
    %p76 = scmp.eq.s32.totalorder %s14, 0
    %p77 = por %p75, %p76
    %p78 = scmp.ne.s32.totalorder %s66, %s67
    %p79 = scmp.eq.s32.totalorder %s15, 1
    %p80 = por %p78, %p79
    %p82 = scmp.ne.s32.totalorder %s67, %s81
    %p83 = scmp.eq.s32.totalorder %s15, 0
    %p84 = por %p82, %p83
    %s85 = ssub.s32 %s9, %s16
    %p86 = scmp.eq.s32.totalorder %s85, 0
    %s88 = sadd.s32 %s87, 1
    %s89 = scalar_select %p86, %s87, %s88
    %p92 = pneg %p86
    %p93 = scmp.eq.s32.totalorder %s9, 1
    %p94 = por %p92, %p93
    %p95 = scmp.ne.s32.totalorder %s87, %s90
    %p96 = scmp.eq.s32.totalorder %s9, 0
    %p97 = por %p95, %p96
    %p98 = scmp.ne.s32.totalorder %s87, %s90
    %p99 = scmp.eq.s32.totalorder %s14, 1
    %p100 = por %p98, %p99
    %p101 = scmp.ne.s32.totalorder %s90, %s91
    %p102 = scmp.eq.s32.totalorder %s14, 0
    %p103 = por %p101, %p102
    %p104 = scmp.ne.s32.totalorder %s90, %s91
    %p105 = scmp.eq.s32.totalorder %s15, 1
    %p106 = por %p104, %p105
    %p108 = scmp.ne.s32.totalorder %s91, %s107
    %p109 = scmp.eq.s32.totalorder %s15, 0
    %p110 = por %p108, %p109
    %p111 = scmp.le.s32.totalorder 1, %s9
    %p112 = scmp.lt.s32.totalorder %s9, 3
    %p113 = pnand %p111, %p112
    %p114 = pneg %p113
    // Predicated region
    $region9: #{csp_darknet_forward.3} parent=5 // pred_check
      _
    $region10: #{csp_darknet_forward.3} parent=5 // pred_check_branch
      %116 = sbr.rel (%p113) target = $region12
    $region11: #{csp_darknet_forward.3} parent=5 // pred_region
      %s117 = ssub.s32 %s9, 1
      // Predicated region
      $region13: #{csp_darknet_forward.3} parent=11 // pred_check
        %p118 = pneg %p56
      $region14: #{csp_darknet_forward.3} parent=11 // pred_check_branch
        %120 = sbr.rel (%p118) target = $region16
      $region15: #{csp_darknet_forward.3} parent=11 // pred_region
        _
      $region16: #{csp_darknet_forward.3} parent=11 // pred_fallthru
        _
      // Predicated region
      $region17: #{csp_darknet_forward.3} parent=11 // pred_check
        %p121 = pneg %p77
      $region18: #{csp_darknet_forward.3} parent=11 // pred_check_branch
        %123 = sbr.rel (%p121) target = $region20
      $region19: #{csp_darknet_forward.3} parent=11 // pred_region
        _
      $region20: #{csp_darknet_forward.3} parent=11 // pred_fallthru
        _
    $region12: #{csp_darknet_forward.3} parent=5 // pred_fallthru
      _
    %p124 = scmp.lt.s32.totalorder %s9, 2
    // Predicated region
    $region21: #{csp_darknet_forward.3} parent=5 // pred_check
      %p125 = pneg %p124
    $region22: #{csp_darknet_forward.3} parent=5 // pred_check_branch
      %127 = sbr.rel (%p125) target = $region24
    $region23: #{csp_darknet_forward.3} parent=5 // pred_region
      // Predicated region
      $region25: #{csp_darknet_forward.3} parent=23 // pred_check
        %p128 = pneg %p29
      $region26: #{csp_darknet_forward.3} parent=23 // pred_check_branch
        %130 = sbr.rel (%p128) target = $region28
      $region27: #{csp_darknet_forward.3} parent=23 // pred_region
        %p131 = scmp.lt.s32.totalorder %s9, 1
        %s132 = scalar_select %p131, %s9, 1
        %s133 = smul.addr %s132, 148
        %s134 = smul.addr %s133, 8
        %s135 = scalar_lea.vmem %s0, %s134
      $region28: #{csp_darknet_forward.3} parent=23 // pred_fallthru
        _
    $region24: #{csp_darknet_forward.3} parent=5 // pred_fallthru
      _
    %p136 = scmp.le.s32.totalorder 1, %s9
    %p137 = scmp.lt.s32.totalorder %s9, 3
    %p138 = pnand %p136, %p137
    %p139 = pneg %p138
    // Predicated region
    $region29: #{csp_darknet_forward.3} parent=5 // pred_check
      _
    $region30: #{csp_darknet_forward.3} parent=5 // pred_check_branch
      %141 = sbr.rel (%p138) target = $region32
    $region31: #{csp_darknet_forward.3} parent=5 // pred_region
      %s142 = ssub.s32 %s9, 1
      %p143 = scmp.lt.s32.totalorder %s14, 1
      %s144 = scalar_select %p143, %s14, 1
      %s145 = smul.addr %s144, 148
      %s146 = smul.addr %s145, 8
      %s147 = scalar_lea.vmem %s0, %s146
      %p148 = pneg %p35
      %p149 = pneg %p32
      %p150 = pneg %p56
      %p151 = pneg %p53
      %p152 = pneg %p77
      %p153 = pneg %p74
      %p154 = pneg %p103
      %p155 = pneg %p100
      %p156 = scmp.lt.s32.totalorder %s14, 1
      %s157 = scalar_select %p156, %s14, 1
      %s158 = smul.addr %s157, 34
      %s159 = smul.addr %s158, 8
      %s160 = scalar_lea.vmem %s3, %s159
      %p161 = scmp.lt.s32.totalorder %s14, 1
      %s162 = scalar_select %p161, %s14, 1
      %s163 = smul.addr %s162, 148
      %s164 = smul.addr %s163, 8
      %s165 = scalar_lea.vmem %s0, %s164
      %p166 = scmp.lt.s32.totalorder %s14, 1
      %s167 = scalar_select %p166, %s14, 1
      %s168 = smul.addr %s167, 34
      %s169 = smul.addr %s168, 8
      %s170 = scalar_lea.vmem %s3, %s169
      %v172 = vld [vmem:[%s165] sm:$0xff]
      %v173 = vld [vmem:[%s165 + $0x8] sm:$0xff]
      %v174 = vld [vmem:[%s165 + $0x10] sm:$0xff]
      %v175 = vld [vmem:[%s165 + $0x18] sm:$0xff]
      %v176 = vld [vmem:[%s165 + $0x20] sm:$0xff]
      %v177 = vld [vmem:[%s165 + $0x28] sm:$0xff]
      %v178 = vld [vmem:[%s165 + $0x30] sm:$0xff]
      %v179 = vld [vmem:[%s165 + $0x38] sm:$0xff]
      %v180 = vld [vmem:[%s165 + $0x40] sm:$0xff]
      %v181 = vld [vmem:[%s165 + $0x48] sm:$0xff]
      %v182 = vld [vmem:[%s165 + $0x50] sm:$0xff]
      %v183 = vld [vmem:[%s165 + $0x58] sm:$0xff]
      %v184 = vld [vmem:[%s165 + $0x60] sm:$0xff]
      %v185 = vld [vmem:[%s165 + $0x68] sm:$0xff]
      %v186 = vld [vmem:[%s165 + $0x70] sm:$0xff]
      %v187 = vld [vmem:[%s165 + $0x78] sm:$0xff]
      %v188 = vld [vmem:[%s165 + $0x80] sm:$0xff]
      %v189 = vld [vmem:[%s165 + $0x88] sm:$0xff]
      %v190 = vld [vmem:[%s165 + $0x90] sm:$0xff]
      %v191 = vld [vmem:[%s165 + $0x98] sm:$0xff]
      %v192 = vld [vmem:[%s165 + $0xa0] sm:$0xff]
      %v193 = vld [vmem:[%s165 + $0xa8] sm:$0xff]
      %v194 = vld [vmem:[%s165 + $0xb0] sm:$0xff]
      %v195 = vld [vmem:[%s165 + $0xb8] sm:$0xff]
      %v196 = vld [vmem:[%s165 + $0xc0] sm:$0xff]
      %v197 = vld [vmem:[%s165 + $0xc8] sm:$0xff]
      %v198 = vld [vmem:[%s165 + $0xd0] sm:$0xff]
      %v199 = vld [vmem:[%s165 + $0xd8] sm:$0xff]
      %v200 = vld [vmem:[%s165 + $0xe0] sm:$0xff]
      %v201 = vld [vmem:[%s165 + $0xe8] sm:$0xff]
      %v202 = vld [vmem:[%s165 + $0xf0] sm:$0xff]
      %v203 = vld [vmem:[%s165 + $0xf8] sm:$0xff]
      %v204 = vld [vmem:[%s165 + $0x100] sm:$0xff]
      %v205 = vld [vmem:[%s165 + $0x108] sm:$0xff]
      %v206 = vpack.c.bf16 %v173, %v172
      %v207 = vpack.c.bf16 %v175, %v174
      %v208 = vpack.c.bf16 %v177, %v176
      %v209 = vpack.c.bf16 %v179, %v178
      %v210 = vpack.c.bf16 %v181, %v180
      %v211 = vpack.c.bf16 %v183, %v182
      %v212 = vpack.c.bf16 %v185, %v184
      %v213 = vpack.c.bf16 %v187, %v186
      %v214 = vpack.c.bf16 %v189, %v188
      %v215 = vpack.c.bf16 %v191, %v190
      %v216 = vpack.c.bf16 %v193, %v192
      %v217 = vpack.c.bf16 %v195, %v194
      %v218 = vpack.c.bf16 %v197, %v196
      %v219 = vpack.c.bf16 %v199, %v198
      %v220 = vpack.c.bf16 %v201, %v200
      %v221 = vpack.c.bf16 %v203, %v202
      %v222 = vpack.c.bf16 %v205, %v204
      %v223 = vld [vmem:[%s1] sm:$0x3]
      %v224 = vld [vmem:[%s165 + $0x128] sm:$0xff]
      %v225 = vld [vmem:[%s165 + $0x130] sm:$0xff]
      %v226 = vld [vmem:[%s165 + $0x138] sm:$0xff]
      %v227 = vld [vmem:[%s165 + $0x140] sm:$0xff]
      %v228 = vld [vmem:[%s165 + $0x148] sm:$0xff]
      %v229 = vld [vmem:[%s165 + $0x150] sm:$0xff]
      %v230 = vld [vmem:[%s165 + $0x158] sm:$0xff]
      %v231 = vld [vmem:[%s165 + $0x160] sm:$0xff]
      %v232 = vld [vmem:[%s165 + $0x168] sm:$0xff]
      %v233 = vld [vmem:[%s165 + $0x170] sm:$0xff]
      %v234 = vld [vmem:[%s165 + $0x178] sm:$0xff]
      %v235 = vld [vmem:[%s165 + $0x180] sm:$0xff]
      %v236 = vld [vmem:[%s165 + $0x188] sm:$0xff]
      %v237 = vld [vmem:[%s165 + $0x190] sm:$0xff]
      %v238 = vld [vmem:[%s165 + $0x198] sm:$0xff]
      %v239 = vld [vmem:[%s165 + $0x1a0] sm:$0xff]
      %v240 = vld [vmem:[%s165 + $0x1a8] sm:$0xff]
      %v241 = vld [vmem:[%s165 + $0x1b0] sm:$0xff]
      %v242 = vld [vmem:[%s165 + $0x1b8] sm:$0xff]
      %v243 = vld [vmem:[%s165 + $0x1c0] sm:$0xff]
      %v244 = vld [vmem:[%s165 + $0x1c8] sm:$0xff]
      %v245 = vld [vmem:[%s165 + $0x1d0] sm:$0xff]
      %v246 = vld [vmem:[%s165 + $0x1d8] sm:$0xff]
      %v247 = vld [vmem:[%s165 + $0x1e0] sm:$0xff]
      %v248 = vld [vmem:[%s165 + $0x1e8] sm:$0xff]
      %v249 = vld [vmem:[%s165 + $0x1f0] sm:$0xff]
      %v250 = vld [vmem:[%s165 + $0x1f8] sm:$0xff]
      %v251 = vld [vmem:[%s165 + $0x200] sm:$0xff]
      %v252 = vld [vmem:[%s165 + $0x208] sm:$0xff]
      %v253 = vld [vmem:[%s165 + $0x210] sm:$0xff]
      %v254 = vld [vmem:[%s165 + $0x218] sm:$0xff]
      %v255 = vld [vmem:[%s165 + $0x220] sm:$0xff]
      %v256 = vld [vmem:[%s165 + $0x228] sm:$0xff]
      %v257 = vld [vmem:[%s165 + $0x230] sm:$0xff]
      %v258 = vpack.c.bf16 %v225, %v224
      %v259 = vpack.c.bf16 %v227, %v226
      %v260 = vpack.c.bf16 %v229, %v228
      %v261 = vpack.c.bf16 %v231, %v230
      %v262 = vpack.c.bf16 %v233, %v232
      %v263 = vpack.c.bf16 %v235, %v234
      %v264 = vpack.c.bf16 %v237, %v236
      %v265 = vpack.c.bf16 %v239, %v238
      %v266 = vpack.c.bf16 %v241, %v240
      %v267 = vpack.c.bf16 %v243, %v242
      %v268 = vpack.c.bf16 %v245, %v244
      %v269 = vpack.c.bf16 %v247, %v246
      %v270 = vpack.c.bf16 %v249, %v248
      %v271 = vpack.c.bf16 %v251, %v250
      %v272 = vpack.c.bf16 %v253, %v252
      %v273 = vpack.c.bf16 %v255, %v254
      %v274 = vpack.c.bf16 %v257, %v256
      %v275 = vld [vmem:[%s1] sm:$0x6]
      %v277 = vunpack.c.l.b16 %v275
      %v278 = vpack.c.b16 %v277, %v277
      %v280 = vshrl.u32 %v278, 16
      %v282 = vrot.slane %v280, 1
      %v283 = vshll.u32 %v278, 16
      %v285 = vrot.slane %v283, 2
      %v286 = vor.u32 %v282, %v285
      %vm287 = vcmask 23552
      %v289 = vsel %vm287, %v258, 0
      %v292 = vsel %vm287, %v259, 0
      %v295 = vsel %vm287, %v260, 0
      %v298 = vsel %vm287, %v261, 0
      %v301 = vsel %vm287, %v262, 0
      %v304 = vsel %vm287, %v263, 0
      %v307 = vsel %vm287, %v264, 0
      %v310 = vsel %vm287, %v265, 0
      %v313 = vsel %vm287, %v266, 0
      %v316 = vsel %vm287, %v267, 0
      %v319 = vsel %vm287, %v268, 0
      %v322 = vsel %vm287, %v269, 0
      %v325 = vsel %vm287, %v270, 0
      %v328 = vsel %vm287, %v271, 0
      %v331 = vsel %vm287, %v272, 0
      %v334 = vsel %vm287, %v273, 0
      %v337 = vsel %vm287, %v274, 0
      %vm339 = vcmask 1040384
      %vm340 = vcmask 1041408
      %v341 = vsel %vm339, 4294967295, 65535
      %v342 = vsel %vm340, %v341, 0
      %v344 = vand.u32 %v286, %v342
      %346 = vmatprep.subr.bf16.mxu0 0
      %347 = vmatpush1.bf16.msra.mxu0 %v344
      %348 = vmatprep.subr.bf16.mxu0 0
      %349 = vmatpush1.bf16.msra.mxu0 0
      %350 = vmatprep.subr.bf16.mxu0 0
      %351 = vmatpush1.bf16.msra.mxu0 0
      %352 = vmatprep.subr.bf16.mxu0 0
      %353 = vmatpush1.bf16.msra.mxu0 0
      %354 = vmatprep.subr.bf16.mxu0 0
      %355 = vmatpush1.bf16.msra.mxu0 0
      %356 = vmatprep.subr.bf16.mxu0 0
      %357 = vmatpush1.bf16.msra.mxu0 0
      %358 = vmatprep.subr.bf16.mxu0 0
      %359 = vmatpush1.bf16.msra.mxu0 0
      %360 = vmatprep.subr.bf16.mxu0 0
      %361 = vmatpush1.bf16.msra.mxu0 0
      %362 = vmatprep.subr.bf16.mxu0 0
      %363 = vmatpush1.bf16.msra.mxu0 0
      %364 = vmatprep.subr.bf16.mxu0 0
      %365 = vmatpush1.bf16.msra.mxu0 0
      %366 = vmatprep.subr.bf16.mxu0 0
      %367 = vmatpush1.bf16.msra.mxu0 0
      %368 = vmatprep.subr.bf16.mxu0 0
      %369 = vmatpush1.bf16.msra.mxu0 0
      %370 = vmatprep.subr.bf16.mxu0 0
      %371 = vmatpush1.bf16.msra.mxu0 0
      %372 = vmatprep.subr.bf16.mxu0 0
      %373 = vmatpush1.bf16.msra.mxu0 0
      %374 = vmatprep.subr.bf16.mxu0 0
      %375 = vmatpush1.bf16.msra.mxu0 0
      %376 = vmatprep.subr.bf16.mxu0 0
      %377 = vmatpush1.bf16.msra.mxu0 0
      %378 = vmatprep.mubr.bf16.mxu0 0
      %379 = vmatmul.mubr.bf16.gmra.mrb[0].mxu0 %v289
      %v380 = vpop.f32.mrb[0].mxu0
      %v381 = vadd.f32 0.0, %v380
      %v382 = vpop.f32.mrb[0].mxu0
      %v383 = vpop.f32.mrb[0].mxu0
      %v384 = vadd.f32 0.0, %v383
      %v385 = vpop.f32.mrb[0].mxu0
      %386 = vmatprep.mubr.bf16.mxu0 0
      %387 = vmatmul.mubr.bf16.gmra.mrb[0].mxu0 %v292
      %v388 = vpop.f32.mrb[0].mxu0
      %v389 = vadd.f32 0.0, %v388
      %v390 = vpop.f32.mrb[0].mxu0
      %v391 = vpop.f32.mrb[0].mxu0
      %v392 = vadd.f32 0.0, %v391
      %v393 = vpop.f32.mrb[0].mxu0
      %394 = vmatprep.mubr.bf16.mxu0 0
      %395 = vmatmul.mubr.bf16.gmra.mrb[0].mxu0 %v295
      %v396 = vpop.f32.mrb[0].mxu0
      %v397 = vadd.f32 0.0, %v396
      %v398 = vpop.f32.mrb[0].mxu0
      %v399 = vpop.f32.mrb[0].mxu0
      %v400 = vadd.f32 0.0, %v399
      %v401 = vpop.f32.mrb[0].mxu0
      %402 = vmatprep.mubr.bf16.mxu0 0
      %403 = vmatmul.mubr.bf16.gmra.mrb[0].mxu0 %v298
      %v404 = vpop.f32.mrb[0].mxu0
      %v405 = vadd.f32 0.0, %v404
      %v406 = vpop.f32.mrb[0].mxu0
      %v407 = vpop.f32.mrb[0].mxu0
      %v408 = vadd.f32 0.0, %v407
      %v409 = vpop.f32.mrb[0].mxu0
      %410 = vmatprep.mubr.bf16.mxu0 0
      %411 = vmatmul.mubr.bf16.gmra.mrb[0].mxu0 %v301
      %v412 = vpop.f32.mrb[0].mxu0
      %v413 = vadd.f32 0.0, %v412
      %v414 = vpop.f32.mrb[0].mxu0
      %v415 = vpop.f32.mrb[0].mxu0
      %v416 = vadd.f32 0.0, %v415
      %v417 = vpop.f32.mrb[0].mxu0
      %418 = vmatprep.mubr.bf16.mxu0 0
      %419 = vmatmul.mubr.bf16.gmra.mrb[0].mxu0 %v304
      %v420 = vpop.f32.mrb[0].mxu0
      %v421 = vadd.f32 0.0, %v420
      %v422 = vpop.f32.mrb[0].mxu0
      %v423 = vpop.f32.mrb[0].mxu0
      %v424 = vadd.f32 0.0, %v423
      %v425 = vpop.f32.mrb[0].mxu0
      %426 = vmatprep.mubr.bf16.mxu0 0
      %427 = vmatmul.mubr.bf16.gmra.mrb[0].mxu0 %v307
      %v428 = vpop.f32.mrb[0].mxu0
      %v429 = vadd.f32 0.0, %v428
      %v430 = vpop.f32.mrb[0].mxu0
      %v431 = vpop.f32.mrb[0].mxu0
      %v432 = vadd.f32 0.0, %v431
      %v433 = vpop.f32.mrb[0].mxu0
      %434 = vmatprep.mubr.bf16.mxu0 0
      %435 = vmatmul.mubr.bf16.gmra.mrb[0].mxu0 %v310
      %v436 = vpop.f32.mrb[0].mxu0
      %v437 = vadd.f32 0.0, %v436
      %v438 = vpop.f32.mrb[0].mxu0
      %v439 = vpop.f32.mrb[0].mxu0
      %v440 = vadd.f32 0.0, %v439
      %v441 = vpop.f32.mrb[0].mxu0
      %442 = vmatprep.mubr.bf16.mxu0 0
      %443 = vmatmul.mubr.bf16.gmra.mrb[0].mxu0 %v313
      %v444 = vpop.f32.mrb[0].mxu0
      %v445 = vadd.f32 0.0, %v444
      %v446 = vpop.f32.mrb[0].mxu0
      %v447 = vpop.f32.mrb[0].mxu0
      %v448 = vadd.f32 0.0, %v447
      %v449 = vpop.f32.mrb[0].mxu0
      %450 = vmatprep.mubr.bf16.mxu0 0
      %451 = vmatmul.mubr.bf16.gmra.mrb[0].mxu0 %v316
      %v452 = vpop.f32.mrb[0].mxu0
      %v453 = vadd.f32 0.0, %v452
      %v454 = vpop.f32.mrb[0].mxu0
      %v455 = vpop.f32.mrb[0].mxu0
      %v456 = vadd.f32 0.0, %v455
      %v457 = vpop.f32.mrb[0].mxu0
      %458 = vmatprep.mubr.bf16.mxu0 0
      %459 = vmatmul.mubr.bf16.gmra.mrb[0].mxu0 %v319
      %v460 = vpop.f32.mrb[0].mxu0
      %v461 = vadd.f32 0.0, %v460
      %v462 = vpop.f32.mrb[0].mxu0
      %v463 = vpop.f32.mrb[0].mxu0
      %v464 = vadd.f32 0.0, %v463
      %v465 = vpop.f32.mrb[0].mxu0
      %466 = vmatprep.mubr.bf16.mxu0 0
      %467 = vmatmul.mubr.bf16.gmra.mrb[0].mxu0 %v322
      %v468 = vpop.f32.mrb[0].mxu0
      %v469 = vadd.f32 0.0, %v468
      %v470 = vpop.f32.mrb[0].mxu0
      %v471 = vpop.f32.mrb[0].mxu0
      %v472 = vadd.f32 0.0, %v471
      %v473 = vpop.f32.mrb[0].mxu0
      %474 = vmatprep.mubr.bf16.mxu0 0
      %475 = vmatmul.mubr.bf16.gmra.mrb[0].mxu0 %v325
      %v476 = vpop.f32.mrb[0].mxu0
      %v477 = vadd.f32 0.0, %v476
      %v478 = vpop.f32.mrb[0].mxu0
      %v479 = vpop.f32.mrb[0].mxu0
      %v480 = vadd.f32 0.0, %v479
      %v481 = vpop.f32.mrb[0].mxu0
      %482 = vmatprep.mubr.bf16.mxu0 0
      %483 = vmatmul.mubr.bf16.gmra.mrb[0].mxu0 %v328
      %v484 = vpop.f32.mrb[0].mxu0
      %v485 = vadd.f32 0.0, %v484
      %v486 = vpop.f32.mrb[0].mxu0
      %v487 = vpop.f32.mrb[0].mxu0
      %v488 = vadd.f32 0.0, %v487
      %v489 = vpop.f32.mrb[0].mxu0
      %490 = vmatprep.mubr.bf16.mxu0 0
      %491 = vmatmul.mubr.bf16.gmra.mrb[0].mxu0 %v331
      %v492 = vpop.f32.mrb[0].mxu0
      %v493 = vadd.f32 0.0, %v492
      %v494 = vpop.f32.mrb[0].mxu0
      %v495 = vpop.f32.mrb[0].mxu0
      %v496 = vadd.f32 0.0, %v495
      %v497 = vpop.f32.mrb[0].mxu0
      %498 = vmatprep.mubr.bf16.mxu0 0
      %499 = vmatmul.mubr.bf16.gmra.mrb[0].mxu0 %v334
      %v500 = vpop.f32.mrb[0].mxu0
      %v501 = vadd.f32 0.0, %v500
      %v502 = vpop.f32.mrb[0].mxu0
      %v503 = vpop.f32.mrb[0].mxu0
      %v504 = vadd.f32 0.0, %v503
      %v505 = vpop.f32.mrb[0].mxu0
      %506 = vmatprep.mubr.bf16.mxu0 0
      %507 = vmatmul.mubr.bf16.gmra.mrb[0].mxu0 %v337
      %v508 = vpop.f32.mrb[0].mxu0
      %v509 = vadd.f32 0.0, %v508
      %v510 = vpop.f32.mrb[0].mxu0
      %v511 = vpop.f32.mrb[0].mxu0
      %v512 = vadd.f32 0.0, %v511
      %v513 = vpop.f32.mrb[0].mxu0
      %514 = vdwg.mxu0
      %v516 = vsel %vm287, %v206, 0
      %v519 = vsel %vm287, %v207, 0
      %v522 = vsel %vm287, %v208, 0
      %v525 = vsel %vm287, %v209, 0
      %v528 = vsel %vm287, %v210, 0
      %v531 = vsel %vm287, %v211, 0
      %v534 = vsel %vm287, %v212, 0
      %v537 = vsel %vm287, %v213, 0
      %v540 = vsel %vm287, %v214, 0
      %v543 = vsel %vm287, %v215, 0
      %v546 = vsel %vm287, %v216, 0
      %v549 = vsel %vm287, %v217, 0
      %v552 = vsel %vm287, %v218, 0
      %v555 = vsel %vm287, %v219, 0
      %v558 = vsel %vm287, %v220, 0
      %v561 = vsel %vm287, %v221, 0
      %v564 = vsel %vm287, %v222, 0
      %v567 = vand.u32 %v223, %v342
      %569 = vmatprep.subr.bf16.mxu0 0
      %570 = vmatpush1.bf16.msra.mxu0 %v567
      %571 = vmatprep.subr.bf16.mxu0 0
      %572 = vmatpush1.bf16.msra.mxu0 0
      %573 = vmatprep.subr.bf16.mxu0 0
      %574 = vmatpush1.bf16.msra.mxu0 0
      %575 = vmatprep.subr.bf16.mxu0 0
      %576 = vmatpush1.bf16.msra.mxu0 0
      %577 = vmatprep.subr.bf16.mxu0 0
      %578 = vmatpush1.bf16.msra.mxu0 0
      %579 = vmatprep.subr.bf16.mxu0 0
      %580 = vmatpush1.bf16.msra.mxu0 0
      %581 = vmatprep.subr.bf16.mxu0 0
      %582 = vmatpush1.bf16.msra.mxu0 0
      %583 = vmatprep.subr.bf16.mxu0 0
      %584 = vmatpush1.bf16.msra.mxu0 0
      %585 = vmatprep.subr.bf16.mxu0 0
      %586 = vmatpush1.bf16.msra.mxu0 0
      %587 = vmatprep.subr.bf16.mxu0 0
      %588 = vmatpush1.bf16.msra.mxu0 0
      %589 = vmatprep.subr.bf16.mxu0 0
      %590 = vmatpush1.bf16.msra.mxu0 0
      %591 = vmatprep.subr.bf16.mxu0 0
      %592 = vmatpush1.bf16.msra.mxu0 0
      %593 = vmatprep.subr.bf16.mxu0 0
      %594 = vmatpush1.bf16.msra.mxu0 0
      %595 = vmatprep.subr.bf16.mxu0 0
      %596 = vmatpush1.bf16.msra.mxu0 0
      %597 = vmatprep.subr.bf16.mxu0 0
      %598 = vmatpush1.bf16.msra.mxu0 0
      %599 = vmatprep.subr.bf16.mxu0 0
      %600 = vmatpush1.bf16.msra.mxu0 0
      %601 = vmatprep.mubr.bf16.mxu0 0
      %602 = vmatmul.mubr.bf16.gmra.mrb[0].mxu0 %v516
      %v603 = vpop.f32.mrb[0].mxu0
      %v604 = vadd.f32 %v381, %v603
      %v605 = vpop.f32.mrb[0].mxu0
      %v606 = vpop.f32.mrb[0].mxu0
      %v607 = vadd.f32 %v384, %v606
      %v608 = vpop.f32.mrb[0].mxu0
      %609 = vmatprep.mubr.bf16.mxu0 0
      %610 = vmatmul.mubr.bf16.gmra.mrb[0].mxu0 %v519
      %v611 = vpop.f32.mrb[0].mxu0
      %v612 = vadd.f32 %v389, %v611
      %v613 = vpop.f32.mrb[0].mxu0
      %v614 = vpop.f32.mrb[0].mxu0
      %v615 = vadd.f32 %v392, %v614
      %v616 = vpop.f32.mrb[0].mxu0
      %617 = vmatprep.mubr.bf16.mxu0 0
      %618 = vmatmul.mubr.bf16.gmra.mrb[0].mxu0 %v522
      %v619 = vpop.f32.mrb[0].mxu0
      %v620 = vadd.f32 %v397, %v619
      %v621 = vpop.f32.mrb[0].mxu0
      %v622 = vpop.f32.mrb[0].mxu0
      %v623 = vadd.f32 %v400, %v622
      %v624 = vpop.f32.mrb[0].mxu0
      %625 = vmatprep.mubr.bf16.mxu0 0
      %626 = vmatmul.mubr.bf16.gmra.mrb[0].mxu0 %v525
      %v627 = vpop.f32.mrb[0].mxu0
      %v628 = vadd.f32 %v405, %v627
      %v629 = vpop.f32.mrb[0].mxu0
      %v630 = vpop.f32.mrb[0].mxu0
      %v631 = vadd.f32 %v408, %v630
      %v632 = vpop.f32.mrb[0].mxu0
      %633 = vmatprep.mubr.bf16.mxu0 0
      %634 = vmatmul.mubr.bf16.gmra.mrb[0].mxu0 %v528
      %v635 = vpop.f32.mrb[0].mxu0
      %v636 = vadd.f32 %v413, %v635
      %v637 = vpop.f32.mrb[0].mxu0
      %v638 = vpop.f32.mrb[0].mxu0
      %v639 = vadd.f32 %v416, %v638
      %v640 = vpop.f32.mrb[0].mxu0
      %641 = vmatprep.mubr.bf16.mxu0 0
      %642 = vmatmul.mubr.bf16.gmra.mrb[0].mxu0 %v531
      %v643 = vpop.f32.mrb[0].mxu0
      %v644 = vadd.f32 %v421, %v643
      %v645 = vpop.f32.mrb[0].mxu0
      %v646 = vpop.f32.mrb[0].mxu0
      %v647 = vadd.f32 %v424, %v646
      %v648 = vpop.f32.mrb[0].mxu0
      %649 = vmatprep.mubr.bf16.mxu0 0
      %650 = vmatmul.mubr.bf16.gmra.mrb[0].mxu0 %v534
      %v651 = vpop.f32.mrb[0].mxu0
      %v652 = vadd.f32 %v429, %v651
      %v653 = vpop.f32.mrb[0].mxu0
      %v654 = vpop.f32.mrb[0].mxu0
      %v655 = vadd.f32 %v432, %v654
      %v656 = vpop.f32.mrb[0].mxu0
      %657 = vmatprep.mubr.bf16.mxu0 0
      %658 = vmatmul.mubr.bf16.gmra.mrb[0].mxu0 %v537
      %v659 = vpop.f32.mrb[0].mxu0
      %v660 = vadd.f32 %v437, %v659
      %v661 = vpop.f32.mrb[0].mxu0
      %v662 = vpop.f32.mrb[0].mxu0
      %v663 = vadd.f32 %v440, %v662
      %v664 = vpop.f32.mrb[0].mxu0
      %665 = vmatprep.mubr.bf16.mxu0 0
      %666 = vmatmul.mubr.bf16.gmra.mrb[0].mxu0 %v540
      %v667 = vpop.f32.mrb[0].mxu0
      %v668 = vadd.f32 %v445, %v667
      %v669 = vpop.f32.mrb[0].mxu0
      %v670 = vpop.f32.mrb[0].mxu0
      %v671 = vadd.f32 %v448, %v670
      %v672 = vpop.f32.mrb[0].mxu0
      %673 = vmatprep.mubr.bf16.mxu0 0
      %674 = vmatmul.mubr.bf16.gmra.mrb[0].mxu0 %v543
      %v675 = vpop.f32.mrb[0].mxu0
      %v676 = vadd.f32 %v453, %v675
      %v677 = vpop.f32.mrb[0].mxu0
      %v678 = vpop.f32.mrb[0].mxu0
      %v679 = vadd.f32 %v456, %v678
      %v680 = vpop.f32.mrb[0].mxu0
      %681 = vmatprep.mubr.bf16.mxu0 0
      %682 = vmatmul.mubr.bf16.gmra.mrb[0].mxu0 %v546
      %v683 = vpop.f32.mrb[0].mxu0
      %v684 = vadd.f32 %v461, %v683
      %v685 = vpop.f32.mrb[0].mxu0
      %v686 = vpop.f32.mrb[0].mxu0
      %v687 = vadd.f32 %v464, %v686
      %v688 = vpop.f32.mrb[0].mxu0
      %689 = vmatprep.mubr.bf16.mxu0 0
      %690 = vmatmul.mubr.bf16.gmra.mrb[0].mxu0 %v549
      %v691 = vpop.f32.mrb[0].mxu0
      %v692 = vadd.f32 %v469, %v691
      %v693 = vpop.f32.mrb[0].mxu0
      %v694 = vpop.f32.mrb[0].mxu0
      %v695 = vadd.f32 %v472, %v694
      %v696 = vpop.f32.mrb[0].mxu0
      %697 = vmatprep.mubr.bf16.mxu0 0
      %698 = vmatmul.mubr.bf16.gmra.mrb[0].mxu0 %v552
      %v699 = vpop.f32.mrb[0].mxu0
      %v700 = vadd.f32 %v477, %v699
      %v701 = vpop.f32.mrb[0].mxu0
      %v702 = vpop.f32.mrb[0].mxu0
      %v703 = vadd.f32 %v480, %v702
      %v704 = vpop.f32.mrb[0].mxu0
      %705 = vmatprep.mubr.bf16.mxu0 0
      %706 = vmatmul.mubr.bf16.gmra.mrb[0].mxu0 %v555
      %v707 = vpop.f32.mrb[0].mxu0
      %v708 = vadd.f32 %v485, %v707
      %v709 = vpop.f32.mrb[0].mxu0
      %v710 = vpop.f32.mrb[0].mxu0
      %v711 = vadd.f32 %v488, %v710
      %v712 = vpop.f32.mrb[0].mxu0
      %713 = vmatprep.mubr.bf16.mxu0 0
      %714 = vmatmul.mubr.bf16.gmra.mrb[0].mxu0 %v558
      %v715 = vpop.f32.mrb[0].mxu0
      %v716 = vadd.f32 %v493, %v715
      %v717 = vpop.f32.mrb[0].mxu0
      %v718 = vpop.f32.mrb[0].mxu0
      %v719 = vadd.f32 %v496, %v718
      %v720 = vpop.f32.mrb[0].mxu0
      %721 = vmatprep.mubr.bf16.mxu0 0
      %722 = vmatmul.mubr.bf16.gmra.mrb[0].mxu0 %v561
      %v723 = vpop.f32.mrb[0].mxu0
      %v724 = vadd.f32 %v501, %v723
      %v725 = vpop.f32.mrb[0].mxu0
      %v726 = vpop.f32.mrb[0].mxu0
      %v727 = vadd.f32 %v504, %v726
      %v728 = vpop.f32.mrb[0].mxu0
      %729 = vmatprep.mubr.bf16.mxu0 0
      %730 = vmatmul.mubr.bf16.gmra.mrb[0].mxu0 %v564
      %v731 = vpop.f32.mrb[0].mxu0
      %v732 = vadd.f32 %v509, %v731
      %v733 = vpop.f32.mrb[0].mxu0
      %v734 = vpop.f32.mrb[0].mxu0
      %v735 = vadd.f32 %v512, %v734
      %v736 = vpop.f32.mrb[0].mxu0
      %737 = vdwg.mxu0
      %v738 = vld [vmem:[%s165 + $0x1] sm:$0xff]
      %v739 = vld [vmem:[%s165 + $0x9] sm:$0xff]
      %v740 = vld [vmem:[%s165 + $0x11] sm:$0xff]
      %v741 = vld [vmem:[%s165 + $0x19] sm:$0xff]
      %v742 = vld [vmem:[%s165 + $0x21] sm:$0xff]
      %v743 = vld [vmem:[%s165 + $0x29] sm:$0xff]
      %v744 = vld [vmem:[%s165 + $0x31] sm:$0xff]
      %v745 = vld [vmem:[%s165 + $0x39] sm:$0xff]
      %v746 = vld [vmem:[%s165 + $0x41] sm:$0xff]
      %v747 = vld [vmem:[%s165 + $0x49] sm:$0xff]
      %v748 = vld [vmem:[%s165 + $0x51] sm:$0xff]
      %v749 = vld [vmem:[%s165 + $0x59] sm:$0xff]
      %v750 = vld [vmem:[%s165 + $0x61] sm:$0xff]
      %v751 = vld [vmem:[%s165 + $0x69] sm:$0xff]
      %v752 = vld [vmem:[%s165 + $0x71] sm:$0xff]
      %v753 = vld [vmem:[%s165 + $0x79] sm:$0xff]
      %v754 = vld [vmem:[%s165 + $0x81] sm:$0xff]
      %v755 = vld [vmem:[%s165 + $0x89] sm:$0xff]
      %v756 = vld [vmem:[%s165 + $0x91] sm:$0xff]
      %v757 = vld [vmem:[%s165 + $0x99] sm:$0xff]
      %v758 = vld [vmem:[%s165 + $0xa1] sm:$0xff]
      %v759 = vld [vmem:[%s165 + $0xa9] sm:$0xff]
      %v760 = vld [vmem:[%s165 + $0xb1] sm:$0xff]
      %v761 = vld [vmem:[%s165 + $0xb9] sm:$0xff]
      %v762 = vld [vmem:[%s165 + $0xc1] sm:$0xff]
      %v763 = vld [vmem:[%s165 + $0xc9] sm:$0xff]
      %v764 = vld [vmem:[%s165 + $0xd1] sm:$0xff]
      %v765 = vld [vmem:[%s165 + $0xd9] sm:$0xff]
      %v766 = vld [vmem:[%s165 + $0xe1] sm:$0xff]
      %v767 = vld [vmem:[%s165 + $0xe9] sm:$0xff]
      %v768 = vld [vmem:[%s165 + $0xf1] sm:$0xff]
      %v769 = vld [vmem:[%s165 + $0xf9] sm:$0xff]
      %v770 = vld [vmem:[%s165 + $0x101] sm:$0xff]
      %v771 = vld [vmem:[%s165 + $0x109] sm:$0xff]
      %v772 = vpack.c.bf16 %v739, %v738
      %v773 = vpack.c.bf16 %v741, %v740
      %v774 = vpack.c.bf16 %v743, %v742
      %v775 = vpack.c.bf16 %v745, %v744
      %v776 = vpack.c.bf16 %v747, %v746
      %v777 = vpack.c.bf16 %v749, %v748
      %v778 = vpack.c.bf16 %v751, %v750
      %v779 = vpack.c.bf16 %v753, %v752
      %v780 = vpack.c.bf16 %v755, %v754
      %v781 = vpack.c.bf16 %v757, %v756
      %v782 = vpack.c.bf16 %v759, %v758
      %v783 = vpack.c.bf16 %v761, %v760
      %v784 = vpack.c.bf16 %v763, %v762
      %v785 = vpack.c.bf16 %v765, %v764
      %v786 = vpack.c.bf16 %v767, %v766
      %v787 = vpack.c.bf16 %v769, %v768
      %v788 = vpack.c.bf16 %v771, %v770
      %v789 = vld [vmem:[%s1] sm:$0x8]
      %v790 = vld [vmem:[%s1 + $0x4] sm:$0x1]
      %v793 = vunpack.c.l.b16 %v789
      %v794 = vunpack.c.l.b16 %v790
      %v795 = vpack.c.b16 %v794, %v793
      %v796 = vrot.slane %v795, 3
      %v798 = vsel %vm287, %v772, 0
      %v801 = vsel %vm287, %v773, 0
      %v804 = vsel %vm287, %v774, 0
      %v807 = vsel %vm287, %v775, 0
      %v810 = vsel %vm287, %v776, 0
      %v813 = vsel %vm287, %v777, 0
      %v816 = vsel %vm287, %v778, 0
      %v819 = vsel %vm287, %v779, 0
      %v822 = vsel %vm287, %v780, 0
      %v825 = vsel %vm287, %v781, 0
      %v828 = vsel %vm287, %v782, 0
      %v831 = vsel %vm287, %v783, 0
      %v834 = vsel %vm287, %v784, 0
      %v837 = vsel %vm287, %v785, 0
      %v840 = vsel %vm287, %v786, 0
      %v843 = vsel %vm287, %v787, 0
      %v846 = vsel %vm287, %v788, 0
      %v849 = vand.u32 %v796, %v342
      %851 = vmatprep.subr.bf16.mxu0 0
      %852 = vmatpush1.bf16.msra.mxu0 %v849
      %853 = vmatprep.subr.bf16.mxu0 0
      %854 = vmatpush1.bf16.msra.mxu0 0
      %855 = vmatprep.subr.bf16.mxu0 0
      %856 = vmatpush1.bf16.msra.mxu0 0
      %857 = vmatprep.subr.bf16.mxu0 0
      %858 = vmatpush1.bf16.msra.mxu0 0
      %859 = vmatprep.subr.bf16.mxu0 0
      %860 = vmatpush1.bf16.msra.mxu0 0
      %861 = vmatprep.subr.bf16.mxu0 0
      %862 = vmatpush1.bf16.msra.mxu0 0
      %863 = vmatprep.subr.bf16.mxu0 0
      %864 = vmatpush1.bf16.msra.mxu0 0
      %865 = vmatprep.subr.bf16.mxu0 0
      %866 = vmatpush1.bf16.msra.mxu0 0
      %867 = vmatprep.subr.bf16.mxu0 0
      %868 = vmatpush1.bf16.msra.mxu0 0
      %869 = vmatprep.subr.bf16.mxu0 0
      %870 = vmatpush1.bf16.msra.mxu0 0
      %871 = vmatprep.subr.bf16.mxu0 0
      %872 = vmatpush1.bf16.msra.mxu0 0
      %873 = vmatprep.subr.bf16.mxu0 0
      %874 = vmatpush1.bf16.msra.mxu0 0
      %875 = vmatprep.subr.bf16.mxu0 0
      %876 = vmatpush1.bf16.msra.mxu0 0
      %877 = vmatprep.subr.bf16.mxu0 0
      %878 = vmatpush1.bf16.msra.mxu0 0
      %879 = vmatprep.subr.bf16.mxu0 0
      %880 = vmatpush1.bf16.msra.mxu0 0
      %881 = vmatprep.subr.bf16.mxu0 0
      %882 = vmatpush1.bf16.msra.mxu0 0
      %883 = vmatprep.mubr.bf16.mxu0 0
      %884 = vmatmul.mubr.bf16.gmra.mrb[0].mxu0 %v798
      %v885 = vpop.f32.mrb[0].mxu0
      %v886 = vadd.f32 0.0, %v885
      %v887 = vpop.f32.mrb[0].mxu0
      %v888 = vpop.f32.mrb[0].mxu0
      %v889 = vadd.f32 0.0, %v888
      %v890 = vpop.f32.mrb[0].mxu0
      %891 = vmatprep.mubr.bf16.mxu0 0
      %892 = vmatmul.mubr.bf16.gmra.mrb[0].mxu0 %v801
      %v893 = vpop.f32.mrb[0].mxu0
      %v894 = vadd.f32 0.0, %v893
      %v895 = vpop.f32.mrb[0].mxu0
      %v896 = vpop.f32.mrb[0].mxu0
      %v897 = vadd.f32 0.0, %v896
      %v898 = vpop.f32.mrb[0].mxu0
      %899 = vmatprep.mubr.bf16.mxu0 0
      %900 = vmatmul.mubr.bf16.gmra.mrb[0].mxu0 %v804
      %v901 = vpop.f32.mrb[0].mxu0
      %v902 = vadd.f32 0.0, %v901
      %v903 = vpop.f32.mrb[0].mxu0
      %v904 = vpop.f32.mrb[0].mxu0
      %v905 = vadd.f32 0.0, %v904
      %v906 = vpop.f32.mrb[0].mxu0
      %907 = vmatprep.mubr.bf16.mxu0 0
      %908 = vmatmul.mubr.bf16.gmra.mrb[0].mxu0 %v807
      %v909 = vpop.f32.mrb[0].mxu0
      %v910 = vadd.f32 0.0, %v909
      %v911 = vpop.f32.mrb[0].mxu0
      %v912 = vpop.f32.mrb[0].mxu0
      %v913 = vadd.f32 0.0, %v912
      %v914 = vpop.f32.mrb[0].mxu0
      %915 = vmatprep.mubr.bf16.mxu0 0
      %916 = vmatmul.mubr.bf16.gmra.mrb[0].mxu0 %v810
      %v917 = vpop.f32.mrb[0].mxu0
      %v918 = vadd.f32 0.0, %v917
      %v919 = vpop.f32.mrb[0].mxu0
      %v920 = vpop.f32.mrb[0].mxu0
      %v921 = vadd.f32 0.0, %v920
      %v922 = vpop.f32.mrb[0].mxu0
      %923 = vmatprep.mubr.bf16.mxu0 0
      %924 = vmatmul.mubr.bf16.gmra.mrb[0].mxu0 %v813
      %v925 = vpop.f32.mrb[0].mxu0
      %v926 = vadd.f32 0.0, %v925
      %v927 = vpop.f32.mrb[0].mxu0
      %v928 = vpop.f32.mrb[0].mxu0
      %v929 = vadd.f32 0.0, %v928
      %v930 = vpop.f32.mrb[0].mxu0
      %931 = vmatprep.mubr.bf16.mxu0 0
      %932 = vmatmul.mubr.bf16.gmra.mrb[0].mxu0 %v816
      %v933 = vpop.f32.mrb[0].mxu0
      %v934 = vadd.f32 0.0, %v933
      %v935 = vpop.f32.mrb[0].mxu0
      %v936 = vpop.f32.mrb[0].mxu0
      %v937 = vadd.f32 0.0, %v936
      %v938 = vpop.f32.mrb[0].mxu0
      %939 = vmatprep.mubr.bf16.mxu0 0
      %940 = vmatmul.mubr.bf16.gmra.mrb[0].mxu0 %v819
      %v941 = vpop.f32.mrb[0].mxu0
      %v942 = vadd.f32 0.0, %v941
      %v943 = vpop.f32.mrb[0].mxu0
      %v944 = vpop.f32.mrb[0].mxu0
      %v945 = vadd.f32 0.0, %v944
      %v946 = vpop.f32.mrb[0].mxu0
      %947 = vmatprep.mubr.bf16.mxu0 0
      %948 = vmatmul.mubr.bf16.gmra.mrb[0].mxu0 %v822
      %v949 = vpop.f32.mrb[0].mxu0
      %v950 = vadd.f32 0.0, %v949
      %v951 = vpop.f32.mrb[0].mxu0
      %v952 = vpop.f32.mrb[0].mxu0
      %v953 = vadd.f32 0.0, %v952
      %v954 = vpop.f32.mrb[0].mxu0
      %955 = vmatprep.mubr.bf16.mxu0 0
      %956 = vmatmul.mubr.bf16.gmra.mrb[0].mxu0 %v825
      %v957 = vpop.f32.mrb[0].mxu0
      %v958 = vadd.f32 0.0, %v957
      %v959 = vpop.f32.mrb[0].mxu0
      %v960 = vpop.f32.mrb[0].mxu0
      %v961 = vadd.f32 0.0, %v960
      %v962 = vpop.f32.mrb[0].mxu0
      %963 = vmatprep.mubr.bf16.mxu0 0
      %964 = vmatmul.mubr.bf16.gmra.mrb[0].mxu0 %v828
      %v965 = vpop.f32.mrb[0].mxu0
      %v966 = vadd.f32 0.0, %v965
      %v967 = vpop.f32.mrb[0].mxu0
      %v968 = vpop.f32.mrb[0].mxu0
      %v969 = vadd.f32 0.0, %v968
      %v970 = vpop.f32.mrb[0].mxu0
      %971 = vmatprep.mubr.bf16.mxu0 0
      %972 = vmatmul.mubr.bf16.gmra.mrb[0].mxu0 %v831
      %v973 = vpop.f32.mrb[0].mxu0
      %v974 = vadd.f32 0.0, %v973
      %v975 = vpop.f32.mrb[0].mxu0
      %v976 = vpop.f32.mrb[0].mxu0
      %v977 = vadd.f32 0.0, %v976
      %v978 = vpop.f32.mrb[0].mxu0
      %979 = vmatprep.mubr.bf16.mxu0 0
      %980 = vmatmul.mubr.bf16.gmra.mrb[0].mxu0 %v834
      %v981 = vpop.f32.mrb[0].mxu0
      %v982 = vadd.f32 0.0, %v981
      %v983 = vpop.f32.mrb[0].mxu0
      %v984 = vpop.f32.mrb[0].mxu0
      %v985 = vadd.f32 0.0, %v984
      %v986 = vpop.f32.mrb[0].mxu0
      %987 = vmatprep.mubr.bf16.mxu0 0
      %988 = vmatmul.mubr.bf16.gmra.mrb[0].mxu0 %v837
      %v989 = vpop.f32.mrb[0].mxu0
      %v990 = vadd.f32 0.0, %v989
      %v991 = vpop.f32.mrb[0].mxu0
      %v992 = vpop.f32.mrb[0].mxu0
      %v993 = vadd.f32 0.0, %v992
      %v994 = vpop.f32.mrb[0].mxu0
      %995 = vmatprep.mubr.bf16.mxu0 0
      %996 = vmatmul.mubr.bf16.gmra.mrb[0].mxu0 %v840
      %v997 = vpop.f32.mrb[0].mxu0
      %v998 = vadd.f32 0.0, %v997
      %v999 = vpop.f32.mrb[0].mxu0
      %v1000 = vpop.f32.mrb[0].mxu0
      %v1001 = vadd.f32 0.0, %v1000
      %v1002 = vpop.f32.mrb[0].mxu0
      %1003 = vmatprep.mubr.bf16.mxu0 0
      %1004 = vmatmul.mubr.bf16.gmra.mrb[0].mxu0 %v843
      %v1005 = vpop.f32.mrb[0].mxu0
      %v1006 = vadd.f32 0.0, %v1005
      %v1007 = vpop.f32.mrb[0].mxu0
      %v1008 = vpop.f32.mrb[0].mxu0
      %v1009 = vadd.f32 0.0, %v1008
      %v1010 = vpop.f32.mrb[0].mxu0
      %1011 = vmatprep.mubr.bf16.mxu0 0
      %1012 = vmatmul.mubr.bf16.gmra.mrb[0].mxu0 %v846
      %v1013 = vpop.f32.mrb[0].mxu0
      %v1014 = vadd.f32 0.0, %v1013
      %v1015 = vpop.f32.mrb[0].mxu0
      %v1016 = vpop.f32.mrb[0].mxu0
      %v1017 = vadd.f32 0.0, %v1016
      %v1018 = vpop.f32.mrb[0].mxu0
      %1019 = vdwg.mxu0
      %v1020 = vadd.f32 %v604, %v886
      %v1021 = vadd.f32 %v607, %v889
      %v1022 = vadd.f32 %v612, %v894
      %v1023 = vadd.f32 %v615, %v897
      %v1024 = vadd.f32 %v620, %v902
      %v1025 = vadd.f32 %v623, %v905
      %v1026 = vadd.f32 %v628, %v910
      %v1027 = vadd.f32 %v631, %v913
      %v1028 = vadd.f32 %v636, %v918
      %v1029 = vadd.f32 %v639, %v921
      %v1030 = vadd.f32 %v644, %v926
      %v1031 = vadd.f32 %v647, %v929
      %v1032 = vadd.f32 %v652, %v934
      %v1033 = vadd.f32 %v655, %v937
      %v1034 = vadd.f32 %v660, %v942
      %v1035 = vadd.f32 %v663, %v945
      %v1036 = vadd.f32 %v668, %v950
      %v1037 = vadd.f32 %v671, %v953
      %v1038 = vadd.f32 %v676, %v958
      %v1039 = vadd.f32 %v679, %v961
      %v1040 = vadd.f32 %v684, %v966
      %v1041 = vadd.f32 %v687, %v969
      %v1042 = vadd.f32 %v692, %v974
      %v1043 = vadd.f32 %v695, %v977
      %v1044 = vadd.f32 %v700, %v982
      %v1045 = vadd.f32 %v703, %v985
      %v1046 = vadd.f32 %v708, %v990
      %v1047 = vadd.f32 %v711, %v993
      %v1048 = vadd.f32 %v716, %v998
      %v1049 = vadd.f32 %v719, %v1001
      %v1050 = vadd.f32 %v724, %v1006
      %v1051 = vadd.f32 %v727, %v1009
      %v1052 = vadd.f32 %v732, %v1014
      %v1053 = vadd.f32 %v735, %v1017
      %v1054 = vld [vmem:[%s165 + $0x250] sm:$0xff]
      %v1055 = vld [vmem:[%s165 + $0x258] sm:$0xff]
      %v1056 = vld [vmem:[%s165 + $0x260] sm:$0xff]
      %v1057 = vld [vmem:[%s165 + $0x268] sm:$0xff]
      %v1058 = vld [vmem:[%s165 + $0x270] sm:$0xff]
      %v1059 = vld [vmem:[%s165 + $0x278] sm:$0xff]
      %v1060 = vld [vmem:[%s165 + $0x280] sm:$0xff]
      %v1061 = vld [vmem:[%s165 + $0x288] sm:$0xff]
      %v1062 = vld [vmem:[%s165 + $0x290] sm:$0xff]
      %v1063 = vld [vmem:[%s165 + $0x298] sm:$0xff]
      %v1064 = vld [vmem:[%s165 + $0x2a0] sm:$0xff]
      %v1065 = vld [vmem:[%s165 + $0x2a8] sm:$0xff]
      %v1066 = vld [vmem:[%s165 + $0x2b0] sm:$0xff]
      %v1067 = vld [vmem:[%s165 + $0x2b8] sm:$0xff]
      %v1068 = vld [vmem:[%s165 + $0x2c0] sm:$0xff]
      %v1069 = vld [vmem:[%s165 + $0x2c8] sm:$0xff]
      %v1070 = vld [vmem:[%s165 + $0x2d0] sm:$0xff]
      %v1071 = vld [vmem:[%s165 + $0x2d8] sm:$0xff]
      %v1072 = vld [vmem:[%s165 + $0x2e0] sm:$0xff]
      %v1073 = vld [vmem:[%s165 + $0x2e8] sm:$0xff]
      %v1074 = vld [vmem:[%s165 + $0x2f0] sm:$0xff]
      %v1075 = vld [vmem:[%s165 + $0x2f8] sm:$0xff]
      %v1076 = vld [vmem:[%s165 + $0x300] sm:$0xff]
      %v1077 = vld [vmem:[%s165 + $0x308] sm:$0xff]
      %v1078 = vld [vmem:[%s165 + $0x310] sm:$0xff]
      %v1079 = vld [vmem:[%s165 + $0x318] sm:$0xff]
      %v1080 = vld [vmem:[%s165 + $0x320] sm:$0xff]
      %v1081 = vld [vmem:[%s165 + $0x328] sm:$0xff]
      %v1082 = vld [vmem:[%s165 + $0x330] sm:$0xff]
      %v1083 = vld [vmem:[%s165 + $0x338] sm:$0xff]
      %v1084 = vld [vmem:[%s165 + $0x340] sm:$0xff]
      %v1085 = vld [vmem:[%s165 + $0x348] sm:$0xff]
      %v1086 = vld [vmem:[%s165 + $0x350] sm:$0xff]
      %v1087 = vld [vmem:[%s165 + $0x358] sm:$0xff]
      %v1088 = vpack.c.bf16 %v1055, %v1054
      %v1089 = vpack.c.bf16 %v1057, %v1056
      %v1090 = vpack.c.bf16 %v1059, %v1058
      %v1091 = vpack.c.bf16 %v1061, %v1060
      %v1092 = vpack.c.bf16 %v1063, %v1062
      %v1093 = vpack.c.bf16 %v1065, %v1064
      %v1094 = vpack.c.bf16 %v1067, %v1066
      %v1095 = vpack.c.bf16 %v1069, %v1068
      %v1096 = vpack.c.bf16 %v1071, %v1070
      %v1097 = vpack.c.bf16 %v1073, %v1072
      %v1098 = vpack.c.bf16 %v1075, %v1074
      %v1099 = vpack.c.bf16 %v1077, %v1076
      %v1100 = vpack.c.bf16 %v1079, %v1078
      %v1101 = vpack.c.bf16 %v1081, %v1080
      %v1102 = vpack.c.bf16 %v1083, %v1082
      %v1103 = vpack.c.bf16 %v1085, %v1084
      %v1104 = vpack.c.bf16 %v1087, %v1086
      %v1105 = vld [vmem:[%s1 + $0x4] sm:$0x3]
      %v1107 = vunpack.c.l.b16 %v1105
      %v1108 = vpack.c.b16 %v1107, %v1107
      %v1110 = vshrl.u32 %v1108, 16
      %v1112 = vshll.u32 %v1108, 16
      %v1114 = vrot.slane %v1112, 1
      %v1115 = vor.u32 %v1110, %v1114
      %v1117 = vsel %vm287, %v1088, 0
      %v1120 = vsel %vm287, %v1089, 0
      %v1123 = vsel %vm287, %v1090, 0
      %v1126 = vsel %vm287, %v1091, 0
      %v1129 = vsel %vm287, %v1092, 0
      %v1132 = vsel %vm287, %v1093, 0
      %v1135 = vsel %vm287, %v1094, 0
      %v1138 = vsel %vm287, %v1095, 0
      %v1141 = vsel %vm287, %v1096, 0
      %v1144 = vsel %vm287, %v1097, 0
      %v1147 = vsel %vm287, %v1098, 0
      %v1150 = vsel %vm287, %v1099, 0
      %v1153 = vsel %vm287, %v1100, 0
      %v1156 = vsel %vm287, %v1101, 0
      %v1159 = vsel %vm287, %v1102, 0
      %v1162 = vsel %vm287, %v1103, 0
      %v1165 = vsel %vm287, %v1104, 0
      %v1168 = vand.u32 %v1115, %v342
      %1170 = vmatprep.subr.bf16.mxu0 0
      %1171 = vmatpush1.bf16.msra.mxu0 %v1168
      %1172 = vmatprep.subr.bf16.mxu0 0
      %1173 = vmatpush1.bf16.msra.mxu0 0
      %1174 = vmatprep.subr.bf16.mxu0 0
      %1175 = vmatpush1.bf16.msra.mxu0 0
      %1176 = vmatprep.subr.bf16.mxu0 0
      %1177 = vmatpush1.bf16.msra.mxu0 0
      %1178 = vmatprep.subr.bf16.mxu0 0
      %1179 = vmatpush1.bf16.msra.mxu0 0
      %1180 = vmatprep.subr.bf16.mxu0 0
      %1181 = vmatpush1.bf16.msra.mxu0 0
      %1182 = vmatprep.subr.bf16.mxu0 0
      %1183 = vmatpush1.bf16.msra.mxu0 0
      %1184 = vmatprep.subr.bf16.mxu0 0
      %1185 = vmatpush1.bf16.msra.mxu0 0
      %1186 = vmatprep.subr.bf16.mxu0 0
      %1187 = vmatpush1.bf16.msra.mxu0 0
      %1188 = vmatprep.subr.bf16.mxu0 0
      %1189 = vmatpush1.bf16.msra.mxu0 0
      %1190 = vmatprep.subr.bf16.mxu0 0
      %1191 = vmatpush1.bf16.msra.mxu0 0
      %1192 = vmatprep.subr.bf16.mxu0 0
      %1193 = vmatpush1.bf16.msra.mxu0 0
      %1194 = vmatprep.subr.bf16.mxu0 0
      %1195 = vmatpush1.bf16.msra.mxu0 0
      %1196 = vmatprep.subr.bf16.mxu0 0
      %1197 = vmatpush1.bf16.msra.mxu0 0
      %1198 = vmatprep.subr.bf16.mxu0 0
      %1199 = vmatpush1.bf16.msra.mxu0 0
      %1200 = vmatprep.subr.bf16.mxu0 0
      %1201 = vmatpush1.bf16.msra.mxu0 0
      %1202 = vmatprep.mubr.bf16.mxu0 0
      %1203 = vmatmul.mubr.bf16.gmra.mrb[0].mxu0 %v1117
      %v1204 = vpop.f32.mrb[0].mxu0
      %v1205 = vadd.f32 0.0, %v1204
      %v1206 = vpop.f32.mrb[0].mxu0
      %v1207 = vpop.f32.mrb[0].mxu0
      %v1208 = vadd.f32 0.0, %v1207
      %v1209 = vpop.f32.mrb[0].mxu0
      %1210 = vmatprep.mubr.bf16.mxu0 0
      %1211 = vmatmul.mubr.bf16.gmra.mrb[0].mxu0 %v1120
      %v1212 = vpop.f32.mrb[0].mxu0
      %v1213 = vadd.f32 0.0, %v1212
      %v1214 = vpop.f32.mrb[0].mxu0
      %v1215 = vpop.f32.mrb[0].mxu0
      %v1216 = vadd.f32 0.0, %v1215
      %v1217 = vpop.f32.mrb[0].mxu0
      %1218 = vmatprep.mubr.bf16.mxu0 0
      %1219 = vmatmul.mubr.bf16.gmra.mrb[0].mxu0 %v1123
      %v1220 = vpop.f32.mrb[0].mxu0
      %v1221 = vadd.f32 0.0, %v1220
      %v1222 = vpop.f32.mrb[0].mxu0
      %v1223 = vpop.f32.mrb[0].mxu0
      %v1224 = vadd.f32 0.0, %v1223
      %v1225 = vpop.f32.mrb[0].mxu0
      %1226 = vmatprep.mubr.bf16.mxu0 0
      %1227 = vmatmul.mubr.bf16.gmra.mrb[0].mxu0 %v1126
      %v1228 = vpop.f32.mrb[0].mxu0
      %v1229 = vadd.f32 0.0, %v1228
      %v1230 = vpop.f32.mrb[0].mxu0
      %v1231 = vpop.f32.mrb[0].mxu0
      %v1232 = vadd.f32 0.0, %v1231
      %v1233 = vpop.f32.mrb[0].mxu0
      %1234 = vmatprep.mubr.bf16.mxu0 0
      %1235 = vmatmul.mubr.bf16.gmra.mrb[0].mxu0 %v1129
      %v1236 = vpop.f32.mrb[0].mxu0
      %v1237 = vadd.f32 0.0, %v1236
      %v1238 = vpop.f32.mrb[0].mxu0
      %v1239 = vpop.f32.mrb[0].mxu0
      %v1240 = vadd.f32 0.0, %v1239
      %v1241 = vpop.f32.mrb[0].mxu0
      %1242 = vmatprep.mubr.bf16.mxu0 0
      %1243 = vmatmul.mubr.bf16.gmra.mrb[0].mxu0 %v1132
      %v1244 = vpop.f32.mrb[0].mxu0
      %v1245 = vadd.f32 0.0, %v1244
      %v1246 = vpop.f32.mrb[0].mxu0
      %v1247 = vpop.f32.mrb[0].mxu0
      %v1248 = vadd.f32 0.0, %v1247
      %v1249 = vpop.f32.mrb[0].mxu0
      %1250 = vmatprep.mubr.bf16.mxu0 0
      %1251 = vmatmul.mubr.bf16.gmra.mrb[0].mxu0 %v1135
      %v1252 = vpop.f32.mrb[0].mxu0
      %v1253 = vadd.f32 0.0, %v1252
      %v1254 = vpop.f32.mrb[0].mxu0
      %v1255 = vpop.f32.mrb[0].mxu0
      %v1256 = vadd.f32 0.0, %v1255
      %v1257 = vpop.f32.mrb[0].mxu0
      %1258 = vmatprep.mubr.bf16.mxu0 0
      %1259 = vmatmul.mubr.bf16.gmra.mrb[0].mxu0 %v1138
      %v1260 = vpop.f32.mrb[0].mxu0
      %v1261 = vadd.f32 0.0, %v1260
      %v1262 = vpop.f32.mrb[0].mxu0
      %v1263 = vpop.f32.mrb[0].mxu0
      %v1264 = vadd.f32 0.0, %v1263
      %v1265 = vpop.f32.mrb[0].mxu0
      %1266 = vmatprep.mubr.bf16.mxu0 0
      %1267 = vmatmul.mubr.bf16.gmra.mrb[0].mxu0 %v1141
      %v1268 = vpop.f32.mrb[0].mxu0
      %v1269 = vadd.f32 0.0, %v1268
      %v1270 = vpop.f32.mrb[0].mxu0
      %v1271 = vpop.f32.mrb[0].mxu0
      %v1272 = vadd.f32 0.0, %v1271
      %v1273 = vpop.f32.mrb[0].mxu0
      %1274 = vmatprep.mubr.bf16.mxu0 0
      %1275 = vmatmul.mubr.bf16.gmra.mrb[0].mxu0 %v1144
      %v1276 = vpop.f32.mrb[0].mxu0
      %v1277 = vadd.f32 0.0, %v1276
      %v1278 = vpop.f32.mrb[0].mxu0
      %v1279 = vpop.f32.mrb[0].mxu0
      %v1280 = vadd.f32 0.0, %v1279
      %v1281 = vpop.f32.mrb[0].mxu0
      %1282 = vmatprep.mubr.bf16.mxu0 0
      %1283 = vmatmul.mubr.bf16.gmra.mrb[0].mxu0 %v1147
      %v1284 = vpop.f32.mrb[0].mxu0
      %v1285 = vadd.f32 0.0, %v1284
      %v1286 = vpop.f32.mrb[0].mxu0
      %v1287 = vpop.f32.mrb[0].mxu0
      %v1288 = vadd.f32 0.0, %v1287
      %v1289 = vpop.f32.mrb[0].mxu0
      %1290 = vmatprep.mubr.bf16.mxu0 0
      %1291 = vmatmul.mubr.bf16.gmra.mrb[0].mxu0 %v1150
      %v1292 = vpop.f32.mrb[0].mxu0
      %v1293 = vadd.f32 0.0, %v1292
      %v1294 = vpop.f32.mrb[0].mxu0
      %v1295 = vpop.f32.mrb[0].mxu0
      %v1296 = vadd.f32 0.0, %v1295
      %v1297 = vpop.f32.mrb[0].mxu0
      %1298 = vmatprep.mubr.bf16.mxu0 0
      %1299 = vmatmul.mubr.bf16.gmra.mrb[0].mxu0 %v1153
      %v1300 = vpop.f32.mrb[0].mxu0
      %v1301 = vadd.f32 0.0, %v1300
      %v1302 = vpop.f32.mrb[0].mxu0
      %v1303 = vpop.f32.mrb[0].mxu0
      %v1304 = vadd.f32 0.0, %v1303
      %v1305 = vpop.f32.mrb[0].mxu0
      %1306 = vmatprep.mubr.bf16.mxu0 0
      %1307 = vmatmul.mubr.bf16.gmra.mrb[0].mxu0 %v1156
      %v1308 = vpop.f32.mrb[0].mxu0
      %v1309 = vadd.f32 0.0, %v1308
      %v1310 = vpop.f32.mrb[0].mxu0
      %v1311 = vpop.f32.mrb[0].mxu0
      %v1312 = vadd.f32 0.0, %v1311
      %v1313 = vpop.f32.mrb[0].mxu0
      %1314 = vmatprep.mubr.bf16.mxu0 0
      %1315 = vmatmul.mubr.bf16.gmra.mrb[0].mxu0 %v1159
      %v1316 = vpop.f32.mrb[0].mxu0
      %v1317 = vadd.f32 0.0, %v1316
      %v1318 = vpop.f32.mrb[0].mxu0
      %v1319 = vpop.f32.mrb[0].mxu0
      %v1320 = vadd.f32 0.0, %v1319
      %v1321 = vpop.f32.mrb[0].mxu0
      %1322 = vmatprep.mubr.bf16.mxu0 0
      %1323 = vmatmul.mubr.bf16.gmra.mrb[0].mxu0 %v1162
      %v1324 = vpop.f32.mrb[0].mxu0
      %v1325 = vadd.f32 0.0, %v1324
      %v1326 = vpop.f32.mrb[0].mxu0
      %v1327 = vpop.f32.mrb[0].mxu0
      %v1328 = vadd.f32 0.0, %v1327
      %v1329 = vpop.f32.mrb[0].mxu0
      %1330 = vmatprep.mubr.bf16.mxu0 0
      %1331 = vmatmul.mubr.bf16.gmra.mrb[0].mxu0 %v1165
      %v1332 = vpop.f32.mrb[0].mxu0
      %v1333 = vadd.f32 0.0, %v1332
      %v1334 = vpop.f32.mrb[0].mxu0
      %v1335 = vpop.f32.mrb[0].mxu0
      %v1336 = vadd.f32 0.0, %v1335
      %v1337 = vpop.f32.mrb[0].mxu0
      %1338 = vdwg.mxu0
      %v1339 = vadd.f32 %v1020, %v1205
      %v1340 = vadd.f32 %v1021, %v1208
      %v1341 = vadd.f32 %v1022, %v1213
      %v1342 = vadd.f32 %v1023, %v1216
      %v1343 = vadd.f32 %v1024, %v1221
      %v1344 = vadd.f32 %v1025, %v1224
      %v1345 = vadd.f32 %v1026, %v1229
      %v1346 = vadd.f32 %v1027, %v1232
      %v1347 = vadd.f32 %v1028, %v1237
      %v1348 = vadd.f32 %v1029, %v1240
      %v1349 = vadd.f32 %v1030, %v1245
      %v1350 = vadd.f32 %v1031, %v1248
      %v1351 = vadd.f32 %v1032, %v1253
      %v1352 = vadd.f32 %v1033, %v1256
      %v1353 = vadd.f32 %v1034, %v1261
      %v1354 = vadd.f32 %v1035, %v1264
      %v1355 = vadd.f32 %v1036, %v1269
      %v1356 = vadd.f32 %v1037, %v1272
      %v1357 = vadd.f32 %v1038, %v1277
      %v1358 = vadd.f32 %v1039, %v1280
      %v1359 = vadd.f32 %v1040, %v1285
      %v1360 = vadd.f32 %v1041, %v1288
      %v1361 = vadd.f32 %v1042, %v1293
      %v1362 = vadd.f32 %v1043, %v1296
      %v1363 = vadd.f32 %v1044, %v1301
      %v1364 = vadd.f32 %v1045, %v1304
      %v1365 = vadd.f32 %v1046, %v1309
      %v1366 = vadd.f32 %v1047, %v1312
      %v1367 = vadd.f32 %v1048, %v1317
      %v1368 = vadd.f32 %v1049, %v1320
      %v1369 = vadd.f32 %v1050, %v1325
      %v1370 = vadd.f32 %v1051, %v1328
      %v1371 = vadd.f32 %v1052, %v1333
      %v1372 = vadd.f32 %v1053, %v1336
      %v1373 = vld [vmem:[%s165 + $0x378] sm:$0xff]
      %v1374 = vld [vmem:[%s165 + $0x380] sm:$0xff]
      %v1375 = vld [vmem:[%s165 + $0x388] sm:$0xff]
      %v1376 = vld [vmem:[%s165 + $0x390] sm:$0xff]
      %v1377 = vld [vmem:[%s165 + $0x398] sm:$0xff]
      %v1378 = vld [vmem:[%s165 + $0x3a0] sm:$0xff]
      %v1379 = vld [vmem:[%s165 + $0x3a8] sm:$0xff]
      %v1380 = vld [vmem:[%s165 + $0x3b0] sm:$0xff]
      %v1381 = vld [vmem:[%s165 + $0x3b8] sm:$0xff]
      %v1382 = vld [vmem:[%s165 + $0x3c0] sm:$0xff]
      %v1383 = vld [vmem:[%s165 + $0x3c8] sm:$0xff]
      %v1384 = vld [vmem:[%s165 + $0x3d0] sm:$0xff]
      %v1385 = vld [vmem:[%s165 + $0x3d8] sm:$0xff]
      %v1386 = vld [vmem:[%s165 + $0x3e0] sm:$0xff]
      %v1387 = vld [vmem:[%s165 + $0x3e8] sm:$0xff]
      %v1388 = vld [vmem:[%s165 + $0x3f0] sm:$0xff]
      %v1389 = vld [vmem:[%s165 + $0x3f8] sm:$0xff]
      %v1390 = vld [vmem:[%s165 + $0x400] sm:$0xff]
      %v1391 = vld [vmem:[%s165 + $0x408] sm:$0xff]
      %v1392 = vld [vmem:[%s165 + $0x410] sm:$0xff]
      %v1393 = vld [vmem:[%s165 + $0x418] sm:$0xff]
      %v1394 = vld [vmem:[%s165 + $0x420] sm:$0xff]
      %v1395 = vld [vmem:[%s165 + $0x428] sm:$0xff]
      %v1396 = vld [vmem:[%s165 + $0x430] sm:$0xff]
      %v1397 = vld [vmem:[%s165 + $0x438] sm:$0xff]
      %v1398 = vld [vmem:[%s165 + $0x440] sm:$0xff]
      %v1399 = vld [vmem:[%s165 + $0x448] sm:$0xff]
      %v1400 = vld [vmem:[%s165 + $0x450] sm:$0xff]
      %v1401 = vld [vmem:[%s165 + $0x458] sm:$0xff]
      %v1402 = vld [vmem:[%s165 + $0x460] sm:$0xff]
      %v1403 = vld [vmem:[%s165 + $0x468] sm:$0xff]
      %v1404 = vld [vmem:[%s165 + $0x470] sm:$0xff]
      %v1405 = vld [vmem:[%s165 + $0x478] sm:$0xff]
      %v1406 = vld [vmem:[%s165 + $0x480] sm:$0xff]
      %v1407 = vpack.c.bf16 %v1374, %v1373
      %v1408 = vpack.c.bf16 %v1376, %v1375
      %v1409 = vpack.c.bf16 %v1378, %v1377
      %v1410 = vpack.c.bf16 %v1380, %v1379
      %v1411 = vpack.c.bf16 %v1382, %v1381
      %v1412 = vpack.c.bf16 %v1384, %v1383
      %v1413 = vpack.c.bf16 %v1386, %v1385
      %v1414 = vpack.c.bf16 %v1388, %v1387
      %v1415 = vpack.c.bf16 %v1390, %v1389
      %v1416 = vpack.c.bf16 %v1392, %v1391
      %v1417 = vpack.c.bf16 %v1394, %v1393
      %v1418 = vpack.c.bf16 %v1396, %v1395
      %v1419 = vpack.c.bf16 %v1398, %v1397
      %v1420 = vpack.c.bf16 %v1400, %v1399
      %v1421 = vpack.c.bf16 %v1402, %v1401
      %v1422 = vpack.c.bf16 %v1404, %v1403
      %v1423 = vpack.c.bf16 %v1406, %v1405
      %v1424 = vld [vmem:[%s1 + $0x4] sm:$0xc]
      %v1426 = vunpack.c.l.b16 %v1424
      %v1427 = vpack.c.b16 %v1426, %v1426
      %v1428 = vrot.slane %v1427, 2
      %v1430 = vsel %vm287, %v1407, 0
      %v1433 = vsel %vm287, %v1408, 0
      %v1436 = vsel %vm287, %v1409, 0
      %v1439 = vsel %vm287, %v1410, 0
      %v1442 = vsel %vm287, %v1411, 0
      %v1445 = vsel %vm287, %v1412, 0
      %v1448 = vsel %vm287, %v1413, 0
      %v1451 = vsel %vm287, %v1414, 0
      %v1454 = vsel %vm287, %v1415, 0
      %v1457 = vsel %vm287, %v1416, 0
      %v1460 = vsel %vm287, %v1417, 0
      %v1463 = vsel %vm287, %v1418, 0
      %v1466 = vsel %vm287, %v1419, 0
      %v1469 = vsel %vm287, %v1420, 0
      %v1472 = vsel %vm287, %v1421, 0
      %v1475 = vsel %vm287, %v1422, 0
      %v1478 = vsel %vm287, %v1423, 0
      %v1481 = vand.u32 %v1428, %v342
      %1483 = vmatprep.subr.bf16.mxu0 0
      %1484 = vmatpush1.bf16.msra.mxu0 %v1481
      %1485 = vmatprep.subr.bf16.mxu0 0
      %1486 = vmatpush1.bf16.msra.mxu0 0
      %1487 = vmatprep.subr.bf16.mxu0 0
      %1488 = vmatpush1.bf16.msra.mxu0 0
      %1489 = vmatprep.subr.bf16.mxu0 0
      %1490 = vmatpush1.bf16.msra.mxu0 0
      %1491 = vmatprep.subr.bf16.mxu0 0
      %1492 = vmatpush1.bf16.msra.mxu0 0
      %1493 = vmatprep.subr.bf16.mxu0 0
      %1494 = vmatpush1.bf16.msra.mxu0 0
      %1495 = vmatprep.subr.bf16.mxu0 0
      %1496 = vmatpush1.bf16.msra.mxu0 0
      %1497 = vmatprep.subr.bf16.mxu0 0
      %1498 = vmatpush1.bf16.msra.mxu0 0
      %1499 = vmatprep.subr.bf16.mxu0 0
      %1500 = vmatpush1.bf16.msra.mxu0 0
      %1501 = vmatprep.subr.bf16.mxu0 0
      %1502 = vmatpush1.bf16.msra.mxu0 0
      %1503 = vmatprep.subr.bf16.mxu0 0
      %1504 = vmatpush1.bf16.msra.mxu0 0
      %1505 = vmatprep.subr.bf16.mxu0 0
      %1506 = vmatpush1.bf16.msra.mxu0 0
      %1507 = vmatprep.subr.bf16.mxu0 0
      %1508 = vmatpush1.bf16.msra.mxu0 0
      %1509 = vmatprep.subr.bf16.mxu0 0
      %1510 = vmatpush1.bf16.msra.mxu0 0
      %1511 = vmatprep.subr.bf16.mxu0 0
      %1512 = vmatpush1.bf16.msra.mxu0 0
      %1513 = vmatprep.subr.bf16.mxu0 0
      %1514 = vmatpush1.bf16.msra.mxu0 0
      %1515 = vmatprep.mubr.bf16.mxu0 0
      %1516 = vmatmul.mubr.bf16.gmra.mrb[0].mxu0 %v1430
      %v1517 = vpop.f32.mrb[0].mxu0
      %v1518 = vadd.f32 0.0, %v1517
      %v1519 = vpop.f32.mrb[0].mxu0
      %v1520 = vpop.f32.mrb[0].mxu0
      %v1521 = vadd.f32 0.0, %v1520
      %v1522 = vpop.f32.mrb[0].mxu0
      %1523 = vmatprep.mubr.bf16.mxu0 0
      %1524 = vmatmul.mubr.bf16.gmra.mrb[0].mxu0 %v1433
      %v1525 = vpop.f32.mrb[0].mxu0
      %v1526 = vadd.f32 0.0, %v1525
      %v1527 = vpop.f32.mrb[0].mxu0
      %v1528 = vpop.f32.mrb[0].mxu0
      %v1529 = vadd.f32 0.0, %v1528
      %v1530 = vpop.f32.mrb[0].mxu0
      %1531 = vmatprep.mubr.bf16.mxu0 0
      %1532 = vmatmul.mubr.bf16.gmra.mrb[0].mxu0 %v1436
      %v1533 = vpop.f32.mrb[0].mxu0
      %v1534 = vadd.f32 0.0, %v1533
      %v1535 = vpop.f32.mrb[0].mxu0
      %v1536 = vpop.f32.mrb[0].mxu0
      %v1537 = vadd.f32 0.0, %v1536
      %v1538 = vpop.f32.mrb[0].mxu0
      %1539 = vmatprep.mubr.bf16.mxu0 0
      %1540 = vmatmul.mubr.bf16.gmra.mrb[0].mxu0 %v1439
      %v1541 = vpop.f32.mrb[0].mxu0
      %v1542 = vadd.f32 0.0, %v1541
      %v1543 = vpop.f32.mrb[0].mxu0
      %v1544 = vpop.f32.mrb[0].mxu0
      %v1545 = vadd.f32 0.0, %v1544
      %v1546 = vpop.f32.mrb[0].mxu0
      %1547 = vmatprep.mubr.bf16.mxu0 0
      %1548 = vmatmul.mubr.bf16.gmra.mrb[0].mxu0 %v1442
      %v1549 = vpop.f32.mrb[0].mxu0
      %v1550 = vadd.f32 0.0, %v1549
      %v1551 = vpop.f32.mrb[0].mxu0
      %v1552 = vpop.f32.mrb[0].mxu0
      %v1553 = vadd.f32 0.0, %v1552
      %v1554 = vpop.f32.mrb[0].mxu0
      %1555 = vmatprep.mubr.bf16.mxu0 0
      %1556 = vmatmul.mubr.bf16.gmra.mrb[0].mxu0 %v1445
      %v1557 = vpop.f32.mrb[0].mxu0
      %v1558 = vadd.f32 0.0, %v1557
      %v1559 = vpop.f32.mrb[0].mxu0
      %v1560 = vpop.f32.mrb[0].mxu0
      %v1561 = vadd.f32 0.0, %v1560
      %v1562 = vpop.f32.mrb[0].mxu0
      %1563 = vmatprep.mubr.bf16.mxu0 0
      %1564 = vmatmul.mubr.bf16.gmra.mrb[0].mxu0 %v1448
      %v1565 = vpop.f32.mrb[0].mxu0
      %v1566 = vadd.f32 0.0, %v1565
      %v1567 = vpop.f32.mrb[0].mxu0
      %v1568 = vpop.f32.mrb[0].mxu0
      %v1569 = vadd.f32 0.0, %v1568
      %v1570 = vpop.f32.mrb[0].mxu0
      %1571 = vmatprep.mubr.bf16.mxu0 0
      %1572 = vmatmul.mubr.bf16.gmra.mrb[0].mxu0 %v1451
      %v1573 = vpop.f32.mrb[0].mxu0
      %v1574 = vadd.f32 0.0, %v1573
      %v1575 = vpop.f32.mrb[0].mxu0
      %v1576 = vpop.f32.mrb[0].mxu0
      %v1577 = vadd.f32 0.0, %v1576
      %v1578 = vpop.f32.mrb[0].mxu0
      %1579 = vmatprep.mubr.bf16.mxu0 0
      %1580 = vmatmul.mubr.bf16.gmra.mrb[0].mxu0 %v1454
      %v1581 = vpop.f32.mrb[0].mxu0
      %v1582 = vadd.f32 0.0, %v1581
      %v1583 = vpop.f32.mrb[0].mxu0
      %v1584 = vpop.f32.mrb[0].mxu0
      %v1585 = vadd.f32 0.0, %v1584
      %v1586 = vpop.f32.mrb[0].mxu0
      %1587 = vmatprep.mubr.bf16.mxu0 0
      %1588 = vmatmul.mubr.bf16.gmra.mrb[0].mxu0 %v1457
      %v1589 = vpop.f32.mrb[0].mxu0
      %v1590 = vadd.f32 0.0, %v1589
      %v1591 = vpop.f32.mrb[0].mxu0
      %v1592 = vpop.f32.mrb[0].mxu0
      %v1593 = vadd.f32 0.0, %v1592
      %v1594 = vpop.f32.mrb[0].mxu0
      %1595 = vmatprep.mubr.bf16.mxu0 0
      %1596 = vmatmul.mubr.bf16.gmra.mrb[0].mxu0 %v1460
      %v1597 = vpop.f32.mrb[0].mxu0
      %v1598 = vadd.f32 0.0, %v1597
      %v1599 = vpop.f32.mrb[0].mxu0
      %v1600 = vpop.f32.mrb[0].mxu0
      %v1601 = vadd.f32 0.0, %v1600
      %v1602 = vpop.f32.mrb[0].mxu0
      %1603 = vmatprep.mubr.bf16.mxu0 0
      %1604 = vmatmul.mubr.bf16.gmra.mrb[0].mxu0 %v1463
      %v1605 = vpop.f32.mrb[0].mxu0
      %v1606 = vadd.f32 0.0, %v1605
      %v1607 = vpop.f32.mrb[0].mxu0
      %v1608 = vpop.f32.mrb[0].mxu0
      %v1609 = vadd.f32 0.0, %v1608
      %v1610 = vpop.f32.mrb[0].mxu0
      %1611 = vmatprep.mubr.bf16.mxu0 0
      %1612 = vmatmul.mubr.bf16.gmra.mrb[0].mxu0 %v1466
      %v1613 = vpop.f32.mrb[0].mxu0
      %v1614 = vadd.f32 0.0, %v1613
      %v1615 = vpop.f32.mrb[0].mxu0
      %v1616 = vpop.f32.mrb[0].mxu0
      %v1617 = vadd.f32 0.0, %v1616
      %v1618 = vpop.f32.mrb[0].mxu0
      %1619 = vmatprep.mubr.bf16.mxu0 0
      %1620 = vmatmul.mubr.bf16.gmra.mrb[0].mxu0 %v1469
      %v1621 = vpop.f32.mrb[0].mxu0
      %v1622 = vadd.f32 0.0, %v1621
      %v1623 = vpop.f32.mrb[0].mxu0
      %v1624 = vpop.f32.mrb[0].mxu0
      %v1625 = vadd.f32 0.0, %v1624
      %v1626 = vpop.f32.mrb[0].mxu0
      %1627 = vmatprep.mubr.bf16.mxu0 0
      %1628 = vmatmul.mubr.bf16.gmra.mrb[0].mxu0 %v1472
      %v1629 = vpop.f32.mrb[0].mxu0
      %v1630 = vadd.f32 0.0, %v1629
      %v1631 = vpop.f32.mrb[0].mxu0
      %v1632 = vpop.f32.mrb[0].mxu0
      %v1633 = vadd.f32 0.0, %v1632
      %v1634 = vpop.f32.mrb[0].mxu0
      %1635 = vmatprep.mubr.bf16.mxu0 0
      %1636 = vmatmul.mubr.bf16.gmra.mrb[0].mxu0 %v1475
      %v1637 = vpop.f32.mrb[0].mxu0
      %v1638 = vadd.f32 0.0, %v1637
      %v1639 = vpop.f32.mrb[0].mxu0
      %v1640 = vpop.f32.mrb[0].mxu0
      %v1641 = vadd.f32 0.0, %v1640
      %v1642 = vpop.f32.mrb[0].mxu0
      %1643 = vmatprep.mubr.bf16.mxu0 0
      %1644 = vmatmul.mubr.bf16.gmra.mrb[0].mxu0 %v1478
      %v1645 = vpop.f32.mrb[0].mxu0
      %v1646 = vadd.f32 0.0, %v1645
      %v1647 = vpop.f32.mrb[0].mxu0
      %v1648 = vpop.f32.mrb[0].mxu0
      %v1649 = vadd.f32 0.0, %v1648
      %v1650 = vpop.f32.mrb[0].mxu0
      %1651 = vdwg.mxu0
      %v1652 = vadd.f32 %v1339, %v1518
      %v1653 = vadd.f32 %v1340, %v1521
      %v1654 = vadd.f32 %v1341, %v1526
      %v1655 = vadd.f32 %v1342, %v1529
      %v1656 = vadd.f32 %v1343, %v1534
      %v1657 = vadd.f32 %v1344, %v1537
      %v1658 = vadd.f32 %v1345, %v1542
      %v1659 = vadd.f32 %v1346, %v1545
      %v1660 = vadd.f32 %v1347, %v1550
      %v1661 = vadd.f32 %v1348, %v1553
      %v1662 = vadd.f32 %v1349, %v1558
      %v1663 = vadd.f32 %v1350, %v1561
      %v1664 = vadd.f32 %v1351, %v1566
      %v1665 = vadd.f32 %v1352, %v1569
      %v1666 = vadd.f32 %v1353, %v1574
      %v1667 = vadd.f32 %v1354, %v1577
      %v1668 = vadd.f32 %v1355, %v1582
      %v1669 = vadd.f32 %v1356, %v1585
      %v1670 = vadd.f32 %v1357, %v1590
      %v1671 = vadd.f32 %v1358, %v1593
      %v1672 = vadd.f32 %v1359, %v1598
      %v1673 = vadd.f32 %v1360, %v1601
      %v1674 = vadd.f32 %v1361, %v1606
      %v1675 = vadd.f32 %v1362, %v1609
      %v1676 = vadd.f32 %v1363, %v1614
      %v1677 = vadd.f32 %v1364, %v1617
      %v1678 = vadd.f32 %v1365, %v1622
      %v1679 = vadd.f32 %v1366, %v1625
      %v1680 = vadd.f32 %v1367, %v1630
      %v1681 = vadd.f32 %v1368, %v1633
      %v1682 = vadd.f32 %v1369, %v1638
      %v1683 = vadd.f32 %v1370, %v1641
      %v1684 = vadd.f32 %v1371, %v1646
      %v1685 = vadd.f32 %v1372, %v1649
      %v1686 = vld [vmem:[%s165 + $0x251] sm:$0xff]
      %v1687 = vld [vmem:[%s165 + $0x259] sm:$0xff]
      %v1688 = vld [vmem:[%s165 + $0x261] sm:$0xff]
      %v1689 = vld [vmem:[%s165 + $0x269] sm:$0xff]
      %v1690 = vld [vmem:[%s165 + $0x271] sm:$0xff]
      %v1691 = vld [vmem:[%s165 + $0x279] sm:$0xff]
      %v1692 = vld [vmem:[%s165 + $0x281] sm:$0xff]
      %v1693 = vld [vmem:[%s165 + $0x289] sm:$0xff]
      %v1694 = vld [vmem:[%s165 + $0x291] sm:$0xff]
      %v1695 = vld [vmem:[%s165 + $0x299] sm:$0xff]
      %v1696 = vld [vmem:[%s165 + $0x2a1] sm:$0xff]
      %v1697 = vld [vmem:[%s165 + $0x2a9] sm:$0xff]
      %v1698 = vld [vmem:[%s165 + $0x2b1] sm:$0xff]
      %v1699 = vld [vmem:[%s165 + $0x2b9] sm:$0xff]
      %v1700 = vld [vmem:[%s165 + $0x2c1] sm:$0xff]
      %v1701 = vld [vmem:[%s165 + $0x2c9] sm:$0xff]
      %v1702 = vld [vmem:[%s165 + $0x2d1] sm:$0xff]
      %v1703 = vld [vmem:[%s165 + $0x2d9] sm:$0xff]
      %v1704 = vld [vmem:[%s165 + $0x2e1] sm:$0xff]
      %v1705 = vld [vmem:[%s165 + $0x2e9] sm:$0xff]
      %v1706 = vld [vmem:[%s165 + $0x2f1] sm:$0xff]
      %v1707 = vld [vmem:[%s165 + $0x2f9] sm:$0xff]
      %v1708 = vld [vmem:[%s165 + $0x301] sm:$0xff]
      %v1709 = vld [vmem:[%s165 + $0x309] sm:$0xff]
      %v1710 = vld [vmem:[%s165 + $0x311] sm:$0xff]
      %v1711 = vld [vmem:[%s165 + $0x319] sm:$0xff]
      %v1712 = vld [vmem:[%s165 + $0x321] sm:$0xff]
      %v1713 = vld [vmem:[%s165 + $0x329] sm:$0xff]
      %v1714 = vld [vmem:[%s165 + $0x331] sm:$0xff]
      %v1715 = vld [vmem:[%s165 + $0x339] sm:$0xff]
      %v1716 = vld [vmem:[%s165 + $0x341] sm:$0xff]
      %v1717 = vld [vmem:[%s165 + $0x349] sm:$0xff]
      %v1718 = vld [vmem:[%s165 + $0x351] sm:$0xff]
      %v1719 = vld [vmem:[%s165 + $0x359] sm:$0xff]
      %v1720 = vpack.c.bf16 %v1687, %v1686
      %v1721 = vpack.c.bf16 %v1689, %v1688
      %v1722 = vpack.c.bf16 %v1691, %v1690
      %v1723 = vpack.c.bf16 %v1693, %v1692
      %v1724 = vpack.c.bf16 %v1695, %v1694
      %v1725 = vpack.c.bf16 %v1697, %v1696
      %v1726 = vpack.c.bf16 %v1699, %v1698
      %v1727 = vpack.c.bf16 %v1701, %v1700
      %v1728 = vpack.c.bf16 %v1703, %v1702
      %v1729 = vpack.c.bf16 %v1705, %v1704
      %v1730 = vpack.c.bf16 %v1707, %v1706
      %v1731 = vpack.c.bf16 %v1709, %v1708
      %v1732 = vpack.c.bf16 %v1711, %v1710
      %v1733 = vpack.c.bf16 %v1713, %v1712
      %v1734 = vpack.c.bf16 %v1715, %v1714
      %v1735 = vpack.c.bf16 %v1717, %v1716
      %v1736 = vpack.c.bf16 %v1719, %v1718
      %v1737 = vld [vmem:[%s1 + $0x4] sm:$0x8]
      %v1738 = vld [vmem:[%s1 + $0x8] sm:$0x1]
      %v1741 = vunpack.c.l.b16 %v1737
      %v1742 = vunpack.c.l.b16 %v1738
      %v1743 = vpack.c.b16 %v1742, %v1741
      %v1745 = vshrl.u32 %v1743, 16
      %v1747 = vrot.slane %v1745, 3
      %v1748 = vshll.u32 %v1743, 16
      %v1750 = vrot.slane %v1748, 4
      %v1751 = vor.u32 %v1747, %v1750
      %v1753 = vsel %vm287, %v1720, 0
      %v1756 = vsel %vm287, %v1721, 0
      %v1759 = vsel %vm287, %v1722, 0
      %v1762 = vsel %vm287, %v1723, 0
      %v1765 = vsel %vm287, %v1724, 0
      %v1768 = vsel %vm287, %v1725, 0
      %v1771 = vsel %vm287, %v1726, 0
      %v1774 = vsel %vm287, %v1727, 0
      %v1777 = vsel %vm287, %v1728, 0
      %v1780 = vsel %vm287, %v1729, 0
      %v1783 = vsel %vm287, %v1730, 0
      %v1786 = vsel %vm287, %v1731, 0
      %v1789 = vsel %vm287, %v1732, 0
      %v1792 = vsel %vm287, %v1733, 0
      %v1795 = vsel %vm287, %v1734, 0
      %v1798 = vsel %vm287, %v1735, 0
      %v1801 = vsel %vm287, %v1736, 0
      %v1804 = vand.u32 %v1751, %v342
      %1806 = vmatprep.subr.bf16.mxu0 0
      %1807 = vmatpush1.bf16.msra.mxu0 %v1804
      %1808 = vmatprep.subr.bf16.mxu0 0
      %1809 = vmatpush1.bf16.msra.mxu0 0
      %1810 = vmatprep.subr.bf16.mxu0 0
      %1811 = vmatpush1.bf16.msra.mxu0 0
      %1812 = vmatprep.subr.bf16.mxu0 0
      %1813 = vmatpush1.bf16.msra.mxu0 0
      %1814 = vmatprep.subr.bf16.mxu0 0
      %1815 = vmatpush1.bf16.msra.mxu0 0
      %1816 = vmatprep.subr.bf16.mxu0 0
      %1817 = vmatpush1.bf16.msra.mxu0 0
      %1818 = vmatprep.subr.bf16.mxu0 0
      %1819 = vmatpush1.bf16.msra.mxu0 0
      %1820 = vmatprep.subr.bf16.mxu0 0
      %1821 = vmatpush1.bf16.msra.mxu0 0
      %1822 = vmatprep.subr.bf16.mxu0 0
      %1823 = vmatpush1.bf16.msra.mxu0 0
      %1824 = vmatprep.subr.bf16.mxu0 0
      %1825 = vmatpush1.bf16.msra.mxu0 0
      %1826 = vmatprep.subr.bf16.mxu0 0
      %1827 = vmatpush1.bf16.msra.mxu0 0
      %1828 = vmatprep.subr.bf16.mxu0 0
      %1829 = vmatpush1.bf16.msra.mxu0 0
      %1830 = vmatprep.subr.bf16.mxu0 0
      %1831 = vmatpush1.bf16.msra.mxu0 0
      %1832 = vmatprep.subr.bf16.mxu0 0
      %1833 = vmatpush1.bf16.msra.mxu0 0
      %1834 = vmatprep.subr.bf16.mxu0 0
      %1835 = vmatpush1.bf16.msra.mxu0 0
      %1836 = vmatprep.subr.bf16.mxu0 0
      %1837 = vmatpush1.bf16.msra.mxu0 0
      %1838 = vmatprep.mubr.bf16.mxu0 0
      %1839 = vmatmul.mubr.bf16.gmra.mrb[0].mxu0 %v1753
      %v1840 = vpop.f32.mrb[0].mxu0
      %v1841 = vadd.f32 0.0, %v1840
      %v1842 = vpop.f32.mrb[0].mxu0
      %v1843 = vpop.f32.mrb[0].mxu0
      %v1844 = vadd.f32 0.0, %v1843
      %v1845 = vpop.f32.mrb[0].mxu0
      %1846 = vmatprep.mubr.bf16.mxu0 0
      %1847 = vmatmul.mubr.bf16.gmra.mrb[0].mxu0 %v1756
      %v1848 = vpop.f32.mrb[0].mxu0
      %v1849 = vadd.f32 0.0, %v1848
      %v1850 = vpop.f32.mrb[0].mxu0
      %v1851 = vpop.f32.mrb[0].mxu0
      %v1852 = vadd.f32 0.0, %v1851
      %v1853 = vpop.f32.mrb[0].mxu0
      %1854 = vmatprep.mubr.bf16.mxu0 0
      %1855 = vmatmul.mubr.bf16.gmra.mrb[0].mxu0 %v1759
      %v1856 = vpop.f32.mrb[0].mxu0
      %v1857 = vadd.f32 0.0, %v1856
      %v1858 = vpop.f32.mrb[0].mxu0
      %v1859 = vpop.f32.mrb[0].mxu0
      %v1860 = vadd.f32 0.0, %v1859
      %v1861 = vpop.f32.mrb[0].mxu0
      %1862 = vmatprep.mubr.bf16.mxu0 0
      %1863 = vmatmul.mubr.bf16.gmra.mrb[0].mxu0 %v1762
      %v1864 = vpop.f32.mrb[0].mxu0
      %v1865 = vadd.f32 0.0, %v1864
      %v1866 = vpop.f32.mrb[0].mxu0
      %v1867 = vpop.f32.mrb[0].mxu0
      %v1868 = vadd.f32 0.0, %v1867
      %v1869 = vpop.f32.mrb[0].mxu0
      %1870 = vmatprep.mubr.bf16.mxu0 0
      %1871 = vmatmul.mubr.bf16.gmra.mrb[0].mxu0 %v1765
      %v1872 = vpop.f32.mrb[0].mxu0
      %v1873 = vadd.f32 0.0, %v1872
      %v1874 = vpop.f32.mrb[0].mxu0
      %v1875 = vpop.f32.mrb[0].mxu0
      %v1876 = vadd.f32 0.0, %v1875
      %v1877 = vpop.f32.mrb[0].mxu0
      %1878 = vmatprep.mubr.bf16.mxu0 0
      %1879 = vmatmul.mubr.bf16.gmra.mrb[0].mxu0 %v1768
      %v1880 = vpop.f32.mrb[0].mxu0
      %v1881 = vadd.f32 0.0, %v1880
      %v1882 = vpop.f32.mrb[0].mxu0
      %v1883 = vpop.f32.mrb[0].mxu0
      %v1884 = vadd.f32 0.0, %v1883
      %v1885 = vpop.f32.mrb[0].mxu0
      %1886 = vmatprep.mubr.bf16.mxu0 0
      %1887 = vmatmul.mubr.bf16.gmra.mrb[0].mxu0 %v1771
      %v1888 = vpop.f32.mrb[0].mxu0
      %v1889 = vadd.f32 0.0, %v1888
      %v1890 = vpop.f32.mrb[0].mxu0
      %v1891 = vpop.f32.mrb[0].mxu0
      %v1892 = vadd.f32 0.0, %v1891
      %v1893 = vpop.f32.mrb[0].mxu0
      %1894 = vmatprep.mubr.bf16.mxu0 0
      %1895 = vmatmul.mubr.bf16.gmra.mrb[0].mxu0 %v1774
      %v1896 = vpop.f32.mrb[0].mxu0
      %v1897 = vadd.f32 0.0, %v1896
      %v1898 = vpop.f32.mrb[0].mxu0
      %v1899 = vpop.f32.mrb[0].mxu0
      %v1900 = vadd.f32 0.0, %v1899
      %v1901 = vpop.f32.mrb[0].mxu0
      %1902 = vmatprep.mubr.bf16.mxu0 0
      %1903 = vmatmul.mubr.bf16.gmra.mrb[0].mxu0 %v1777
      %v1904 = vpop.f32.mrb[0].mxu0
      %v1905 = vadd.f32 0.0, %v1904
      %v1906 = vpop.f32.mrb[0].mxu0
      %v1907 = vpop.f32.mrb[0].mxu0
      %v1908 = vadd.f32 0.0, %v1907
      %v1909 = vpop.f32.mrb[0].mxu0
      %1910 = vmatprep.mubr.bf16.mxu0 0
      %1911 = vmatmul.mubr.bf16.gmra.mrb[0].mxu0 %v1780
      %v1912 = vpop.f32.mrb[0].mxu0
      %v1913 = vadd.f32 0.0, %v1912
      %v1914 = vpop.f32.mrb[0].mxu0
      %v1915 = vpop.f32.mrb[0].mxu0
      %v1916 = vadd.f32 0.0, %v1915
      %v1917 = vpop.f32.mrb[0].mxu0
      %1918 = vmatprep.mubr.bf16.mxu0 0
      %1919 = vmatmul.mubr.bf16.gmra.mrb[0].mxu0 %v1783
      %v1920 = vpop.f32.mrb[0].mxu0
      %v1921 = vadd.f32 0.0, %v1920
      %v1922 = vpop.f32.mrb[0].mxu0
      %v1923 = vpop.f32.mrb[0].mxu0
      %v1924 = vadd.f32 0.0, %v1923
      %v1925 = vpop.f32.mrb[0].mxu0
      %1926 = vmatprep.mubr.bf16.mxu0 0
      %1927 = vmatmul.mubr.bf16.gmra.mrb[0].mxu0 %v1786
      %v1928 = vpop.f32.mrb[0].mxu0
      %v1929 = vadd.f32 0.0, %v1928
      %v1930 = vpop.f32.mrb[0].mxu0
      %v1931 = vpop.f32.mrb[0].mxu0
      %v1932 = vadd.f32 0.0, %v1931
      %v1933 = vpop.f32.mrb[0].mxu0
      %1934 = vmatprep.mubr.bf16.mxu0 0
      %1935 = vmatmul.mubr.bf16.gmra.mrb[0].mxu0 %v1789
      %v1936 = vpop.f32.mrb[0].mxu0
      %v1937 = vadd.f32 0.0, %v1936
      %v1938 = vpop.f32.mrb[0].mxu0
      %v1939 = vpop.f32.mrb[0].mxu0
      %v1940 = vadd.f32 0.0, %v1939
      %v1941 = vpop.f32.mrb[0].mxu0
      %1942 = vmatprep.mubr.bf16.mxu0 0
      %1943 = vmatmul.mubr.bf16.gmra.mrb[0].mxu0 %v1792
      %v1944 = vpop.f32.mrb[0].mxu0
      %v1945 = vadd.f32 0.0, %v1944
      %v1946 = vpop.f32.mrb[0].mxu0
      %v1947 = vpop.f32.mrb[0].mxu0
      %v1948 = vadd.f32 0.0, %v1947
      %v1949 = vpop.f32.mrb[0].mxu0
      %1950 = vmatprep.mubr.bf16.mxu0 0
      %1951 = vmatmul.mubr.bf16.gmra.mrb[0].mxu0 %v1795
      %v1952 = vpop.f32.mrb[0].mxu0
      %v1953 = vadd.f32 0.0, %v1952
      %v1954 = vpop.f32.mrb[0].mxu0
      %v1955 = vpop.f32.mrb[0].mxu0
      %v1956 = vadd.f32 0.0, %v1955
      %v1957 = vpop.f32.mrb[0].mxu0
      %1958 = vmatprep.mubr.bf16.mxu0 0
      %1959 = vmatmul.mubr.bf16.gmra.mrb[0].mxu0 %v1798
      %v1960 = vpop.f32.mrb[0].mxu0
      %v1961 = vadd.f32 0.0, %v1960
      %v1962 = vpop.f32.mrb[0].mxu0
      %v1963 = vpop.f32.mrb[0].mxu0
      %v1964 = vadd.f32 0.0, %v1963
      %v1965 = vpop.f32.mrb[0].mxu0
      %1966 = vmatprep.mubr.bf16.mxu0 0
      %1967 = vmatmul.mubr.bf16.gmra.mrb[0].mxu0 %v1801
      %v1968 = vpop.f32.mrb[0].mxu0
      %v1969 = vadd.f32 0.0, %v1968
      %v1970 = vpop.f32.mrb[0].mxu0
      %v1971 = vpop.f32.mrb[0].mxu0
      %v1972 = vadd.f32 0.0, %v1971
      %v1973 = vpop.f32.mrb[0].mxu0
      %1974 = vdwg.mxu0
      %v1975 = vadd.f32 %v1652, %v1841
      %v1976 = vadd.f32 %v1653, %v1844
      %v1977 = vadd.f32 %v1654, %v1849
      %v1978 = vadd.f32 %v1655, %v1852
      %v1979 = vadd.f32 %v1656, %v1857
      %v1980 = vadd.f32 %v1657, %v1860
      %v1981 = vadd.f32 %v1658, %v1865
      %v1982 = vadd.f32 %v1659, %v1868
      %v1983 = vadd.f32 %v1660, %v1873
      %v1984 = vadd.f32 %v1661, %v1876
      %v1985 = vadd.f32 %v1662, %v1881
      %v1986 = vadd.f32 %v1663, %v1884
      %v1987 = vadd.f32 %v1664, %v1889
      %v1988 = vadd.f32 %v1665, %v1892
      %v1989 = vadd.f32 %v1666, %v1897
      %v1990 = vadd.f32 %v1667, %v1900
      %v1991 = vadd.f32 %v1668, %v1905
      %v1992 = vadd.f32 %v1669, %v1908
      %v1993 = vadd.f32 %v1670, %v1913
      %v1994 = vadd.f32 %v1671, %v1916
      %v1995 = vadd.f32 %v1672, %v1921
      %v1996 = vadd.f32 %v1673, %v1924
      %v1997 = vadd.f32 %v1674, %v1929
      %v1998 = vadd.f32 %v1675, %v1932
      %v1999 = vadd.f32 %v1676, %v1937
      %v2000 = vadd.f32 %v1677, %v1940
      %v2001 = vadd.f32 %v1678, %v1945
      %v2002 = vadd.f32 %v1679, %v1948
      %v2003 = vadd.f32 %v1680, %v1953
      %v2004 = vadd.f32 %v1681, %v1956
      %v2005 = vadd.f32 %v1682, %v1961
      %v2006 = vadd.f32 %v1683, %v1964
      %v2007 = vadd.f32 %v1684, %v1969
      %v2008 = vadd.f32 %v1685, %v1972
      %v2009 = vld [vmem:[%s165 + $0x11] sm:$0xff]
      %v2010 = vld [vmem:[%s165 + $0x19] sm:$0xff]
      %v2011 = vld [vmem:[%s165 + $0x21] sm:$0xff]
      %v2012 = vld [vmem:[%s165 + $0x29] sm:$0xff]
      %v2013 = vld [vmem:[%s165 + $0x31] sm:$0xff]
      %v2014 = vld [vmem:[%s165 + $0x39] sm:$0xff]
      %v2015 = vld [vmem:[%s165 + $0x41] sm:$0xff]
      %v2016 = vld [vmem:[%s165 + $0x49] sm:$0xff]
      %v2017 = vld [vmem:[%s165 + $0x51] sm:$0xff]
      %v2018 = vld [vmem:[%s165 + $0x59] sm:$0xff]
      %v2019 = vld [vmem:[%s165 + $0x61] sm:$0xff]
      %v2020 = vld [vmem:[%s165 + $0x69] sm:$0xff]
      %v2021 = vld [vmem:[%s165 + $0x71] sm:$0xff]
      %v2022 = vld [vmem:[%s165 + $0x79] sm:$0xff]
      %v2023 = vld [vmem:[%s165 + $0x81] sm:$0xff]
      %v2024 = vld [vmem:[%s165 + $0x89] sm:$0xff]
      %v2025 = vld [vmem:[%s165 + $0x91] sm:$0xff]
      %v2026 = vld [vmem:[%s165 + $0x99] sm:$0xff]
      %v2027 = vld [vmem:[%s165 + $0xa1] sm:$0xff]
      %v2028 = vld [vmem:[%s165 + $0xa9] sm:$0xff]
      %v2029 = vld [vmem:[%s165 + $0xb1] sm:$0xff]
      %v2030 = vld [vmem:[%s165 + $0xb9] sm:$0xff]
      %v2031 = vld [vmem:[%s165 + $0xc1] sm:$0xff]
      %v2032 = vld [vmem:[%s165 + $0xc9] sm:$0xff]
      %v2033 = vld [vmem:[%s165 + $0xd1] sm:$0xff]
      %v2034 = vld [vmem:[%s165 + $0xd9] sm:$0xff]
      %v2035 = vld [vmem:[%s165 + $0xe1] sm:$0xff]
      %v2036 = vld [vmem:[%s165 + $0xe9] sm:$0xff]
      %v2037 = vld [vmem:[%s165 + $0xf1] sm:$0xff]
      %v2038 = vld [vmem:[%s165 + $0xf9] sm:$0xff]
      %v2039 = vld [vmem:[%s165 + $0x101] sm:$0xff]
      %v2040 = vld [vmem:[%s165 + $0x109] sm:$0xff]
      %v2041 = vld [vmem:[%s165 + $0x111] sm:$0xff]
      %v2042 = vld [vmem:[%s165 + $0x119] sm:$0xff]
      %v2043 = vpack.c.bf16 %v2010, %v2009
      %v2044 = vpack.c.bf16 %v2012, %v2011
      %v2045 = vpack.c.bf16 %v2014, %v2013
      %v2046 = vpack.c.bf16 %v2016, %v2015
      %v2047 = vpack.c.bf16 %v2018, %v2017
      %v2048 = vpack.c.bf16 %v2020, %v2019
      %v2049 = vpack.c.bf16 %v2022, %v2021
      %v2050 = vpack.c.bf16 %v2024, %v2023
      %v2051 = vpack.c.bf16 %v2026, %v2025
      %v2052 = vpack.c.bf16 %v2028, %v2027
      %v2053 = vpack.c.bf16 %v2030, %v2029
      %v2054 = vpack.c.bf16 %v2032, %v2031
      %v2055 = vpack.c.bf16 %v2034, %v2033
      %v2056 = vpack.c.bf16 %v2036, %v2035
      %v2057 = vpack.c.bf16 %v2038, %v2037
      %v2058 = vpack.c.bf16 %v2040, %v2039
      %v2059 = vpack.c.bf16 %v2042, %v2041
      %v2060 = vld [vmem:[%s1 + $0x8] sm:$0x6]
      %v2062 = vunpack.c.l.b16 %v2060
      %v2063 = vpack.c.b16 %v2062, %v2062
      %v2064 = vrot.slane %v2063, 1
      %v2066 = vsel %vm287, %v2043, 0
      %v2069 = vsel %vm287, %v2044, 0
      %v2072 = vsel %vm287, %v2045, 0
      %v2075 = vsel %vm287, %v2046, 0
      %v2078 = vsel %vm287, %v2047, 0
      %v2081 = vsel %vm287, %v2048, 0
      %v2084 = vsel %vm287, %v2049, 0
      %v2087 = vsel %vm287, %v2050, 0
      %v2090 = vsel %vm287, %v2051, 0
      %v2093 = vsel %vm287, %v2052, 0
      %v2096 = vsel %vm287, %v2053, 0
      %v2099 = vsel %vm287, %v2054, 0
      %v2102 = vsel %vm287, %v2055, 0
      %v2105 = vsel %vm287, %v2056, 0
      %v2108 = vsel %vm287, %v2057, 0
      %v2111 = vsel %vm287, %v2058, 0
      %v2114 = vsel %vm287, %v2059, 0
      %v2117 = vand.u32 %v2064, %v342
      %2119 = vmatprep.subr.bf16.mxu0 0
      %2120 = vmatpush1.bf16.msra.mxu0 %v2117
      %2121 = vmatprep.subr.bf16.mxu0 0
      %2122 = vmatpush1.bf16.msra.mxu0 0
      %2123 = vmatprep.subr.bf16.mxu0 0
      %2124 = vmatpush1.bf16.msra.mxu0 0
      %2125 = vmatprep.subr.bf16.mxu0 0
      %2126 = vmatpush1.bf16.msra.mxu0 0
      %2127 = vmatprep.subr.bf16.mxu0 0
      %2128 = vmatpush1.bf16.msra.mxu0 0
      %2129 = vmatprep.subr.bf16.mxu0 0
      %2130 = vmatpush1.bf16.msra.mxu0 0
      %2131 = vmatprep.subr.bf16.mxu0 0
      %2132 = vmatpush1.bf16.msra.mxu0 0
      %2133 = vmatprep.subr.bf16.mxu0 0
      %2134 = vmatpush1.bf16.msra.mxu0 0
      %2135 = vmatprep.subr.bf16.mxu0 0
      %2136 = vmatpush1.bf16.msra.mxu0 0
      %2137 = vmatprep.subr.bf16.mxu0 0
      %2138 = vmatpush1.bf16.msra.mxu0 0
      %2139 = vmatprep.subr.bf16.mxu0 0
      %2140 = vmatpush1.bf16.msra.mxu0 0
      %2141 = vmatprep.subr.bf16.mxu0 0
      %2142 = vmatpush1.bf16.msra.mxu0 0
      %2143 = vmatprep.subr.bf16.mxu0 0
      %2144 = vmatpush1.bf16.msra.mxu0 0
      %2145 = vmatprep.subr.bf16.mxu0 0
      %2146 = vmatpush1.bf16.msra.mxu0 0
      %2147 = vmatprep.subr.bf16.mxu0 0
      %2148 = vmatpush1.bf16.msra.mxu0 0
      %2149 = vmatprep.subr.bf16.mxu0 0
      %2150 = vmatpush1.bf16.msra.mxu0 0
      %2151 = vmatprep.mubr.bf16.mxu0 0
      %2152 = vmatmul.mubr.bf16.gmra.mrb[0].mxu0 %v2066
      %v2153 = vpop.f32.mrb[0].mxu0
      %v2154 = vadd.f32 0.0, %v2153
      %v2155 = vpop.f32.mrb[0].mxu0
      %v2156 = vpop.f32.mrb[0].mxu0
      %v2157 = vadd.f32 0.0, %v2156
      %v2158 = vpop.f32.mrb[0].mxu0
      %2159 = vmatprep.mubr.bf16.mxu0 0
      %2160 = vmatmul.mubr.bf16.gmra.mrb[0].mxu0 %v2069
      %v2161 = vpop.f32.mrb[0].mxu0
      %v2162 = vadd.f32 0.0, %v2161
      %v2163 = vpop.f32.mrb[0].mxu0
      %v2164 = vpop.f32.mrb[0].mxu0
      %v2165 = vadd.f32 0.0, %v2164
      %v2166 = vpop.f32.mrb[0].mxu0
      %2167 = vmatprep.mubr.bf16.mxu0 0
      %2168 = vmatmul.mubr.bf16.gmra.mrb[0].mxu0 %v2072
      %v2169 = vpop.f32.mrb[0].mxu0
      %v2170 = vadd.f32 0.0, %v2169
      %v2171 = vpop.f32.mrb[0].mxu0
      %v2172 = vpop.f32.mrb[0].mxu0
      %v2173 = vadd.f32 0.0, %v2172
      %v2174 = vpop.f32.mrb[0].mxu0
      %2175 = vmatprep.mubr.bf16.mxu0 0
      %2176 = vmatmul.mubr.bf16.gmra.mrb[0].mxu0 %v2075
      %v2177 = vpop.f32.mrb[0].mxu0
      %v2178 = vadd.f32 0.0, %v2177
      %v2179 = vpop.f32.mrb[0].mxu0
      %v2180 = vpop.f32.mrb[0].mxu0
      %v2181 = vadd.f32 0.0, %v2180
      %v2182 = vpop.f32.mrb[0].mxu0
      %2183 = vmatprep.mubr.bf16.mxu0 0
      %2184 = vmatmul.mubr.bf16.gmra.mrb[0].mxu0 %v2078
      %v2185 = vpop.f32.mrb[0].mxu0
      %v2186 = vadd.f32 0.0, %v2185
      %v2187 = vpop.f32.mrb[0].mxu0
      %v2188 = vpop.f32.mrb[0].mxu0
      %v2189 = vadd.f32 0.0, %v2188
      %v2190 = vpop.f32.mrb[0].mxu0
      %2191 = vmatprep.mubr.bf16.mxu0 0
      %2192 = vmatmul.mubr.bf16.gmra.mrb[0].mxu0 %v2081
      %v2193 = vpop.f32.mrb[0].mxu0
      %v2194 = vadd.f32 0.0, %v2193
      %v2195 = vpop.f32.mrb[0].mxu0
      %v2196 = vpop.f32.mrb[0].mxu0
      %v2197 = vadd.f32 0.0, %v2196
      %v2198 = vpop.f32.mrb[0].mxu0
      %2199 = vmatprep.mubr.bf16.mxu0 0
      %2200 = vmatmul.mubr.bf16.gmra.mrb[0].mxu0 %v2084
      %v2201 = vpop.f32.mrb[0].mxu0
      %v2202 = vadd.f32 0.0, %v2201
      %v2203 = vpop.f32.mrb[0].mxu0
      %v2204 = vpop.f32.mrb[0].mxu0
      %v2205 = vadd.f32 0.0, %v2204
      %v2206 = vpop.f32.mrb[0].mxu0
      %2207 = vmatprep.mubr.bf16.mxu0 0
      %2208 = vmatmul.mubr.bf16.gmra.mrb[0].mxu0 %v2087
      %v2209 = vpop.f32.mrb[0].mxu0
      %v2210 = vadd.f32 0.0, %v2209
      %v2211 = vpop.f32.mrb[0].mxu0
      %v2212 = vpop.f32.mrb[0].mxu0
      %v2213 = vadd.f32 0.0, %v2212
      %v2214 = vpop.f32.mrb[0].mxu0
      %2215 = vmatprep.mubr.bf16.mxu0 0
      %2216 = vmatmul.mubr.bf16.gmra.mrb[0].mxu0 %v2090
      %v2217 = vpop.f32.mrb[0].mxu0
      %v2218 = vadd.f32 0.0, %v2217
      %v2219 = vpop.f32.mrb[0].mxu0
      %v2220 = vpop.f32.mrb[0].mxu0
      %v2221 = vadd.f32 0.0, %v2220
      %v2222 = vpop.f32.mrb[0].mxu0
      %2223 = vmatprep.mubr.bf16.mxu0 0
      %2224 = vmatmul.mubr.bf16.gmra.mrb[0].mxu0 %v2093
      %v2225 = vpop.f32.mrb[0].mxu0
      %v2226 = vadd.f32 0.0, %v2225
      %v2227 = vpop.f32.mrb[0].mxu0
      %v2228 = vpop.f32.mrb[0].mxu0
      %v2229 = vadd.f32 0.0, %v2228
      %v2230 = vpop.f32.mrb[0].mxu0
      %2231 = vmatprep.mubr.bf16.mxu0 0
      %2232 = vmatmul.mubr.bf16.gmra.mrb[0].mxu0 %v2096
      %v2233 = vpop.f32.mrb[0].mxu0
      %v2234 = vadd.f32 0.0, %v2233
      %v2235 = vpop.f32.mrb[0].mxu0
      %v2236 = vpop.f32.mrb[0].mxu0
      %v2237 = vadd.f32 0.0, %v2236
      %v2238 = vpop.f32.mrb[0].mxu0
      %2239 = vmatprep.mubr.bf16.mxu0 0
      %2240 = vmatmul.mubr.bf16.gmra.mrb[0].mxu0 %v2099
      %v2241 = vpop.f32.mrb[0].mxu0
      %v2242 = vadd.f32 0.0, %v2241
      %v2243 = vpop.f32.mrb[0].mxu0
      %v2244 = vpop.f32.mrb[0].mxu0
      %v2245 = vadd.f32 0.0, %v2244
      %v2246 = vpop.f32.mrb[0].mxu0
      %2247 = vmatprep.mubr.bf16.mxu0 0
      %2248 = vmatmul.mubr.bf16.gmra.mrb[0].mxu0 %v2102
      %v2249 = vpop.f32.mrb[0].mxu0
      %v2250 = vadd.f32 0.0, %v2249
      %v2251 = vpop.f32.mrb[0].mxu0
      %v2252 = vpop.f32.mrb[0].mxu0
      %v2253 = vadd.f32 0.0, %v2252
      %v2254 = vpop.f32.mrb[0].mxu0
      %2255 = vmatprep.mubr.bf16.mxu0 0
      %2256 = vmatmul.mubr.bf16.gmra.mrb[0].mxu0 %v2105
      %v2257 = vpop.f32.mrb[0].mxu0
      %v2258 = vadd.f32 0.0, %v2257
      %v2259 = vpop.f32.mrb[0].mxu0
      %v2260 = vpop.f32.mrb[0].mxu0
      %v2261 = vadd.f32 0.0, %v2260
      %v2262 = vpop.f32.mrb[0].mxu0
      %2263 = vmatprep.mubr.bf16.mxu0 0
      %2264 = vmatmul.mubr.bf16.gmra.mrb[0].mxu0 %v2108
      %v2265 = vpop.f32.mrb[0].mxu0
      %v2266 = vadd.f32 0.0, %v2265
      %v2267 = vpop.f32.mrb[0].mxu0
      %v2268 = vpop.f32.mrb[0].mxu0
      %v2269 = vadd.f32 0.0, %v2268
      %v2270 = vpop.f32.mrb[0].mxu0
      %2271 = vmatprep.mubr.bf16.mxu0 0
      %2272 = vmatmul.mubr.bf16.gmra.mrb[0].mxu0 %v2111
      %v2273 = vpop.f32.mrb[0].mxu0
      %v2274 = vadd.f32 0.0, %v2273
      %v2275 = vpop.f32.mrb[0].mxu0
      %v2276 = vpop.f32.mrb[0].mxu0
      %v2277 = vadd.f32 0.0, %v2276
      %v2278 = vpop.f32.mrb[0].mxu0
      %2279 = vmatprep.mubr.bf16.mxu0 0
      %2280 = vmatmul.mubr.bf16.gmra.mrb[0].mxu0 %v2114
      %v2281 = vpop.f32.mrb[0].mxu0
      %v2282 = vadd.f32 0.0, %v2281
      %v2283 = vpop.f32.mrb[0].mxu0
      %v2284 = vpop.f32.mrb[0].mxu0
      %v2285 = vadd.f32 0.0, %v2284
      %v2286 = vpop.f32.mrb[0].mxu0
      %2287 = vdwg.mxu0
      %v2288 = vadd.f32 %v1975, %v2154
      %v2289 = vadd.f32 %v1976, %v2157
      %v2290 = vadd.f32 %v1977, %v2162
      %v2291 = vadd.f32 %v1978, %v2165
      %v2292 = vadd.f32 %v1979, %v2170
      %v2293 = vadd.f32 %v1980, %v2173
      %v2294 = vadd.f32 %v1981, %v2178
      %v2295 = vadd.f32 %v1982, %v2181
      %v2296 = vadd.f32 %v1983, %v2186
      %v2297 = vadd.f32 %v1984, %v2189
      %v2298 = vadd.f32 %v1985, %v2194
      %v2299 = vadd.f32 %v1986, %v2197
      %v2300 = vadd.f32 %v1987, %v2202
      %v2301 = vadd.f32 %v1988, %v2205
      %v2302 = vadd.f32 %v1989, %v2210
      %v2303 = vadd.f32 %v1990, %v2213
      %v2304 = vadd.f32 %v1991, %v2218
      %v2305 = vadd.f32 %v1992, %v2221
      %v2306 = vadd.f32 %v1993, %v2226
      %v2307 = vadd.f32 %v1994, %v2229
      %v2308 = vadd.f32 %v1995, %v2234
      %v2309 = vadd.f32 %v1996, %v2237
      %v2310 = vadd.f32 %v1997, %v2242
      %v2311 = vadd.f32 %v1998, %v2245
      %v2312 = vadd.f32 %v1999, %v2250
      %v2313 = vadd.f32 %v2000, %v2253
      %v2314 = vadd.f32 %v2001, %v2258
      %v2315 = vadd.f32 %v2002, %v2261
      %v2316 = vadd.f32 %v2003, %v2266
      %v2317 = vadd.f32 %v2004, %v2269
      %v2318 = vadd.f32 %v2005, %v2274
      %v2319 = vadd.f32 %v2006, %v2277
      %v2320 = vadd.f32 %v2007, %v2282
      %v2321 = vadd.f32 %v2008, %v2285
      %v2322 = vld [vmem:[%s165 + $0x139] sm:$0xff]
      %v2323 = vld [vmem:[%s165 + $0x141] sm:$0xff]
      %v2324 = vld [vmem:[%s165 + $0x149] sm:$0xff]
      %v2325 = vld [vmem:[%s165 + $0x151] sm:$0xff]
      %v2326 = vld [vmem:[%s165 + $0x159] sm:$0xff]
      %v2327 = vld [vmem:[%s165 + $0x161] sm:$0xff]
      %v2328 = vld [vmem:[%s165 + $0x169] sm:$0xff]
      %v2329 = vld [vmem:[%s165 + $0x171] sm:$0xff]
      %v2330 = vld [vmem:[%s165 + $0x179] sm:$0xff]
      %v2331 = vld [vmem:[%s165 + $0x181] sm:$0xff]
      %v2332 = vld [vmem:[%s165 + $0x189] sm:$0xff]
      %v2333 = vld [vmem:[%s165 + $0x191] sm:$0xff]
      %v2334 = vld [vmem:[%s165 + $0x199] sm:$0xff]
      %v2335 = vld [vmem:[%s165 + $0x1a1] sm:$0xff]
      %v2336 = vld [vmem:[%s165 + $0x1a9] sm:$0xff]
      %v2337 = vld [vmem:[%s165 + $0x1b1] sm:$0xff]
      %v2338 = vld [vmem:[%s165 + $0x1b9] sm:$0xff]
      %v2339 = vld [vmem:[%s165 + $0x1c1] sm:$0xff]
      %v2340 = vld [vmem:[%s165 + $0x1c9] sm:$0xff]
      %v2341 = vld [vmem:[%s165 + $0x1d1] sm:$0xff]
      %v2342 = vld [vmem:[%s165 + $0x1d9] sm:$0xff]
      %v2343 = vld [vmem:[%s165 + $0x1e1] sm:$0xff]
      %v2344 = vld [vmem:[%s165 + $0x1e9] sm:$0xff]
      %v2345 = vld [vmem:[%s165 + $0x1f1] sm:$0xff]
      %v2346 = vld [vmem:[%s165 + $0x1f9] sm:$0xff]
      %v2347 = vld [vmem:[%s165 + $0x201] sm:$0xff]
      %v2348 = vld [vmem:[%s165 + $0x209] sm:$0xff]
      %v2349 = vld [vmem:[%s165 + $0x211] sm:$0xff]
      %v2350 = vld [vmem:[%s165 + $0x219] sm:$0xff]
      %v2351 = vld [vmem:[%s165 + $0x221] sm:$0xff]
      %v2352 = vld [vmem:[%s165 + $0x229] sm:$0xff]
      %v2353 = vld [vmem:[%s165 + $0x231] sm:$0xff]
      %v2354 = vld [vmem:[%s165 + $0x239] sm:$0xff]
      %v2355 = vld [vmem:[%s165 + $0x241] sm:$0xff]
      %v2356 = vpack.c.bf16 %v2323, %v2322
      %v2357 = vpack.c.bf16 %v2325, %v2324
      %v2358 = vpack.c.bf16 %v2327, %v2326
      %v2359 = vpack.c.bf16 %v2329, %v2328
      %v2360 = vpack.c.bf16 %v2331, %v2330
      %v2361 = vpack.c.bf16 %v2333, %v2332
      %v2362 = vpack.c.bf16 %v2335, %v2334
      %v2363 = vpack.c.bf16 %v2337, %v2336
      %v2364 = vpack.c.bf16 %v2339, %v2338
      %v2365 = vpack.c.bf16 %v2341, %v2340
      %v2366 = vpack.c.bf16 %v2343, %v2342
      %v2367 = vpack.c.bf16 %v2345, %v2344
      %v2368 = vpack.c.bf16 %v2347, %v2346
      %v2369 = vpack.c.bf16 %v2349, %v2348
      %v2370 = vpack.c.bf16 %v2351, %v2350
      %v2371 = vpack.c.bf16 %v2353, %v2352
      %v2372 = vpack.c.bf16 %v2355, %v2354
      %v2373 = vld [vmem:[%s1 + $0x8] sm:$0xc]
      %v2375 = vunpack.c.l.b16 %v2373
      %v2376 = vpack.c.b16 %v2375, %v2375
      %v2378 = vshrl.u32 %v2376, 16
      %v2380 = vrot.slane %v2378, 2
      %v2381 = vshll.u32 %v2376, 16
      %v2383 = vrot.slane %v2381, 3
      %v2384 = vor.u32 %v2380, %v2383
      %v2386 = vsel %vm287, %v2356, 0
      %v2389 = vsel %vm287, %v2357, 0
      %v2392 = vsel %vm287, %v2358, 0
      %v2395 = vsel %vm287, %v2359, 0
      %v2398 = vsel %vm287, %v2360, 0
      %v2401 = vsel %vm287, %v2361, 0
      %v2404 = vsel %vm287, %v2362, 0
      %v2407 = vsel %vm287, %v2363, 0
      %v2410 = vsel %vm287, %v2364, 0
      %v2413 = vsel %vm287, %v2365, 0
      %v2416 = vsel %vm287, %v2366, 0
      %v2419 = vsel %vm287, %v2367, 0
      %v2422 = vsel %vm287, %v2368, 0
      %v2425 = vsel %vm287, %v2369, 0
      %v2428 = vsel %vm287, %v2370, 0
      %v2431 = vsel %vm287, %v2371, 0
      %v2434 = vsel %vm287, %v2372, 0
      %v2437 = vand.u32 %v2384, %v342
      %2439 = vmatprep.subr.bf16.mxu0 0
      %2440 = vmatpush1.bf16.msra.mxu0 %v2437
      %2441 = vmatprep.subr.bf16.mxu0 0
      %2442 = vmatpush1.bf16.msra.mxu0 0
      %2443 = vmatprep.subr.bf16.mxu0 0
      %2444 = vmatpush1.bf16.msra.mxu0 0
      %2445 = vmatprep.subr.bf16.mxu0 0
      %2446 = vmatpush1.bf16.msra.mxu0 0
      %2447 = vmatprep.subr.bf16.mxu0 0
      %2448 = vmatpush1.bf16.msra.mxu0 0
      %2449 = vmatprep.subr.bf16.mxu0 0
      %2450 = vmatpush1.bf16.msra.mxu0 0
      %2451 = vmatprep.subr.bf16.mxu0 0
      %2452 = vmatpush1.bf16.msra.mxu0 0
      %2453 = vmatprep.subr.bf16.mxu0 0
      %2454 = vmatpush1.bf16.msra.mxu0 0
      %2455 = vmatprep.subr.bf16.mxu0 0
      %2456 = vmatpush1.bf16.msra.mxu0 0
      %2457 = vmatprep.subr.bf16.mxu0 0
      %2458 = vmatpush1.bf16.msra.mxu0 0
      %2459 = vmatprep.subr.bf16.mxu0 0
      %2460 = vmatpush1.bf16.msra.mxu0 0
      %2461 = vmatprep.subr.bf16.mxu0 0
      %2462 = vmatpush1.bf16.msra.mxu0 0
      %2463 = vmatprep.subr.bf16.mxu0 0
      %2464 = vmatpush1.bf16.msra.mxu0 0
      %2465 = vmatprep.subr.bf16.mxu0 0
      %2466 = vmatpush1.bf16.msra.mxu0 0
      %2467 = vmatprep.subr.bf16.mxu0 0
      %2468 = vmatpush1.bf16.msra.mxu0 0
      %2469 = vmatprep.subr.bf16.mxu0 0
      %2470 = vmatpush1.bf16.msra.mxu0 0
      %2471 = vmatprep.mubr.bf16.mxu0 0
      %2472 = vmatmul.mubr.bf16.gmra.mrb[0].mxu0 %v2386
      %v2473 = vpop.f32.mrb[0].mxu0
      %v2474 = vadd.f32 0.0, %v2473
      %v2475 = vpop.f32.mrb[0].mxu0
      %v2476 = vpop.f32.mrb[0].mxu0
      %v2477 = vadd.f32 0.0, %v2476
      %v2478 = vpop.f32.mrb[0].mxu0
      %2479 = vmatprep.mubr.bf16.mxu0 0
      %2480 = vmatmul.mubr.bf16.gmra.mrb[0].mxu0 %v2389
      %v2481 = vpop.f32.mrb[0].mxu0
      %v2482 = vadd.f32 0.0, %v2481
      %v2483 = vpop.f32.mrb[0].mxu0
      %v2484 = vpop.f32.mrb[0].mxu0
      %v2485 = vadd.f32 0.0, %v2484
      %v2486 = vpop.f32.mrb[0].mxu0
      %2487 = vmatprep.mubr.bf16.mxu0 0
      %2488 = vmatmul.mubr.bf16.gmra.mrb[0].mxu0 %v2392
      %v2489 = vpop.f32.mrb[0].mxu0
      %v2490 = vadd.f32 0.0, %v2489
      %v2491 = vpop.f32.mrb[0].mxu0
      %v2492 = vpop.f32.mrb[0].mxu0
      %v2493 = vadd.f32 0.0, %v2492
      %v2494 = vpop.f32.mrb[0].mxu0
      %2495 = vmatprep.mubr.bf16.mxu0 0
      %2496 = vmatmul.mubr.bf16.gmra.mrb[0].mxu0 %v2395
      %v2497 = vpop.f32.mrb[0].mxu0
      %v2498 = vadd.f32 0.0, %v2497
      %v2499 = vpop.f32.mrb[0].mxu0
      %v2500 = vpop.f32.mrb[0].mxu0
      %v2501 = vadd.f32 0.0, %v2500
      %v2502 = vpop.f32.mrb[0].mxu0
      %2503 = vmatprep.mubr.bf16.mxu0 0
      %2504 = vmatmul.mubr.bf16.gmra.mrb[0].mxu0 %v2398
      %v2505 = vpop.f32.mrb[0].mxu0
      %v2506 = vadd.f32 0.0, %v2505
      %v2507 = vpop.f32.mrb[0].mxu0
      %v2508 = vpop.f32.mrb[0].mxu0
      %v2509 = vadd.f32 0.0, %v2508
      %v2510 = vpop.f32.mrb[0].mxu0
      %2511 = vmatprep.mubr.bf16.mxu0 0
      %2512 = vmatmul.mubr.bf16.gmra.mrb[0].mxu0 %v2401
      %v2513 = vpop.f32.mrb[0].mxu0
      %v2514 = vadd.f32 0.0, %v2513
      %v2515 = vpop.f32.mrb[0].mxu0
      %v2516 = vpop.f32.mrb[0].mxu0
      %v2517 = vadd.f32 0.0, %v2516
      %v2518 = vpop.f32.mrb[0].mxu0
      %2519 = vmatprep.mubr.bf16.mxu0 0
      %2520 = vmatmul.mubr.bf16.gmra.mrb[0].mxu0 %v2404
      %v2521 = vpop.f32.mrb[0].mxu0
      %v2522 = vadd.f32 0.0, %v2521
      %v2523 = vpop.f32.mrb[0].mxu0
      %v2524 = vpop.f32.mrb[0].mxu0
      %v2525 = vadd.f32 0.0, %v2524
      %v2526 = vpop.f32.mrb[0].mxu0
      %2527 = vmatprep.mubr.bf16.mxu0 0
      %2528 = vmatmul.mubr.bf16.gmra.mrb[0].mxu0 %v2407
      %v2529 = vpop.f32.mrb[0].mxu0
      %v2530 = vadd.f32 0.0, %v2529
      %v2531 = vpop.f32.mrb[0].mxu0
      %v2532 = vpop.f32.mrb[0].mxu0
      %v2533 = vadd.f32 0.0, %v2532
      %v2534 = vpop.f32.mrb[0].mxu0
      %2535 = vmatprep.mubr.bf16.mxu0 0
      %2536 = vmatmul.mubr.bf16.gmra.mrb[0].mxu0 %v2410
      %v2537 = vpop.f32.mrb[0].mxu0
      %v2538 = vadd.f32 0.0, %v2537
      %v2539 = vpop.f32.mrb[0].mxu0
      %v2540 = vpop.f32.mrb[0].mxu0
      %v2541 = vadd.f32 0.0, %v2540
      %v2542 = vpop.f32.mrb[0].mxu0
      %2543 = vmatprep.mubr.bf16.mxu0 0
      %2544 = vmatmul.mubr.bf16.gmra.mrb[0].mxu0 %v2413
      %v2545 = vpop.f32.mrb[0].mxu0
      %v2546 = vadd.f32 0.0, %v2545
      %v2547 = vpop.f32.mrb[0].mxu0
      %v2548 = vpop.f32.mrb[0].mxu0
      %v2549 = vadd.f32 0.0, %v2548
      %v2550 = vpop.f32.mrb[0].mxu0
      %2551 = vmatprep.mubr.bf16.mxu0 0
      %2552 = vmatmul.mubr.bf16.gmra.mrb[0].mxu0 %v2416
      %v2553 = vpop.f32.mrb[0].mxu0
      %v2554 = vadd.f32 0.0, %v2553
      %v2555 = vpop.f32.mrb[0].mxu0
      %v2556 = vpop.f32.mrb[0].mxu0
      %v2557 = vadd.f32 0.0, %v2556
      %v2558 = vpop.f32.mrb[0].mxu0
      %2559 = vmatprep.mubr.bf16.mxu0 0
      %2560 = vmatmul.mubr.bf16.gmra.mrb[0].mxu0 %v2419
      %v2561 = vpop.f32.mrb[0].mxu0
      %v2562 = vadd.f32 0.0, %v2561
      %v2563 = vpop.f32.mrb[0].mxu0
      %v2564 = vpop.f32.mrb[0].mxu0
      %v2565 = vadd.f32 0.0, %v2564
      %v2566 = vpop.f32.mrb[0].mxu0
      %2567 = vmatprep.mubr.bf16.mxu0 0
      %2568 = vmatmul.mubr.bf16.gmra.mrb[0].mxu0 %v2422
      %v2569 = vpop.f32.mrb[0].mxu0
      %v2570 = vadd.f32 0.0, %v2569
      %v2571 = vpop.f32.mrb[0].mxu0
      %v2572 = vpop.f32.mrb[0].mxu0
      %v2573 = vadd.f32 0.0, %v2572
      %v2574 = vpop.f32.mrb[0].mxu0
      %2575 = vmatprep.mubr.bf16.mxu0 0
      %2576 = vmatmul.mubr.bf16.gmra.mrb[0].mxu0 %v2425
      %v2577 = vpop.f32.mrb[0].mxu0
      %v2578 = vadd.f32 0.0, %v2577
      %v2579 = vpop.f32.mrb[0].mxu0
      %v2580 = vpop.f32.mrb[0].mxu0
      %v2581 = vadd.f32 0.0, %v2580
      %v2582 = vpop.f32.mrb[0].mxu0
      %2583 = vmatprep.mubr.bf16.mxu0 0
      %2584 = vmatmul.mubr.bf16.gmra.mrb[0].mxu0 %v2428
      %v2585 = vpop.f32.mrb[0].mxu0
      %v2586 = vadd.f32 0.0, %v2585
      %v2587 = vpop.f32.mrb[0].mxu0
      %v2588 = vpop.f32.mrb[0].mxu0
      %v2589 = vadd.f32 0.0, %v2588
      %v2590 = vpop.f32.mrb[0].mxu0
      %2591 = vmatprep.mubr.bf16.mxu0 0
      %2592 = vmatmul.mubr.bf16.gmra.mrb[0].mxu0 %v2431
      %v2593 = vpop.f32.mrb[0].mxu0
      %v2594 = vadd.f32 0.0, %v2593
      %v2595 = vpop.f32.mrb[0].mxu0
      %v2596 = vpop.f32.mrb[0].mxu0
      %v2597 = vadd.f32 0.0, %v2596
      %v2598 = vpop.f32.mrb[0].mxu0
      %2599 = vmatprep.mubr.bf16.mxu0 0
      %2600 = vmatmul.mubr.bf16.gmra.mrb[0].mxu0 %v2434
      %v2601 = vpop.f32.mrb[0].mxu0
      %v2602 = vadd.f32 0.0, %v2601
      %v2603 = vpop.f32.mrb[0].mxu0
      %v2604 = vpop.f32.mrb[0].mxu0
      %v2605 = vadd.f32 0.0, %v2604
      %v2606 = vpop.f32.mrb[0].mxu0
      %2607 = vdwg.mxu0
      %v2608 = vadd.f32 %v2288, %v2474
      %v2609 = vadd.f32 %v2289, %v2477
      %v2610 = vadd.f32 %v2290, %v2482
      %v2611 = vadd.f32 %v2291, %v2485
      %v2612 = vadd.f32 %v2292, %v2490
      %v2613 = vadd.f32 %v2293, %v2493
      %v2614 = vadd.f32 %v2294, %v2498
      %v2615 = vadd.f32 %v2295, %v2501
      %v2616 = vadd.f32 %v2296, %v2506
      %v2617 = vadd.f32 %v2297, %v2509
      %v2618 = vadd.f32 %v2298, %v2514
      %v2619 = vadd.f32 %v2299, %v2517
      %v2620 = vadd.f32 %v2300, %v2522
      %v2621 = vadd.f32 %v2301, %v2525
      %v2622 = vadd.f32 %v2302, %v2530
      %v2623 = vadd.f32 %v2303, %v2533
      %v2624 = vadd.f32 %v2304, %v2538
      %v2625 = vadd.f32 %v2305, %v2541
      %v2626 = vadd.f32 %v2306, %v2546
      %v2627 = vadd.f32 %v2307, %v2549
      %v2628 = vadd.f32 %v2308, %v2554
      %v2629 = vadd.f32 %v2309, %v2557
      %v2630 = vadd.f32 %v2310, %v2562
      %v2631 = vadd.f32 %v2311, %v2565
      %v2632 = vadd.f32 %v2312, %v2570
      %v2633 = vadd.f32 %v2313, %v2573
      %v2634 = vadd.f32 %v2314, %v2578
      %v2635 = vadd.f32 %v2315, %v2581
      %v2636 = vadd.f32 %v2316, %v2586
      %v2637 = vadd.f32 %v2317, %v2589
      %v2638 = vadd.f32 %v2318, %v2594
      %v2639 = vadd.f32 %v2319, %v2597
      %v2640 = vadd.f32 %v2320, %v2602
      %v2641 = vadd.f32 %v2321, %v2605
      %v2642 = vld [vmem:[%s165 + $0x12] sm:$0xff]
      %v2643 = vld [vmem:[%s165 + $0x1a] sm:$0xff]
      %v2644 = vld [vmem:[%s165 + $0x22] sm:$0xff]
      %v2645 = vld [vmem:[%s165 + $0x2a] sm:$0xff]
      %v2646 = vld [vmem:[%s165 + $0x32] sm:$0xff]
      %v2647 = vld [vmem:[%s165 + $0x3a] sm:$0xff]
      %v2648 = vld [vmem:[%s165 + $0x42] sm:$0xff]
      %v2649 = vld [vmem:[%s165 + $0x4a] sm:$0xff]
      %v2650 = vld [vmem:[%s165 + $0x52] sm:$0xff]
      %v2651 = vld [vmem:[%s165 + $0x5a] sm:$0xff]
      %v2652 = vld [vmem:[%s165 + $0x62] sm:$0xff]
      %v2653 = vld [vmem:[%s165 + $0x6a] sm:$0xff]
      %v2654 = vld [vmem:[%s165 + $0x72] sm:$0xff]
      %v2655 = vld [vmem:[%s165 + $0x7a] sm:$0xff]
      %v2656 = vld [vmem:[%s165 + $0x82] sm:$0xff]
      %v2657 = vld [vmem:[%s165 + $0x8a] sm:$0xff]
      %v2658 = vld [vmem:[%s165 + $0x92] sm:$0xff]
      %v2659 = vld [vmem:[%s165 + $0x9a] sm:$0xff]
      %v2660 = vld [vmem:[%s165 + $0xa2] sm:$0xff]
      %v2661 = vld [vmem:[%s165 + $0xaa] sm:$0xff]
      %v2662 = vld [vmem:[%s165 + $0xb2] sm:$0xff]
      %v2663 = vld [vmem:[%s165 + $0xba] sm:$0xff]
      %v2664 = vld [vmem:[%s165 + $0xc2] sm:$0xff]
      %v2665 = vld [vmem:[%s165 + $0xca] sm:$0xff]
      %v2666 = vld [vmem:[%s165 + $0xd2] sm:$0xff]
      %v2667 = vld [vmem:[%s165 + $0xda] sm:$0xff]
      %v2668 = vld [vmem:[%s165 + $0xe2] sm:$0xff]
      %v2669 = vld [vmem:[%s165 + $0xea] sm:$0xff]
      %v2670 = vld [vmem:[%s165 + $0xf2] sm:$0xff]
      %v2671 = vld [vmem:[%s165 + $0xfa] sm:$0xff]
      %v2672 = vld [vmem:[%s165 + $0x102] sm:$0xff]
      %v2673 = vld [vmem:[%s165 + $0x10a] sm:$0xff]
      %v2674 = vld [vmem:[%s165 + $0x112] sm:$0xff]
      %v2675 = vld [vmem:[%s165 + $0x11a] sm:$0xff]
      %v2676 = vpack.c.bf16 %v2643, %v2642
      %v2677 = vpack.c.bf16 %v2645, %v2644
      %v2678 = vpack.c.bf16 %v2647, %v2646
      %v2679 = vpack.c.bf16 %v2649, %v2648
      %v2680 = vpack.c.bf16 %v2651, %v2650
      %v2681 = vpack.c.bf16 %v2653, %v2652
      %v2682 = vpack.c.bf16 %v2655, %v2654
      %v2683 = vpack.c.bf16 %v2657, %v2656
      %v2684 = vpack.c.bf16 %v2659, %v2658
      %v2685 = vpack.c.bf16 %v2661, %v2660
      %v2686 = vpack.c.bf16 %v2663, %v2662
      %v2687 = vpack.c.bf16 %v2665, %v2664
      %v2688 = vpack.c.bf16 %v2667, %v2666
      %v2689 = vpack.c.bf16 %v2669, %v2668
      %v2690 = vpack.c.bf16 %v2671, %v2670
      %v2691 = vpack.c.bf16 %v2673, %v2672
      %v2692 = vpack.c.bf16 %v2675, %v2674
      %v2693 = vld [vmem:[%s1 + $0xc] sm:$0x3]
      %v2695 = vsel %vm287, %v2676, 0
      %v2698 = vsel %vm287, %v2677, 0
      %v2701 = vsel %vm287, %v2678, 0
      %v2704 = vsel %vm287, %v2679, 0
      %v2707 = vsel %vm287, %v2680, 0
      %v2710 = vsel %vm287, %v2681, 0
      %v2713 = vsel %vm287, %v2682, 0
      %v2716 = vsel %vm287, %v2683, 0
      %v2719 = vsel %vm287, %v2684, 0
      %v2722 = vsel %vm287, %v2685, 0
      %v2725 = vsel %vm287, %v2686, 0
      %v2728 = vsel %vm287, %v2687, 0
      %v2731 = vsel %vm287, %v2688, 0
      %v2734 = vsel %vm287, %v2689, 0
      %v2737 = vsel %vm287, %v2690, 0
      %v2740 = vsel %vm287, %v2691, 0
      %v2743 = vsel %vm287, %v2692, 0
      %v2746 = vand.u32 %v2693, %v342
      %2748 = vmatprep.subr.bf16.mxu0 0
      %2749 = vmatpush1.bf16.msra.mxu0 %v2746
      %2750 = vmatprep.subr.bf16.mxu0 0
      %2751 = vmatpush1.bf16.msra.mxu0 0
      %2752 = vmatprep.subr.bf16.mxu0 0
      %2753 = vmatpush1.bf16.msra.mxu0 0
      %2754 = vmatprep.subr.bf16.mxu0 0
      %2755 = vmatpush1.bf16.msra.mxu0 0
      %2756 = vmatprep.subr.bf16.mxu0 0
      %2757 = vmatpush1.bf16.msra.mxu0 0
      %2758 = vmatprep.subr.bf16.mxu0 0
      %2759 = vmatpush1.bf16.msra.mxu0 0
      %2760 = vmatprep.subr.bf16.mxu0 0
      %2761 = vmatpush1.bf16.msra.mxu0 0
      %2762 = vmatprep.subr.bf16.mxu0 0
      %2763 = vmatpush1.bf16.msra.mxu0 0
      %2764 = vmatprep.subr.bf16.mxu0 0
      %2765 = vmatpush1.bf16.msra.mxu0 0
      %2766 = vmatprep.subr.bf16.mxu0 0
      %2767 = vmatpush1.bf16.msra.mxu0 0
      %2768 = vmatprep.subr.bf16.mxu0 0
      %2769 = vmatpush1.bf16.msra.mxu0 0
      %2770 = vmatprep.subr.bf16.mxu0 0
      %2771 = vmatpush1.bf16.msra.mxu0 0
      %2772 = vmatprep.subr.bf16.mxu0 0
      %2773 = vmatpush1.bf16.msra.mxu0 0
      %2774 = vmatprep.subr.bf16.mxu0 0
      %2775 = vmatpush1.bf16.msra.mxu0 0
      %2776 = vmatprep.subr.bf16.mxu0 0
      %2777 = vmatpush1.bf16.msra.mxu0 0
      %2778 = vmatprep.subr.bf16.mxu0 0
      %2779 = vmatpush1.bf16.msra.mxu0 0
      %2780 = vmatprep.mubr.bf16.mxu0 0
      %2781 = vmatmul.mubr.bf16.gmra.mrb[0].mxu0 %v2695
      %v2782 = vpop.f32.mrb[0].mxu0
      %v2783 = vadd.f32 0.0, %v2782
      %v2784 = vpop.f32.mrb[0].mxu0
      %v2785 = vpop.f32.mrb[0].mxu0
      %v2786 = vadd.f32 0.0, %v2785
      %v2787 = vpop.f32.mrb[0].mxu0
      %2788 = vmatprep.mubr.bf16.mxu0 0
      %2789 = vmatmul.mubr.bf16.gmra.mrb[0].mxu0 %v2698
      %v2790 = vpop.f32.mrb[0].mxu0
      %v2791 = vadd.f32 0.0, %v2790
      %v2792 = vpop.f32.mrb[0].mxu0
      %v2793 = vpop.f32.mrb[0].mxu0
      %v2794 = vadd.f32 0.0, %v2793
      %v2795 = vpop.f32.mrb[0].mxu0
      %2796 = vmatprep.mubr.bf16.mxu0 0
      %2797 = vmatmul.mubr.bf16.gmra.mrb[0].mxu0 %v2701
      %v2798 = vpop.f32.mrb[0].mxu0
      %v2799 = vadd.f32 0.0, %v2798
      %v2800 = vpop.f32.mrb[0].mxu0
      %v2801 = vpop.f32.mrb[0].mxu0
      %v2802 = vadd.f32 0.0, %v2801
      %v2803 = vpop.f32.mrb[0].mxu0
      %2804 = vmatprep.mubr.bf16.mxu0 0
      %2805 = vmatmul.mubr.bf16.gmra.mrb[0].mxu0 %v2704
      %v2806 = vpop.f32.mrb[0].mxu0
      %v2807 = vadd.f32 0.0, %v2806
      %v2808 = vpop.f32.mrb[0].mxu0
      %v2809 = vpop.f32.mrb[0].mxu0
      %v2810 = vadd.f32 0.0, %v2809
      %v2811 = vpop.f32.mrb[0].mxu0
      %2812 = vmatprep.mubr.bf16.mxu0 0
      %2813 = vmatmul.mubr.bf16.gmra.mrb[0].mxu0 %v2707
      %v2814 = vpop.f32.mrb[0].mxu0
      %v2815 = vadd.f32 0.0, %v2814
      %v2816 = vpop.f32.mrb[0].mxu0
      %v2817 = vpop.f32.mrb[0].mxu0
      %v2818 = vadd.f32 0.0, %v2817
      %v2819 = vpop.f32.mrb[0].mxu0
      %2820 = vmatprep.mubr.bf16.mxu0 0
      %2821 = vmatmul.mubr.bf16.gmra.mrb[0].mxu0 %v2710
      %v2822 = vpop.f32.mrb[0].mxu0
      %v2823 = vadd.f32 0.0, %v2822
      %v2824 = vpop.f32.mrb[0].mxu0
      %v2825 = vpop.f32.mrb[0].mxu0
      %v2826 = vadd.f32 0.0, %v2825
      %v2827 = vpop.f32.mrb[0].mxu0
      %2828 = vmatprep.mubr.bf16.mxu0 0
      %2829 = vmatmul.mubr.bf16.gmra.mrb[0].mxu0 %v2713
      %v2830 = vpop.f32.mrb[0].mxu0
      %v2831 = vadd.f32 0.0, %v2830
      %v2832 = vpop.f32.mrb[0].mxu0
      %v2833 = vpop.f32.mrb[0].mxu0
      %v2834 = vadd.f32 0.0, %v2833
      %v2835 = vpop.f32.mrb[0].mxu0
      %2836 = vmatprep.mubr.bf16.mxu0 0
      %2837 = vmatmul.mubr.bf16.gmra.mrb[0].mxu0 %v2716
      %v2838 = vpop.f32.mrb[0].mxu0
      %v2839 = vadd.f32 0.0, %v2838
      %v2840 = vpop.f32.mrb[0].mxu0
      %v2841 = vpop.f32.mrb[0].mxu0
      %v2842 = vadd.f32 0.0, %v2841
      %v2843 = vpop.f32.mrb[0].mxu0
      %2844 = vmatprep.mubr.bf16.mxu0 0
      %2845 = vmatmul.mubr.bf16.gmra.mrb[0].mxu0 %v2719
      %v2846 = vpop.f32.mrb[0].mxu0
      %v2847 = vadd.f32 0.0, %v2846
      %v2848 = vpop.f32.mrb[0].mxu0
      %v2849 = vpop.f32.mrb[0].mxu0
      %v2850 = vadd.f32 0.0, %v2849
      %v2851 = vpop.f32.mrb[0].mxu0
      %2852 = vmatprep.mubr.bf16.mxu0 0
      %2853 = vmatmul.mubr.bf16.gmra.mrb[0].mxu0 %v2722
      %v2854 = vpop.f32.mrb[0].mxu0
      %v2855 = vadd.f32 0.0, %v2854
      %v2856 = vpop.f32.mrb[0].mxu0
      %v2857 = vpop.f32.mrb[0].mxu0
      %v2858 = vadd.f32 0.0, %v2857
      %v2859 = vpop.f32.mrb[0].mxu0
      %2860 = vmatprep.mubr.bf16.mxu0 0
      %2861 = vmatmul.mubr.bf16.gmra.mrb[0].mxu0 %v2725
      %v2862 = vpop.f32.mrb[0].mxu0
      %v2863 = vadd.f32 0.0, %v2862
      %v2864 = vpop.f32.mrb[0].mxu0
      %v2865 = vpop.f32.mrb[0].mxu0
      %v2866 = vadd.f32 0.0, %v2865
      %v2867 = vpop.f32.mrb[0].mxu0
      %2868 = vmatprep.mubr.bf16.mxu0 0
      %2869 = vmatmul.mubr.bf16.gmra.mrb[0].mxu0 %v2728
      %v2870 = vpop.f32.mrb[0].mxu0
      %v2871 = vadd.f32 0.0, %v2870
      %v2872 = vpop.f32.mrb[0].mxu0
      %v2873 = vpop.f32.mrb[0].mxu0
      %v2874 = vadd.f32 0.0, %v2873
      %v2875 = vpop.f32.mrb[0].mxu0
      %2876 = vmatprep.mubr.bf16.mxu0 0
      %2877 = vmatmul.mubr.bf16.gmra.mrb[0].mxu0 %v2731
      %v2878 = vpop.f32.mrb[0].mxu0
      %v2879 = vadd.f32 0.0, %v2878
      %v2880 = vpop.f32.mrb[0].mxu0
      %v2881 = vpop.f32.mrb[0].mxu0
      %v2882 = vadd.f32 0.0, %v2881
      %v2883 = vpop.f32.mrb[0].mxu0
      %2884 = vmatprep.mubr.bf16.mxu0 0
      %2885 = vmatmul.mubr.bf16.gmra.mrb[0].mxu0 %v2734
      %v2886 = vpop.f32.mrb[0].mxu0
      %v2887 = vadd.f32 0.0, %v2886
      %v2888 = vpop.f32.mrb[0].mxu0
      %v2889 = vpop.f32.mrb[0].mxu0
      %v2890 = vadd.f32 0.0, %v2889
      %v2891 = vpop.f32.mrb[0].mxu0
      %2892 = vmatprep.mubr.bf16.mxu0 0
      %2893 = vmatmul.mubr.bf16.gmra.mrb[0].mxu0 %v2737
      %v2894 = vpop.f32.mrb[0].mxu0
      %v2895 = vadd.f32 0.0, %v2894
      %v2896 = vpop.f32.mrb[0].mxu0
      %v2897 = vpop.f32.mrb[0].mxu0
      %v2898 = vadd.f32 0.0, %v2897
      %v2899 = vpop.f32.mrb[0].mxu0
      %2900 = vmatprep.mubr.bf16.mxu0 0
      %2901 = vmatmul.mubr.bf16.gmra.mrb[0].mxu0 %v2740
      %v2902 = vpop.f32.mrb[0].mxu0
      %v2903 = vadd.f32 0.0, %v2902
      %v2904 = vpop.f32.mrb[0].mxu0
      %v2905 = vpop.f32.mrb[0].mxu0
      %v2906 = vadd.f32 0.0, %v2905
      %v2907 = vpop.f32.mrb[0].mxu0
      %2908 = vmatprep.mubr.bf16.mxu0 0
      %2909 = vmatmul.mubr.bf16.gmra.mrb[0].mxu0 %v2743
      %v2910 = vpop.f32.mrb[0].mxu0
      %v2911 = vadd.f32 0.0, %v2910
      %v2912 = vpop.f32.mrb[0].mxu0
      %v2913 = vpop.f32.mrb[0].mxu0
      %v2914 = vadd.f32 0.0, %v2913
      %v2915 = vpop.f32.mrb[0].mxu0
      %2916 = vdwg.mxu0
      %v2917 = vadd.f32 %v2608, %v2783
      %v2918 = vadd.f32 %v2609, %v2786
      %v2919 = vadd.f32 %v2610, %v2791
      %v2920 = vadd.f32 %v2611, %v2794
      %v2921 = vadd.f32 %v2612, %v2799
      %v2922 = vadd.f32 %v2613, %v2802
      %v2923 = vadd.f32 %v2614, %v2807
      %v2924 = vadd.f32 %v2615, %v2810
      %v2925 = vadd.f32 %v2616, %v2815
      %v2926 = vadd.f32 %v2617, %v2818
      %v2927 = vadd.f32 %v2618, %v2823
      %v2928 = vadd.f32 %v2619, %v2826
      %v2929 = vadd.f32 %v2620, %v2831
      %v2930 = vadd.f32 %v2621, %v2834
      %v2931 = vadd.f32 %v2622, %v2839
      %v2932 = vadd.f32 %v2623, %v2842
      %v2933 = vadd.f32 %v2624, %v2847
      %v2934 = vadd.f32 %v2625, %v2850
      %v2935 = vadd.f32 %v2626, %v2855
      %v2936 = vadd.f32 %v2627, %v2858
      %v2937 = vadd.f32 %v2628, %v2863
      %v2938 = vadd.f32 %v2629, %v2866
      %v2939 = vadd.f32 %v2630, %v2871
      %v2940 = vadd.f32 %v2631, %v2874
      %v2941 = vadd.f32 %v2632, %v2879
      %v2942 = vadd.f32 %v2633, %v2882
      %v2943 = vadd.f32 %v2634, %v2887
      %v2944 = vadd.f32 %v2635, %v2890
      %v2945 = vadd.f32 %v2636, %v2895
      %v2946 = vadd.f32 %v2637, %v2898
      %v2947 = vadd.f32 %v2638, %v2903
      %v2948 = vadd.f32 %v2639, %v2906
      %v2949 = vadd.f32 %v2640, %v2911
      %v2950 = vadd.f32 %v2641, %v2914
      %v2951 = vld [vmem:[%s2] sm:$0x1]
      %v2953 = vlaneseq
      %v2954 = vshrl.u32 %v2953, 7
      %v2955 = vsub.s32 0, %v2954
      %v2956 = vrot.slane %v2951, %v2955
      %v2958 = vadd.f32 %v2917, %v2956
      %v2959 = vadd.f32 %v2918, %v2956
      %v2960 = vadd.f32 %v2919, %v2956
      %v2961 = vadd.f32 %v2920, %v2956
      %v2962 = vadd.f32 %v2921, %v2956
      %v2963 = vadd.f32 %v2922, %v2956
      %v2964 = vadd.f32 %v2923, %v2956
      %v2965 = vadd.f32 %v2924, %v2956
      %v2966 = vadd.f32 %v2925, %v2956
      %v2967 = vadd.f32 %v2926, %v2956
      %v2968 = vadd.f32 %v2927, %v2956
      %v2969 = vadd.f32 %v2928, %v2956
      %v2970 = vadd.f32 %v2929, %v2956
      %v2971 = vadd.f32 %v2930, %v2956
      %v2972 = vadd.f32 %v2931, %v2956
      %v2973 = vadd.f32 %v2932, %v2956
      %v2974 = vadd.f32 %v2933, %v2956
      %v2975 = vadd.f32 %v2934, %v2956
      %v2976 = vadd.f32 %v2935, %v2956
      %v2977 = vadd.f32 %v2936, %v2956
      %v2978 = vadd.f32 %v2937, %v2956
      %v2979 = vadd.f32 %v2938, %v2956
      %v2980 = vadd.f32 %v2939, %v2956
      %v2981 = vadd.f32 %v2940, %v2956
      %v2982 = vadd.f32 %v2941, %v2956
      %v2983 = vadd.f32 %v2942, %v2956
      %v2984 = vadd.f32 %v2943, %v2956
      %v2985 = vadd.f32 %v2944, %v2956
      %v2986 = vadd.f32 %v2945, %v2956
      %v2987 = vadd.f32 %v2946, %v2956
      %v2988 = vadd.f32 %v2947, %v2956
      %v2989 = vadd.f32 %v2948, %v2956
      %v2990 = vadd.f32 %v2949, %v2956
      %v2991 = vadd.f32 %v2950, %v2956
      %v2992 = vsub.f32 0.0, %v2958
      %v2993 = vsub.f32 0.0, %v2959
      %v2994 = vsub.f32 0.0, %v2960
      %v2995 = vsub.f32 0.0, %v2961
      %v2996 = vsub.f32 0.0, %v2962
      %v2997 = vsub.f32 0.0, %v2963
      %v2998 = vsub.f32 0.0, %v2964
      %v2999 = vsub.f32 0.0, %v2965
      %v3000 = vsub.f32 0.0, %v2966
      %v3001 = vsub.f32 0.0, %v2967
      %v3002 = vsub.f32 0.0, %v2968
      %v3003 = vsub.f32 0.0, %v2969
      %v3004 = vsub.f32 0.0, %v2970
      %v3005 = vsub.f32 0.0, %v2971
      %v3006 = vsub.f32 0.0, %v2972
      %v3007 = vsub.f32 0.0, %v2973
      %v3008 = vsub.f32 0.0, %v2974
      %v3009 = vsub.f32 0.0, %v2975
      %v3010 = vsub.f32 0.0, %v2976
      %v3011 = vsub.f32 0.0, %v2977
      %v3012 = vsub.f32 0.0, %v2978
      %v3013 = vsub.f32 0.0, %v2979
      %v3014 = vsub.f32 0.0, %v2980
      %v3015 = vsub.f32 0.0, %v2981
      %v3016 = vsub.f32 0.0, %v2982
      %v3017 = vsub.f32 0.0, %v2983
      %v3018 = vsub.f32 0.0, %v2984
      %v3019 = vsub.f32 0.0, %v2985
      %v3020 = vsub.f32 0.0, %v2986
      %v3021 = vsub.f32 0.0, %v2987
      %v3022 = vsub.f32 0.0, %v2988
      %v3023 = vsub.f32 0.0, %v2989
      %v3024 = vsub.f32 0.0, %v2990
      %v3025 = vsub.f32 0.0, %v2991
      %v3026 = vmul.f32 %v2992, 1.442695
      %v3027 = vpow.pop %v3026
      %v3028 = vmul.f32 %v2993, 1.442695
      %v3029 = vpow.pop %v3028
      %v3030 = vmul.f32 %v2994, 1.442695
      %v3031 = vpow.pop %v3030
      %v3032 = vmul.f32 %v2995, 1.442695
      %v3033 = vpow.pop %v3032
      %v3034 = vmul.f32 %v2996, 1.442695
      %v3035 = vpow.pop %v3034
      %v3036 = vmul.f32 %v2997, 1.442695
      %v3037 = vpow.pop %v3036
      %v3038 = vmul.f32 %v2998, 1.442695
      %v3039 = vpow.pop %v3038
      %v3040 = vmul.f32 %v2999, 1.442695
      %v3041 = vpow.pop %v3040
      %v3042 = vmul.f32 %v3000, 1.442695
      %v3043 = vpow.pop %v3042
      %v3044 = vmul.f32 %v3001, 1.442695
      %v3045 = vpow.pop %v3044
      %v3046 = vmul.f32 %v3002, 1.442695
      %v3047 = vpow.pop %v3046
      %v3048 = vmul.f32 %v3003, 1.442695
      %v3049 = vpow.pop %v3048
      %v3050 = vmul.f32 %v3004, 1.442695
      %v3051 = vpow.pop %v3050
      %v3052 = vmul.f32 %v3005, 1.442695
      %v3053 = vpow.pop %v3052
      %v3054 = vmul.f32 %v3006, 1.442695
      %v3055 = vpow.pop %v3054
      %v3056 = vmul.f32 %v3007, 1.442695
      %v3057 = vpow.pop %v3056
      %v3058 = vmul.f32 %v3008, 1.442695
      %v3059 = vpow.pop %v3058
      %v3060 = vmul.f32 %v3009, 1.442695
      %v3061 = vpow.pop %v3060
      %v3062 = vmul.f32 %v3010, 1.442695
      %v3063 = vpow.pop %v3062
      %v3064 = vmul.f32 %v3011, 1.442695
      %v3065 = vpow.pop %v3064
      %v3066 = vmul.f32 %v3012, 1.442695
      %v3067 = vpow.pop %v3066
      %v3068 = vmul.f32 %v3013, 1.442695
      %v3069 = vpow.pop %v3068
      %v3070 = vmul.f32 %v3014, 1.442695
      %v3071 = vpow.pop %v3070
      %v3072 = vmul.f32 %v3015, 1.442695
      %v3073 = vpow.pop %v3072
      %v3074 = vmul.f32 %v3016, 1.442695
      %v3075 = vpow.pop %v3074
      %v3076 = vmul.f32 %v3017, 1.442695
      %v3077 = vpow.pop %v3076
      %v3078 = vmul.f32 %v3018, 1.442695
      %v3079 = vpow.pop %v3078
      %v3080 = vmul.f32 %v3019, 1.442695
      %v3081 = vpow.pop %v3080
      %v3082 = vmul.f32 %v3020, 1.442695
      %v3083 = vpow.pop %v3082
      %v3084 = vmul.f32 %v3021, 1.442695
      %v3085 = vpow.pop %v3084
      %v3086 = vmul.f32 %v3022, 1.442695
      %v3087 = vpow.pop %v3086
      %v3088 = vmul.f32 %v3023, 1.442695
      %v3089 = vpow.pop %v3088
      %v3090 = vmul.f32 %v3024, 1.442695
      %v3091 = vpow.pop %v3090
      %v3092 = vmul.f32 %v3025, 1.442695
      %v3093 = vpow.pop %v3092
      %v3094 = vadd.f32 %v3027, 1.0
      %v3095 = vadd.f32 %v3029, 1.0
      %v3096 = vadd.f32 %v3031, 1.0
      %v3097 = vadd.f32 %v3033, 1.0
      %v3098 = vadd.f32 %v3035, 1.0
      %v3099 = vadd.f32 %v3037, 1.0
      %v3100 = vadd.f32 %v3039, 1.0
      %v3101 = vadd.f32 %v3041, 1.0
      %v3102 = vadd.f32 %v3043, 1.0
      %v3103 = vadd.f32 %v3045, 1.0
      %v3104 = vadd.f32 %v3047, 1.0
      %v3105 = vadd.f32 %v3049, 1.0
      %v3106 = vadd.f32 %v3051, 1.0
      %v3107 = vadd.f32 %v3053, 1.0
      %v3108 = vadd.f32 %v3055, 1.0
      %v3109 = vadd.f32 %v3057, 1.0
      %v3110 = vadd.f32 %v3059, 1.0
      %v3111 = vadd.f32 %v3061, 1.0
      %v3112 = vadd.f32 %v3063, 1.0
      %v3113 = vadd.f32 %v3065, 1.0
      %v3114 = vadd.f32 %v3067, 1.0
      %v3115 = vadd.f32 %v3069, 1.0
      %v3116 = vadd.f32 %v3071, 1.0
      %v3117 = vadd.f32 %v3073, 1.0
      %v3118 = vadd.f32 %v3075, 1.0
      %v3119 = vadd.f32 %v3077, 1.0
      %v3120 = vadd.f32 %v3079, 1.0
      %v3121 = vadd.f32 %v3081, 1.0
      %v3122 = vadd.f32 %v3083, 1.0
      %v3123 = vadd.f32 %v3085, 1.0
      %v3124 = vadd.f32 %v3087, 1.0
      %v3125 = vadd.f32 %v3089, 1.0
      %v3126 = vadd.f32 %v3091, 1.0
      %v3127 = vadd.f32 %v3093, 1.0
      %v3128 = vrcp.pop %v3094
      %v3129 = vrcp.pop %v3095
      %v3130 = vrcp.pop %v3096
      %v3131 = vrcp.pop %v3097
      %v3132 = vrcp.pop %v3098
      %v3133 = vrcp.pop %v3099
      %v3134 = vrcp.pop %v3100
      %v3135 = vrcp.pop %v3101
      %v3136 = vrcp.pop %v3102
      %v3137 = vrcp.pop %v3103
      %v3138 = vrcp.pop %v3104
      %v3139 = vrcp.pop %v3105
      %v3140 = vrcp.pop %v3106
      %v3141 = vrcp.pop %v3107
      %v3142 = vrcp.pop %v3108
      %v3143 = vrcp.pop %v3109
      %v3144 = vrcp.pop %v3110
      %v3145 = vrcp.pop %v3111
      %v3146 = vrcp.pop %v3112
      %v3147 = vrcp.pop %v3113
      %v3148 = vrcp.pop %v3114
      %v3149 = vrcp.pop %v3115
      %v3150 = vrcp.pop %v3116
      %v3151 = vrcp.pop %v3117
      %v3152 = vrcp.pop %v3118
      %v3153 = vrcp.pop %v3119
      %v3154 = vrcp.pop %v3120
      %v3155 = vrcp.pop %v3121
      %v3156 = vrcp.pop %v3122
      %v3157 = vrcp.pop %v3123
      %v3158 = vrcp.pop %v3124
      %v3159 = vrcp.pop %v3125
      %v3160 = vrcp.pop %v3126
      %v3161 = vrcp.pop %v3127
      %v3162 = vmul.f32 %v2958, %v3128
      %v3163 = vmul.f32 %v2959, %v3129
      %v3164 = vmul.f32 %v2960, %v3130
      %v3165 = vmul.f32 %v2961, %v3131
      %v3166 = vmul.f32 %v2962, %v3132
      %v3167 = vmul.f32 %v2963, %v3133
      %v3168 = vmul.f32 %v2964, %v3134
      %v3169 = vmul.f32 %v2965, %v3135
      %v3170 = vmul.f32 %v2966, %v3136
      %v3171 = vmul.f32 %v2967, %v3137
      %v3172 = vmul.f32 %v2968, %v3138
      %v3173 = vmul.f32 %v2969, %v3139
      %v3174 = vmul.f32 %v2970, %v3140
      %v3175 = vmul.f32 %v2971, %v3141
      %v3176 = vmul.f32 %v2972, %v3142
      %v3177 = vmul.f32 %v2973, %v3143
      %v3178 = vmul.f32 %v2974, %v3144
      %v3179 = vmul.f32 %v2975, %v3145
      %v3180 = vmul.f32 %v2976, %v3146
      %v3181 = vmul.f32 %v2977, %v3147
      %v3182 = vmul.f32 %v2978, %v3148
      %v3183 = vmul.f32 %v2979, %v3149
      %v3184 = vmul.f32 %v2980, %v3150
      %v3185 = vmul.f32 %v2981, %v3151
      %v3186 = vmul.f32 %v2982, %v3152
      %v3187 = vmul.f32 %v2983, %v3153
      %v3188 = vmul.f32 %v2984, %v3154
      %v3189 = vmul.f32 %v2985, %v3155
      %v3190 = vmul.f32 %v2986, %v3156
      %v3191 = vmul.f32 %v2987, %v3157
      %v3192 = vmul.f32 %v2988, %v3158
      %v3193 = vmul.f32 %v2989, %v3159
      %v3194 = vmul.f32 %v2990, %v3160
      %v3195 = vmul.f32 %v2991, %v3161
      %vm3196 = vcmask 130048
      %3197 = vst.msk [vmem:[%s170] sm:$0xff] %vm3196, %v3162
      %3198 = vst.msk [vmem:[%s170 + $0x8] sm:$0xff] %vm3196, %v3163
      %3199 = vst.msk [vmem:[%s170 + $0x10] sm:$0xff] %vm3196, %v3164
      %3200 = vst.msk [vmem:[%s170 + $0x18] sm:$0xff] %vm3196, %v3165
      %3201 = vst.msk [vmem:[%s170 + $0x20] sm:$0xff] %vm3196, %v3166
      %3202 = vst.msk [vmem:[%s170 + $0x28] sm:$0xff] %vm3196, %v3167
      %3203 = vst.msk [vmem:[%s170 + $0x30] sm:$0xff] %vm3196, %v3168
      %3204 = vst.msk [vmem:[%s170 + $0x38] sm:$0xff] %vm3196, %v3169
      %3205 = vst.msk [vmem:[%s170 + $0x40] sm:$0xff] %vm3196, %v3170
      %3206 = vst.msk [vmem:[%s170 + $0x48] sm:$0xff] %vm3196, %v3171
      %3207 = vst.msk [vmem:[%s170 + $0x50] sm:$0xff] %vm3196, %v3172
      %3208 = vst.msk [vmem:[%s170 + $0x58] sm:$0xff] %vm3196, %v3173
      %3209 = vst.msk [vmem:[%s170 + $0x60] sm:$0xff] %vm3196, %v3174
      %3210 = vst.msk [vmem:[%s170 + $0x68] sm:$0xff] %vm3196, %v3175
      %3211 = vst.msk [vmem:[%s170 + $0x70] sm:$0xff] %vm3196, %v3176
      %3212 = vst.msk [vmem:[%s170 + $0x78] sm:$0xff] %vm3196, %v3177
      %3213 = vst.msk [vmem:[%s170 + $0x80] sm:$0xff] %vm3196, %v3178
      %3214 = vst.msk [vmem:[%s170 + $0x88] sm:$0xff] %vm3196, %v3179
      %3215 = vst.msk [vmem:[%s170 + $0x90] sm:$0xff] %vm3196, %v3180
      %3216 = vst.msk [vmem:[%s170 + $0x98] sm:$0xff] %vm3196, %v3181
      %3217 = vst.msk [vmem:[%s170 + $0xa0] sm:$0xff] %vm3196, %v3182
      %3218 = vst.msk [vmem:[%s170 + $0xa8] sm:$0xff] %vm3196, %v3183
      %3219 = vst.msk [vmem:[%s170 + $0xb0] sm:$0xff] %vm3196, %v3184
      %3220 = vst.msk [vmem:[%s170 + $0xb8] sm:$0xff] %vm3196, %v3185
      %3221 = vst.msk [vmem:[%s170 + $0xc0] sm:$0xff] %vm3196, %v3186
      %3222 = vst.msk [vmem:[%s170 + $0xc8] sm:$0xff] %vm3196, %v3187
      %3223 = vst.msk [vmem:[%s170 + $0xd0] sm:$0xff] %vm3196, %v3188
      %3224 = vst.msk [vmem:[%s170 + $0xd8] sm:$0xff] %vm3196, %v3189
      %3225 = vst.msk [vmem:[%s170 + $0xe0] sm:$0xff] %vm3196, %v3190
      %3226 = vst.msk [vmem:[%s170 + $0xe8] sm:$0xff] %vm3196, %v3191
      %3227 = vst.msk [vmem:[%s170 + $0xf0] sm:$0xff] %vm3196, %v3192
      %3228 = vst.msk [vmem:[%s170 + $0xf8] sm:$0xff] %vm3196, %v3193
      %3229 = vst.msk [vmem:[%s170 + $0x100] sm:$0xff] %vm3196, %v3194
      %3230 = vst.msk [vmem:[%s170 + $0x108] sm:$0xff] %vm3196, %v3195
      %p3231 = scmp.lt.s32.totalorder %s14, 1
      %s3232 = scalar_select %p3231, %s14, 1
      %s3233 = smul.addr %s3232, 34
      %s3234 = smul.addr %s3233, 8
      %s3235 = scalar_lea.vmem %s3, %s3234
      // Predicated region
      $region33: #{csp_darknet_forward.3} parent=31 // pred_check
        %p3236 = pneg %p100
      $region34: #{csp_darknet_forward.3} parent=31 // pred_check_branch
        %3238 = sbr.rel (%p3236) target = $region36
      $region35: #{csp_darknet_forward.3} parent=31 // pred_region
        _
      $region36: #{csp_darknet_forward.3} parent=31 // pred_fallthru
        _
    $region32: #{csp_darknet_forward.3} parent=5 // pred_fallthru
      _
    %p3239 = scmp.le.s32.totalorder 2, %s9
    // Predicated region
    $region37: #{csp_darknet_forward.3} parent=5 // pred_check
      %p3240 = pneg %p3239
    $region38: #{csp_darknet_forward.3} parent=5 // pred_check_branch
      %3242 = sbr.rel (%p3240) target = $region40
    $region39: #{csp_darknet_forward.3} parent=5 // pred_region
      %s3243 = ssub.s32 %s9, 2
      // Predicated region
      $region41: #{csp_darknet_forward.3} parent=39 // pred_check
        %p3244 = pneg %p106
      $region42: #{csp_darknet_forward.3} parent=39 // pred_check_branch
        %3246 = sbr.rel (%p3244) target = $region44
      $region43: #{csp_darknet_forward.3} parent=39 // pred_region
        %p3247 = scmp.lt.s32.totalorder %s15, 1
        %s3248 = scalar_select %p3247, %s15, 1
        %s3249 = smul.addr %s3248, 34
        %s3250 = smul.addr %s3249, 8
        %s3251 = scalar_lea.vmem %s3, %s3250
      $region44: #{csp_darknet_forward.3} parent=39 // pred_fallthru
        _
    $region40: #{csp_darknet_forward.3} parent=5 // pred_fallthru
      _
  $region6: #{csp_darknet_forward.3} parent=0 // loop_footer
    %s13 = sadd.s32 1, %s9
  $region7: #{csp_darknet_forward.3} parent=0 // loop_footer_branch
    %8 = sbr.rel target = $region3
  $region8: #{csp_darknet_forward.3} parent=0 // loop_exit
    _

// kernel: csp_darknet_forward.5
$region0: #{csp_darknet_forward.5}
  #allocation0 [shape = 'u32[]', space=smem, size = 0x4, offset = 0x4, fixed_abs, tag = 'smem constant byte address 0x4 - core index']
  #allocation1 [shape = 'u32[144,128]{1,0:T(1,128)}', space=vmem, size = 0x12000, scoped, tag = 'internal scratch']
  %s0 = inlined_call_operand.vmem [shape: f32[128,32], index: 0, kind: input, shape index: {}]
  %s1 = inlined_call_operand.vmem [shape: bf16[32,64], index: 1, kind: input, shape index: {}]
  %s2 = inlined_call_operand.vmem [shape: f32[1,64], index: 2, kind: input, shape index: {}]
  %s3 = inlined_call_operand.vmem [shape: bf16[64,64], index: 3, kind: input, shape index: {}]
  %s4 = inlined_call_operand.vmem [shape: f32[1,64], index: 4, kind: input, shape index: {}]
  %s5 = inlined_call_operand.hbm [shape: f32[128,64], index: 5, kind: output, shape index: {}]
  %s6 = sld [smem:[#allocation0]]
  $region30: #{csp_darknet_forward.5} parent=0
    _
  %s8 = ssub.s32 1, %s6
  %s9 = scalar_select 0, %s8, %s6
  $region1: #{csp_darknet_forward.5} parent=0
    #allocation2 [shape = 'u8[65536]{0}', space=vmem, size = 0x10000, scoped, tag = 'output window, operand 0, single buffered']
    #allocation3 [shape = 's32[1]{0}', space=sflag, size = 0x4, scoped, tag = 'scoped memory for csp_darknet_forward.5']
    %10 = vsyncpa [#allocation3], 0
    // Predicated region
    $region2: #{csp_darknet_forward.5} parent=1 // pred_check
      _
    $region3: #{csp_darknet_forward.5} parent=1 // pred_check_branch
      %12 = sbr.rel (0) target = $region5
    $region4: #{csp_darknet_forward.5} parent=1 // pred_region
      _
    $region5: #{csp_darknet_forward.5} parent=1 // pred_fallthru
      _
    // Predicated region
    $region6: #{csp_darknet_forward.5} parent=1 // pred_check
      _
    $region7: #{csp_darknet_forward.5} parent=1 // pred_check_branch
      %14 = sbr.rel (0) target = $region9
    $region8: #{csp_darknet_forward.5} parent=1 // pred_region
      _
    $region9: #{csp_darknet_forward.5} parent=1 // pred_fallthru
      _
    // Predicated region
    $region10: #{csp_darknet_forward.5} parent=1 // pred_check
      _
    $region11: #{csp_darknet_forward.5} parent=1 // pred_check_branch
      %16 = sbr.rel (0) target = $region13
    $region12: #{csp_darknet_forward.5} parent=1 // pred_region
      _
    $region13: #{csp_darknet_forward.5} parent=1 // pred_fallthru
      _
    // Predicated region
    $region14: #{csp_darknet_forward.5} parent=1 // pred_check
      _
    $region15: #{csp_darknet_forward.5} parent=1 // pred_check_branch
      %18 = sbr.rel (0) target = $region17
    $region16: #{csp_darknet_forward.5} parent=1 // pred_region
      _
    $region17: #{csp_darknet_forward.5} parent=1 // pred_fallthru
      _
    // Predicated region
    $region18: #{csp_darknet_forward.5} parent=1 // pred_check
      _
    $region19: #{csp_darknet_forward.5} parent=1 // pred_check_branch
      %20 = sbr.rel (0) target = $region21
    $region20: #{csp_darknet_forward.5} parent=1 // pred_region
      _
    $region21: #{csp_darknet_forward.5} parent=1 // pred_fallthru
      _
    %v22 = vld [vmem:[%s0] sm:$0xff]
    %v23 = vld [vmem:[%s0 + $0x8] sm:$0xff]
    %v24 = vld [vmem:[%s0 + $0x10] sm:$0xff]
    %v25 = vld [vmem:[%s0 + $0x18] sm:$0xff]
    %v26 = vld [vmem:[%s0 + $0x20] sm:$0xff]
    %v27 = vld [vmem:[%s0 + $0x28] sm:$0xff]
    %v28 = vld [vmem:[%s0 + $0x30] sm:$0xff]
    %v29 = vld [vmem:[%s0 + $0x38] sm:$0xff]
    %v30 = vld [vmem:[%s0 + $0x40] sm:$0xff]
    %v31 = vld [vmem:[%s0 + $0x48] sm:$0xff]
    %v32 = vld [vmem:[%s0 + $0x50] sm:$0xff]
    %v33 = vld [vmem:[%s0 + $0x58] sm:$0xff]
    %v34 = vld [vmem:[%s0 + $0x60] sm:$0xff]
    %v35 = vld [vmem:[%s0 + $0x68] sm:$0xff]
    %v36 = vld [vmem:[%s0 + $0x70] sm:$0xff]
    %v37 = vld [vmem:[%s0 + $0x78] sm:$0xff]
    %v38 = vpack.c.bf16 %v23, %v22
    %v39 = vpack.c.bf16 %v25, %v24
    %v40 = vpack.c.bf16 %v27, %v26
    %v41 = vpack.c.bf16 %v29, %v28
    %v42 = vpack.c.bf16 %v31, %v30
    %v43 = vpack.c.bf16 %v33, %v32
    %v44 = vpack.c.bf16 %v35, %v34
    %v45 = vpack.c.bf16 %v37, %v36
    %v46 = vld [vmem:[%s1] sm:$0xf]
    %v47 = vld [vmem:[%s1 + $0x4] sm:$0xf]
    %v48 = vld [vmem:[%s1 + $0x8] sm:$0xf]
    %v49 = vld [vmem:[%s1 + $0xc] sm:$0xf]
    %v50 = vld [vmem:[%s2] sm:$0x1]
    %v52 = vlaneseq
    %v53 = vshrl.u32 %v52, 7
    %v54 = vsub.s32 0, %v53
    %v55 = vrot.slane %v50, %v54
    %v61 = vunpack.c.l.b16 %v46
    %v62 = vunpack.c.l.b16 %v47
    %v63 = vunpack.c.l.b16 %v48
    %v64 = vunpack.c.l.b16 %v49
    %v65 = vpack.c.b16 %v62, %v61
    %v66 = vpack.c.b16 %v64, %v63
    %vm69 = vcmask 261120
    %v71 = vsel %vm69, %v38, 0
    %v74 = vsel %vm69, %v39, 0
    %v77 = vsel %vm69, %v40, 0
    %v80 = vsel %vm69, %v41, 0
    %v83 = vsel %vm69, %v42, 0
    %v86 = vsel %vm69, %v43, 0
    %v89 = vsel %vm69, %v44, 0
    %v92 = vsel %vm69, %v45, 0
    %94 = vmatprep.subr.bf16.mxu0 0
    %95 = vmatpush1.bf16.msra.mxu0 %v65
    %96 = vmatprep.subr.bf16.mxu0 0
    %97 = vmatpush1.bf16.msra.mxu0 %v66
    %98 = vmatprep.subr.bf16.mxu0 0
    %99 = vmatpush1.bf16.msra.mxu0 0
    %100 = vmatprep.subr.bf16.mxu0 0
    %101 = vmatpush1.bf16.msra.mxu0 0
    %102 = vmatprep.subr.bf16.mxu0 0
    %103 = vmatpush1.bf16.msra.mxu0 0
    %104 = vmatprep.subr.bf16.mxu0 0
    %105 = vmatpush1.bf16.msra.mxu0 0
    %106 = vmatprep.subr.bf16.mxu0 0
    %107 = vmatpush1.bf16.msra.mxu0 0
    %108 = vmatprep.subr.bf16.mxu0 0
    %109 = vmatpush1.bf16.msra.mxu0 0
    %110 = vmatprep.subr.bf16.mxu0 0
    %111 = vmatpush1.bf16.msra.mxu0 0
    %112 = vmatprep.subr.bf16.mxu0 0
    %113 = vmatpush1.bf16.msra.mxu0 0
    %114 = vmatprep.subr.bf16.mxu0 0
    %115 = vmatpush1.bf16.msra.mxu0 0
    %116 = vmatprep.subr.bf16.mxu0 0
    %117 = vmatpush1.bf16.msra.mxu0 0
    %118 = vmatprep.subr.bf16.mxu0 0
    %119 = vmatpush1.bf16.msra.mxu0 0
    %120 = vmatprep.subr.bf16.mxu0 0
    %121 = vmatpush1.bf16.msra.mxu0 0
    %122 = vmatprep.subr.bf16.mxu0 0
    %123 = vmatpush1.bf16.msra.mxu0 0
    %124 = vmatprep.subr.bf16.mxu0 0
    %125 = vmatpush1.bf16.msra.mxu0 0
    %126 = vmatprep.mubr.bf16.mxu0 0
    %127 = vmatmul.mubr.bf16.gmra.mrb[0].mxu0 %v71
    %v128 = vpop.f32.mrb[0].mxu0
    %v129 = vadd.f32 %v55, %v128
    %v130 = vpop.f32.mrb[0].mxu0
    %v131 = vpop.f32.mrb[0].mxu0
    %v132 = vadd.f32 %v55, %v131
    %v133 = vpop.f32.mrb[0].mxu0
    %134 = vmatprep.mubr.bf16.mxu0 0
    %135 = vmatmul.mubr.bf16.gmra.mrb[0].mxu0 %v74
    %v136 = vpop.f32.mrb[0].mxu0
    %v137 = vadd.f32 %v55, %v136
    %v138 = vpop.f32.mrb[0].mxu0
    %v139 = vpop.f32.mrb[0].mxu0
    %v140 = vadd.f32 %v55, %v139
    %v141 = vpop.f32.mrb[0].mxu0
    %142 = vmatprep.mubr.bf16.mxu0 0
    %143 = vmatmul.mubr.bf16.gmra.mrb[0].mxu0 %v77
    %v144 = vpop.f32.mrb[0].mxu0
    %v145 = vadd.f32 %v55, %v144
    %v146 = vpop.f32.mrb[0].mxu0
    %v147 = vpop.f32.mrb[0].mxu0
    %v148 = vadd.f32 %v55, %v147
    %v149 = vpop.f32.mrb[0].mxu0
    %150 = vmatprep.mubr.bf16.mxu0 0
    %151 = vmatmul.mubr.bf16.gmra.mrb[0].mxu0 %v80
    %v152 = vpop.f32.mrb[0].mxu0
    %v153 = vadd.f32 %v55, %v152
    %v154 = vpop.f32.mrb[0].mxu0
    %v155 = vpop.f32.mrb[0].mxu0
    %v156 = vadd.f32 %v55, %v155
    %v157 = vpop.f32.mrb[0].mxu0
    %158 = vmatprep.mubr.bf16.mxu0 0
    %159 = vmatmul.mubr.bf16.gmra.mrb[0].mxu0 %v83
    %v160 = vpop.f32.mrb[0].mxu0
    %v161 = vadd.f32 %v55, %v160
    %v162 = vpop.f32.mrb[0].mxu0
    %v163 = vpop.f32.mrb[0].mxu0
    %v164 = vadd.f32 %v55, %v163
    %v165 = vpop.f32.mrb[0].mxu0
    %166 = vmatprep.mubr.bf16.mxu0 0
    %167 = vmatmul.mubr.bf16.gmra.mrb[0].mxu0 %v86
    %v168 = vpop.f32.mrb[0].mxu0
    %v169 = vadd.f32 %v55, %v168
    %v170 = vpop.f32.mrb[0].mxu0
    %v171 = vpop.f32.mrb[0].mxu0
    %v172 = vadd.f32 %v55, %v171
    %v173 = vpop.f32.mrb[0].mxu0
    %174 = vmatprep.mubr.bf16.mxu0 0
    %175 = vmatmul.mubr.bf16.gmra.mrb[0].mxu0 %v89
    %v176 = vpop.f32.mrb[0].mxu0
    %v177 = vadd.f32 %v55, %v176
    %v178 = vpop.f32.mrb[0].mxu0
    %v179 = vpop.f32.mrb[0].mxu0
    %v180 = vadd.f32 %v55, %v179
    %v181 = vpop.f32.mrb[0].mxu0
    %182 = vmatprep.mubr.bf16.mxu0 0
    %183 = vmatmul.mubr.bf16.gmra.mrb[0].mxu0 %v92
    %v184 = vpop.f32.mrb[0].mxu0
    %v185 = vadd.f32 %v55, %v184
    %v186 = vpop.f32.mrb[0].mxu0
    %v187 = vpop.f32.mrb[0].mxu0
    %v188 = vadd.f32 %v55, %v187
    %v189 = vpop.f32.mrb[0].mxu0
    %190 = vdwg.mxu0
    %v191 = vsub.f32 0.0, %v129
    %v192 = vsub.f32 0.0, %v132
    %v193 = vsub.f32 0.0, %v137
    %v194 = vsub.f32 0.0, %v140
    %v195 = vsub.f32 0.0, %v145
    %v196 = vsub.f32 0.0, %v148
    %v197 = vsub.f32 0.0, %v153
    %v198 = vsub.f32 0.0, %v156
    %v199 = vsub.f32 0.0, %v161
    %v200 = vsub.f32 0.0, %v164
    %v201 = vsub.f32 0.0, %v169
    %v202 = vsub.f32 0.0, %v172
    %v203 = vsub.f32 0.0, %v177
    %v204 = vsub.f32 0.0, %v180
    %v205 = vsub.f32 0.0, %v185
    %v206 = vsub.f32 0.0, %v188
    %v207 = vmul.f32 %v191, 1.442695
    %v208 = vpow.pop %v207
    %v209 = vmul.f32 %v192, 1.442695
    %v210 = vpow.pop %v209
    %v211 = vmul.f32 %v193, 1.442695
    %v212 = vpow.pop %v211
    %v213 = vmul.f32 %v194, 1.442695
    %v214 = vpow.pop %v213
    %v215 = vmul.f32 %v195, 1.442695
    %v216 = vpow.pop %v215
    %v217 = vmul.f32 %v196, 1.442695
    %v218 = vpow.pop %v217
    %v219 = vmul.f32 %v197, 1.442695
    %v220 = vpow.pop %v219
    %v221 = vmul.f32 %v198, 1.442695
    %v222 = vpow.pop %v221
    %v223 = vmul.f32 %v199, 1.442695
    %v224 = vpow.pop %v223
    %v225 = vmul.f32 %v200, 1.442695
    %v226 = vpow.pop %v225
    %v227 = vmul.f32 %v201, 1.442695
    %v228 = vpow.pop %v227
    %v229 = vmul.f32 %v202, 1.442695
    %v230 = vpow.pop %v229
    %v231 = vmul.f32 %v203, 1.442695
    %v232 = vpow.pop %v231
    %v233 = vmul.f32 %v204, 1.442695
    %v234 = vpow.pop %v233
    %v235 = vmul.f32 %v205, 1.442695
    %v236 = vpow.pop %v235
    %v237 = vmul.f32 %v206, 1.442695
    %v238 = vpow.pop %v237
    %v239 = vadd.f32 %v208, 1.0
    %v240 = vadd.f32 %v210, 1.0
    %v241 = vadd.f32 %v212, 1.0
    %v242 = vadd.f32 %v214, 1.0
    %v243 = vadd.f32 %v216, 1.0
    %v244 = vadd.f32 %v218, 1.0
    %v245 = vadd.f32 %v220, 1.0
    %v246 = vadd.f32 %v222, 1.0
    %v247 = vadd.f32 %v224, 1.0
    %v248 = vadd.f32 %v226, 1.0
    %v249 = vadd.f32 %v228, 1.0
    %v250 = vadd.f32 %v230, 1.0
    %v251 = vadd.f32 %v232, 1.0
    %v252 = vadd.f32 %v234, 1.0
    %v253 = vadd.f32 %v236, 1.0
    %v254 = vadd.f32 %v238, 1.0
    %v255 = vrcp.pop %v239
    %v256 = vrcp.pop %v240
    %v257 = vrcp.pop %v241
    %v258 = vrcp.pop %v242
    %v259 = vrcp.pop %v243
    %v260 = vrcp.pop %v244
    %v261 = vrcp.pop %v245
    %v262 = vrcp.pop %v246
    %v263 = vrcp.pop %v247
    %v264 = vrcp.pop %v248
    %v265 = vrcp.pop %v249
    %v266 = vrcp.pop %v250
    %v267 = vrcp.pop %v251
    %v268 = vrcp.pop %v252
    %v269 = vrcp.pop %v253
    %v270 = vrcp.pop %v254
    %v271 = vmul.f32 %v129, %v255
    %v272 = vmul.f32 %v132, %v256
    %v273 = vmul.f32 %v137, %v257
    %v274 = vmul.f32 %v140, %v258
    %v275 = vmul.f32 %v145, %v259
    %v276 = vmul.f32 %v148, %v260
    %v277 = vmul.f32 %v153, %v261
    %v278 = vmul.f32 %v156, %v262
    %v279 = vmul.f32 %v161, %v263
    %v280 = vmul.f32 %v164, %v264
    %v281 = vmul.f32 %v169, %v265
    %v282 = vmul.f32 %v172, %v266
    %v283 = vmul.f32 %v177, %v267
    %v284 = vmul.f32 %v180, %v268
    %v285 = vmul.f32 %v185, %v269
    %v286 = vmul.f32 %v188, %v270
    %v287 = vpack.c.bf16 %v272, %v271
    %v288 = vpack.c.bf16 %v274, %v273
    %v289 = vpack.c.bf16 %v276, %v275
    %v290 = vpack.c.bf16 %v278, %v277
    %v291 = vpack.c.bf16 %v280, %v279
    %v292 = vpack.c.bf16 %v282, %v281
    %v293 = vpack.c.bf16 %v284, %v283
    %v294 = vpack.c.bf16 %v286, %v285
    %v295 = vld [vmem:[%s3] sm:$0xf]
    %v296 = vld [vmem:[%s3 + $0x4] sm:$0xf]
    %v297 = vld [vmem:[%s3 + $0x8] sm:$0xf]
    %v298 = vld [vmem:[%s3 + $0xc] sm:$0xf]
    %v299 = vld [vmem:[%s3 + $0x10] sm:$0xf]
    %v300 = vld [vmem:[%s3 + $0x14] sm:$0xf]
    %v301 = vld [vmem:[%s3 + $0x18] sm:$0xf]
    %v302 = vld [vmem:[%s3 + $0x1c] sm:$0xf]
    %v303 = vld [vmem:[%s4] sm:$0x1]
    %v305 = vlaneseq
    %v306 = vshrl.u32 %v305, 7
    %v307 = vsub.s32 0, %v306
    %v308 = vrot.slane %v303, %v307
    %v318 = vunpack.c.l.b16 %v295
    %v319 = vunpack.c.l.b16 %v296
    %v320 = vunpack.c.l.b16 %v297
    %v321 = vunpack.c.l.b16 %v298
    %v322 = vunpack.c.l.b16 %v299
    %v323 = vunpack.c.l.b16 %v300
    %v324 = vunpack.c.l.b16 %v301
    %v325 = vunpack.c.l.b16 %v302
    %v326 = vpack.c.b16 %v319, %v318
    %v327 = vpack.c.b16 %v321, %v320
    %v328 = vpack.c.b16 %v323, %v322
    %v329 = vpack.c.b16 %v325, %v324
    %vm334 = vcmask 523264
    %v336 = vsel %vm334, %v287, 0
    %v339 = vsel %vm334, %v288, 0
    %v342 = vsel %vm334, %v289, 0
    %v345 = vsel %vm334, %v290, 0
    %v348 = vsel %vm334, %v291, 0
    %v351 = vsel %vm334, %v292, 0
    %v354 = vsel %vm334, %v293, 0
    %v357 = vsel %vm334, %v294, 0
    %359 = vmatprep.subr.bf16.mxu0 0
    %360 = vmatpush1.bf16.msra.mxu0 %v326
    %361 = vmatprep.subr.bf16.mxu0 0
    %362 = vmatpush1.bf16.msra.mxu0 %v327
    %363 = vmatprep.subr.bf16.mxu0 0
    %364 = vmatpush1.bf16.msra.mxu0 %v328
    %365 = vmatprep.subr.bf16.mxu0 0
    %366 = vmatpush1.bf16.msra.mxu0 %v329
    %367 = vmatprep.subr.bf16.mxu0 0
    %368 = vmatpush1.bf16.msra.mxu0 0
    %369 = vmatprep.subr.bf16.mxu0 0
    %370 = vmatpush1.bf16.msra.mxu0 0
    %371 = vmatprep.subr.bf16.mxu0 0
    %372 = vmatpush1.bf16.msra.mxu0 0
    %373 = vmatprep.subr.bf16.mxu0 0
    %374 = vmatpush1.bf16.msra.mxu0 0
    %375 = vmatprep.subr.bf16.mxu0 0
    %376 = vmatpush1.bf16.msra.mxu0 0
    %377 = vmatprep.subr.bf16.mxu0 0
    %378 = vmatpush1.bf16.msra.mxu0 0
    %379 = vmatprep.subr.bf16.mxu0 0
    %380 = vmatpush1.bf16.msra.mxu0 0
    %381 = vmatprep.subr.bf16.mxu0 0
    %382 = vmatpush1.bf16.msra.mxu0 0
    %383 = vmatprep.subr.bf16.mxu0 0
    %384 = vmatpush1.bf16.msra.mxu0 0
    %385 = vmatprep.subr.bf16.mxu0 0
    %386 = vmatpush1.bf16.msra.mxu0 0
    %387 = vmatprep.subr.bf16.mxu0 0
    %388 = vmatpush1.bf16.msra.mxu0 0
    %389 = vmatprep.subr.bf16.mxu0 0
    %390 = vmatpush1.bf16.msra.mxu0 0
    %391 = vmatprep.mubr.bf16.mxu0 0
    %392 = vmatmul.mubr.bf16.gmra.mrb[0].mxu0 %v336
    %v393 = vpop.f32.mrb[0].mxu0
    %v394 = vadd.f32 %v308, %v393
    %v395 = vpop.f32.mrb[0].mxu0
    %v396 = vpop.f32.mrb[0].mxu0
    %v397 = vadd.f32 %v308, %v396
    %v398 = vpop.f32.mrb[0].mxu0
    %399 = vmatprep.mubr.bf16.mxu0 0
    %400 = vmatmul.mubr.bf16.gmra.mrb[0].mxu0 %v339
    %v401 = vpop.f32.mrb[0].mxu0
    %v402 = vadd.f32 %v308, %v401
    %v403 = vpop.f32.mrb[0].mxu0
    %v404 = vpop.f32.mrb[0].mxu0
    %v405 = vadd.f32 %v308, %v404
    %v406 = vpop.f32.mrb[0].mxu0
    %407 = vmatprep.mubr.bf16.mxu0 0
    %408 = vmatmul.mubr.bf16.gmra.mrb[0].mxu0 %v342
    %v409 = vpop.f32.mrb[0].mxu0
    %v410 = vadd.f32 %v308, %v409
    %v411 = vpop.f32.mrb[0].mxu0
    %v412 = vpop.f32.mrb[0].mxu0
    %v413 = vadd.f32 %v308, %v412
    %v414 = vpop.f32.mrb[0].mxu0
    %415 = vmatprep.mubr.bf16.mxu0 0
    %416 = vmatmul.mubr.bf16.gmra.mrb[0].mxu0 %v345
    %v417 = vpop.f32.mrb[0].mxu0
    %v418 = vadd.f32 %v308, %v417
    %v419 = vpop.f32.mrb[0].mxu0
    %v420 = vpop.f32.mrb[0].mxu0
    %v421 = vadd.f32 %v308, %v420
    %v422 = vpop.f32.mrb[0].mxu0
    %423 = vmatprep.mubr.bf16.mxu0 0
    %424 = vmatmul.mubr.bf16.gmra.mrb[0].mxu0 %v348
    %v425 = vpop.f32.mrb[0].mxu0
    %v426 = vadd.f32 %v308, %v425
    %v427 = vpop.f32.mrb[0].mxu0
    %v428 = vpop.f32.mrb[0].mxu0
    %v429 = vadd.f32 %v308, %v428
    %v430 = vpop.f32.mrb[0].mxu0
    %431 = vmatprep.mubr.bf16.mxu0 0
    %432 = vmatmul.mubr.bf16.gmra.mrb[0].mxu0 %v351
    %v433 = vpop.f32.mrb[0].mxu0
    %v434 = vadd.f32 %v308, %v433
    %v435 = vpop.f32.mrb[0].mxu0
    %v436 = vpop.f32.mrb[0].mxu0
    %v437 = vadd.f32 %v308, %v436
    %v438 = vpop.f32.mrb[0].mxu0
    %439 = vmatprep.mubr.bf16.mxu0 0
    %440 = vmatmul.mubr.bf16.gmra.mrb[0].mxu0 %v354
    %v441 = vpop.f32.mrb[0].mxu0
    %v442 = vadd.f32 %v308, %v441
    %v443 = vpop.f32.mrb[0].mxu0
    %v444 = vpop.f32.mrb[0].mxu0
    %v445 = vadd.f32 %v308, %v444
    %v446 = vpop.f32.mrb[0].mxu0
    %447 = vmatprep.mubr.bf16.mxu0 0
    %448 = vmatmul.mubr.bf16.gmra.mrb[0].mxu0 %v357
    %v449 = vpop.f32.mrb[0].mxu0
    %v450 = vadd.f32 %v308, %v449
    %v451 = vpop.f32.mrb[0].mxu0
    %v452 = vpop.f32.mrb[0].mxu0
    %v453 = vadd.f32 %v308, %v452
    %v454 = vpop.f32.mrb[0].mxu0
    %455 = vdwg.mxu0
    %v456 = vsub.f32 0.0, %v394
    %v457 = vsub.f32 0.0, %v397
    %v458 = vsub.f32 0.0, %v402
    %v459 = vsub.f32 0.0, %v405
    %v460 = vsub.f32 0.0, %v410
    %v461 = vsub.f32 0.0, %v413
    %v462 = vsub.f32 0.0, %v418
    %v463 = vsub.f32 0.0, %v421
    %v464 = vsub.f32 0.0, %v426
    %v465 = vsub.f32 0.0, %v429
    %v466 = vsub.f32 0.0, %v434
    %v467 = vsub.f32 0.0, %v437
    %v468 = vsub.f32 0.0, %v442
    %v469 = vsub.f32 0.0, %v445
    %v470 = vsub.f32 0.0, %v450
    %v471 = vsub.f32 0.0, %v453
    %v472 = vmul.f32 %v456, 1.442695
    %v473 = vpow.pop %v472
    %v474 = vmul.f32 %v457, 1.442695
    %v475 = vpow.pop %v474
    %v476 = vmul.f32 %v458, 1.442695
    %v477 = vpow.pop %v476
    %v478 = vmul.f32 %v459, 1.442695
    %v479 = vpow.pop %v478
    %v480 = vmul.f32 %v460, 1.442695
    %v481 = vpow.pop %v480
    %v482 = vmul.f32 %v461, 1.442695
    %v483 = vpow.pop %v482
    %v484 = vmul.f32 %v462, 1.442695
    %v485 = vpow.pop %v484
    %v486 = vmul.f32 %v463, 1.442695
    %v487 = vpow.pop %v486
    %v488 = vmul.f32 %v464, 1.442695
    %v489 = vpow.pop %v488
    %v490 = vmul.f32 %v465, 1.442695
    %v491 = vpow.pop %v490
    %v492 = vmul.f32 %v466, 1.442695
    %v493 = vpow.pop %v492
    %v494 = vmul.f32 %v467, 1.442695
    %v495 = vpow.pop %v494
    %v496 = vmul.f32 %v468, 1.442695
    %v497 = vpow.pop %v496
    %v498 = vmul.f32 %v469, 1.442695
    %v499 = vpow.pop %v498
    %v500 = vmul.f32 %v470, 1.442695
    %v501 = vpow.pop %v500
    %v502 = vmul.f32 %v471, 1.442695
    %v503 = vpow.pop %v502
    %v504 = vadd.f32 %v473, 1.0
    %v505 = vadd.f32 %v475, 1.0
    %v506 = vadd.f32 %v477, 1.0
    %v507 = vadd.f32 %v479, 1.0
    %v508 = vadd.f32 %v481, 1.0
    %v509 = vadd.f32 %v483, 1.0
    %v510 = vadd.f32 %v485, 1.0
    %v511 = vadd.f32 %v487, 1.0
    %v512 = vadd.f32 %v489, 1.0
    %v513 = vadd.f32 %v491, 1.0
    %v514 = vadd.f32 %v493, 1.0
    %v515 = vadd.f32 %v495, 1.0
    %v516 = vadd.f32 %v497, 1.0
    %v517 = vadd.f32 %v499, 1.0
    %v518 = vadd.f32 %v501, 1.0
    %v519 = vadd.f32 %v503, 1.0
    %v520 = vrcp.pop %v504
    %v521 = vrcp.pop %v505
    %v522 = vrcp.pop %v506
    %v523 = vrcp.pop %v507
    %v524 = vrcp.pop %v508
    %v525 = vrcp.pop %v509
    %v526 = vrcp.pop %v510
    %v527 = vrcp.pop %v511
    %v528 = vrcp.pop %v512
    %v529 = vrcp.pop %v513
    %v530 = vrcp.pop %v514
    %v531 = vrcp.pop %v515
    %v532 = vrcp.pop %v516
    %v533 = vrcp.pop %v517
    %v534 = vrcp.pop %v518
    %v535 = vrcp.pop %v519
    %v536 = vmul.f32 %v394, %v520
    %v537 = vmul.f32 %v397, %v521
    %v538 = vmul.f32 %v402, %v522
    %v539 = vmul.f32 %v405, %v523
    %v540 = vmul.f32 %v410, %v524
    %v541 = vmul.f32 %v413, %v525
    %v542 = vmul.f32 %v418, %v526
    %v543 = vmul.f32 %v421, %v527
    %v544 = vmul.f32 %v426, %v528
    %v545 = vmul.f32 %v429, %v529
    %v546 = vmul.f32 %v434, %v530
    %v547 = vmul.f32 %v437, %v531
    %v548 = vmul.f32 %v442, %v532
    %v549 = vmul.f32 %v445, %v533
    %v550 = vmul.f32 %v450, %v534
    %v551 = vmul.f32 %v453, %v535
    %v552 = vsub.f32 0.0, %v536
    %v553 = vsub.f32 0.0, %v537
    %v554 = vsub.f32 0.0, %v538
    %v555 = vsub.f32 0.0, %v539
    %v556 = vsub.f32 0.0, %v540
    %v557 = vsub.f32 0.0, %v541
    %v558 = vsub.f32 0.0, %v542
    %v559 = vsub.f32 0.0, %v543
    %v560 = vsub.f32 0.0, %v544
    %v561 = vsub.f32 0.0, %v545
    %v562 = vsub.f32 0.0, %v546
    %v563 = vsub.f32 0.0, %v547
    %v564 = vsub.f32 0.0, %v548
    %v565 = vsub.f32 0.0, %v549
    %v566 = vsub.f32 0.0, %v550
    %v567 = vsub.f32 0.0, %v551
    %v568 = vmul.f32 %v552, 1.442695
    %v569 = vpow.pop %v568
    %v570 = vmul.f32 %v553, 1.442695
    %v571 = vpow.pop %v570
    %v572 = vmul.f32 %v554, 1.442695
    %v573 = vpow.pop %v572
    %v574 = vmul.f32 %v555, 1.442695
    %v575 = vpow.pop %v574
    %v576 = vmul.f32 %v556, 1.442695
    %v577 = vpow.pop %v576
    %v578 = vmul.f32 %v557, 1.442695
    %v579 = vpow.pop %v578
    %v580 = vmul.f32 %v558, 1.442695
    %v581 = vpow.pop %v580
    %v582 = vmul.f32 %v559, 1.442695
    %v583 = vpow.pop %v582
    %v584 = vmul.f32 %v560, 1.442695
    %v585 = vpow.pop %v584
    %v586 = vmul.f32 %v561, 1.442695
    %v587 = vpow.pop %v586
    %v588 = vmul.f32 %v562, 1.442695
    %v589 = vpow.pop %v588
    %v590 = vmul.f32 %v563, 1.442695
    %v591 = vpow.pop %v590
    %v592 = vmul.f32 %v564, 1.442695
    %v593 = vpow.pop %v592
    %v594 = vmul.f32 %v565, 1.442695
    %v595 = vpow.pop %v594
    %v596 = vmul.f32 %v566, 1.442695
    %v597 = vpow.pop %v596
    %v598 = vmul.f32 %v567, 1.442695
    %v599 = vpow.pop %v598
    %v600 = vadd.f32 %v569, 1.0
    %v601 = vadd.f32 %v571, 1.0
    %v602 = vadd.f32 %v573, 1.0
    %v603 = vadd.f32 %v575, 1.0
    %v604 = vadd.f32 %v577, 1.0
    %v605 = vadd.f32 %v579, 1.0
    %v606 = vadd.f32 %v581, 1.0
    %v607 = vadd.f32 %v583, 1.0
    %v608 = vadd.f32 %v585, 1.0
    %v609 = vadd.f32 %v587, 1.0
    %v610 = vadd.f32 %v589, 1.0
    %v611 = vadd.f32 %v591, 1.0
    %v612 = vadd.f32 %v593, 1.0
    %v613 = vadd.f32 %v595, 1.0
    %v614 = vadd.f32 %v597, 1.0
    %v615 = vadd.f32 %v599, 1.0
    %v616 = vrcp.pop %v600
    %v617 = vrcp.pop %v601
    %v618 = vrcp.pop %v602
    %v619 = vrcp.pop %v603
    %v620 = vrcp.pop %v604
    %v621 = vrcp.pop %v605
    %v622 = vrcp.pop %v606
    %v623 = vrcp.pop %v607
    %v624 = vrcp.pop %v608
    %v625 = vrcp.pop %v609
    %v626 = vrcp.pop %v610
    %v627 = vrcp.pop %v611
    %v628 = vrcp.pop %v612
    %v629 = vrcp.pop %v613
    %v630 = vrcp.pop %v614
    %v631 = vrcp.pop %v615
    %632 = vst.msk [vmem:[#allocation2] sm:$0xff] %vm334, %v616
    %633 = vst.msk [vmem:[#allocation2 + $0x8] sm:$0xff] %vm334, %v617
    %634 = vst.msk [vmem:[#allocation2 + $0x10] sm:$0xff] %vm334, %v618
    %635 = vst.msk [vmem:[#allocation2 + $0x18] sm:$0xff] %vm334, %v619
    %636 = vst.msk [vmem:[#allocation2 + $0x20] sm:$0xff] %vm334, %v620
    %637 = vst.msk [vmem:[#allocation2 + $0x28] sm:$0xff] %vm334, %v621
    %638 = vst.msk [vmem:[#allocation2 + $0x30] sm:$0xff] %vm334, %v622
    %639 = vst.msk [vmem:[#allocation2 + $0x38] sm:$0xff] %vm334, %v623
    %640 = vst.msk [vmem:[#allocation2 + $0x40] sm:$0xff] %vm334, %v624
    %641 = vst.msk [vmem:[#allocation2 + $0x48] sm:$0xff] %vm334, %v625
    %642 = vst.msk [vmem:[#allocation2 + $0x50] sm:$0xff] %vm334, %v626
    %643 = vst.msk [vmem:[#allocation2 + $0x58] sm:$0xff] %vm334, %v627
    %644 = vst.msk [vmem:[#allocation2 + $0x60] sm:$0xff] %vm334, %v628
    %645 = vst.msk [vmem:[#allocation2 + $0x68] sm:$0xff] %vm334, %v629
    %646 = vst.msk [vmem:[#allocation2 + $0x70] sm:$0xff] %vm334, %v630
    %647 = vst.msk [vmem:[#allocation2 + $0x78] sm:$0xff] %vm334, %v631
    // Predicated region
    $region22: #{csp_darknet_forward.5} parent=1 // pred_check
      _
    $region23: #{csp_darknet_forward.5} parent=1 // pred_check_branch
      %649 = sbr.rel (0) target = $region25
    $region24: #{csp_darknet_forward.5} parent=1 // pred_region
      %s651 = ssub.s32 2048, 2048
      %652 = vsyncadd [#allocation3], %s651
      %s653 = sshll.u32 [#allocation2], 4
      %s654 = int_to_ptr.vmem [resolvable:$true] %s653
      %659 = dma.vmem_to_hbm [thread:$0]  %s654, 2048, %s5, [#allocation3], 128, 128, 8
    $region25: #{csp_darknet_forward.5} parent=1 // pred_fallthru
      _
    // Predicated region
    $region26: #{csp_darknet_forward.5} parent=1 // pred_check
      _
    $region27: #{csp_darknet_forward.5} parent=1 // pred_check_branch
      %661 = sbr.rel (0) target = $region29
    $region28: #{csp_darknet_forward.5} parent=1 // pred_region
      %662 = dma.done [#allocation3], 2048
    $region29: #{csp_darknet_forward.5} parent=1 // pred_fallthru
      _
    %663 = vsyncpa [#allocation3], 1

// kernel: csp_darknet_forward.4
$region0: #{csp_darknet_forward.4}
  #allocation0 [shape = 'u32[]', space=smem, size = 0x4, offset = 0x4, fixed_abs, tag = 'smem constant byte address 0x4 - core index']
  #allocation1 [shape = 'u32[144,128]{1,0:T(1,128)}', space=vmem, size = 0x12000, scoped, tag = 'internal scratch']
  %s0 = inlined_call_operand.vmem [shape: f32[2,352,16], index: 0, kind: input, shape index: {}]
  %s1 = inlined_call_operand.vmem [shape: bf16[144,32], index: 1, kind: input, shape index: {}]
  %s2 = inlined_call_operand.vmem [shape: f32[1,32], index: 2, kind: input, shape index: {}]
  %s3 = inlined_call_operand.vmem [shape: f32[2,72,32], index: 3, kind: output, shape index: {}]
  %s4 = sld [smem:[#allocation0]]
  $region45: #{csp_darknet_forward.4} parent=0
    _
  %s6 = ssub.s32 1, %s4
  %s7 = scalar_select 0, %s6, %s4
  loop: start=0, step=1, limit=4
  $region2: #{csp_darknet_forward.4} parent=0 // loop_pre_header
    _
  $region3: #{csp_darknet_forward.4} parent=0 // loop_header
    %s9 = sphi 0, %s13
    %p10 = scmp.ge.s32.totalorder %s9, 4
    %s19 = sphi 0, %s21
    %s22 = sphi 0, %s19
    %s23 = sphi 0, %s22
    %s39 = sphi 0, %s23
    %s43 = sphi 0, %s43
    %s45 = sphi 0, %s43
    %s46 = sphi 0, %s45
    %s60 = sphi 0, %s46
    %s64 = sphi 0, %s64
    %s66 = sphi 0, %s64
    %s67 = sphi 0, %s66
    %s81 = sphi 0, %s67
    %s87 = sphi 0, %s89
    %s90 = sphi 0, %s87
    %s91 = sphi 0, %s90
    %s107 = sphi 0, %s91
  $region4: #{csp_darknet_forward.4} parent=0 // loop_header_branch
    %12 = sbr.rel (%p10) target = $region8
  $region5: #{csp_darknet_forward.4} parent=0 // loop_body
    %s14 = ssub.s32 %s9, 1
    %s15 = ssub.s32 %s9, 2
    %s16 = sadd.s32 %s9, 1
    %s17 = ssub.s32 %s9, %s16
    %p18 = scmp.eq.s32.totalorder %s17, 0
    %s20 = sadd.s32 %s19, 1
    %s21 = scalar_select %p18, %s19, %s20
    %p24 = pneg %p18
    %p25 = scmp.eq.s32.totalorder %s9, 1
    %p26 = por %p24, %p25
    %p27 = scmp.ne.s32.totalorder %s19, %s22
    %p28 = scmp.eq.s32.totalorder %s9, 0
    %p29 = por %p27, %p28
    %p30 = scmp.ne.s32.totalorder %s19, %s22
    %p31 = scmp.eq.s32.totalorder %s14, 1
    %p32 = por %p30, %p31
    %p33 = scmp.ne.s32.totalorder %s22, %s23
    %p34 = scmp.eq.s32.totalorder %s14, 0
    %p35 = por %p33, %p34
    %p36 = scmp.ne.s32.totalorder %s22, %s23
    %p37 = scmp.eq.s32.totalorder %s15, 1
    %p38 = por %p36, %p37
    %p40 = scmp.ne.s32.totalorder %s23, %s39
    %p41 = scmp.eq.s32.totalorder %s15, 0
    %p42 = por %p40, %p41
    %s44 = sadd.s32 %s43, 1
    %p47 = scmp.eq.s32.totalorder %s9, 1
    %p48 = scmp.ne.s32.totalorder %s43, %s45
    %p49 = scmp.eq.s32.totalorder %s9, 0
    %p50 = por %p48, %p49
    %p51 = scmp.ne.s32.totalorder %s43, %s45
    %p52 = scmp.eq.s32.totalorder %s14, 1
    %p53 = por %p51, %p52
    %p54 = scmp.ne.s32.totalorder %s45, %s46
    %p55 = scmp.eq.s32.totalorder %s14, 0
    %p56 = por %p54, %p55
    %p57 = scmp.ne.s32.totalorder %s45, %s46
    %p58 = scmp.eq.s32.totalorder %s15, 1
    %p59 = por %p57, %p58
    %p61 = scmp.ne.s32.totalorder %s46, %s60
    %p62 = scmp.eq.s32.totalorder %s15, 0
    %p63 = por %p61, %p62
    %s65 = sadd.s32 %s64, 1
    %p68 = scmp.eq.s32.totalorder %s9, 1
    %p69 = scmp.ne.s32.totalorder %s64, %s66
    %p70 = scmp.eq.s32.totalorder %s9, 0
    %p71 = por %p69, %p70
    %p72 = scmp.ne.s32.totalorder %s64, %s66
    %p73 = scmp.eq.s32.totalorder %s14, 1
    %p74 = por %p72, %p73
    %p75 = scmp.ne.s32.totalorder %s66, %s67
    %p76 = scmp.eq.s32.totalorder %s14, 0
    %p77 = por %p75, %p76
    %p78 = scmp.ne.s32.totalorder %s66, %s67
    %p79 = scmp.eq.s32.totalorder %s15, 1
    %p80 = por %p78, %p79
    %p82 = scmp.ne.s32.totalorder %s67, %s81
    %p83 = scmp.eq.s32.totalorder %s15, 0
    %p84 = por %p82, %p83
    %s85 = ssub.s32 %s9, %s16
    %p86 = scmp.eq.s32.totalorder %s85, 0
    %s88 = sadd.s32 %s87, 1
    %s89 = scalar_select %p86, %s87, %s88
    %p92 = pneg %p86
    %p93 = scmp.eq.s32.totalorder %s9, 1
    %p94 = por %p92, %p93
    %p95 = scmp.ne.s32.totalorder %s87, %s90
    %p96 = scmp.eq.s32.totalorder %s9, 0
    %p97 = por %p95, %p96
    %p98 = scmp.ne.s32.totalorder %s87, %s90
    %p99 = scmp.eq.s32.totalorder %s14, 1
    %p100 = por %p98, %p99
    %p101 = scmp.ne.s32.totalorder %s90, %s91
    %p102 = scmp.eq.s32.totalorder %s14, 0
    %p103 = por %p101, %p102
    %p104 = scmp.ne.s32.totalorder %s90, %s91
    %p105 = scmp.eq.s32.totalorder %s15, 1
    %p106 = por %p104, %p105
    %p108 = scmp.ne.s32.totalorder %s91, %s107
    %p109 = scmp.eq.s32.totalorder %s15, 0
    %p110 = por %p108, %p109
    %p111 = scmp.le.s32.totalorder 1, %s9
    %p112 = scmp.lt.s32.totalorder %s9, 3
    %p113 = pnand %p111, %p112
    %p114 = pneg %p113
    // Predicated region
    $region9: #{csp_darknet_forward.4} parent=5 // pred_check
      _
    $region10: #{csp_darknet_forward.4} parent=5 // pred_check_branch
      %116 = sbr.rel (%p113) target = $region12
    $region11: #{csp_darknet_forward.4} parent=5 // pred_region
      %s117 = ssub.s32 %s9, 1
      // Predicated region
      $region13: #{csp_darknet_forward.4} parent=11 // pred_check
        %p118 = pneg %p56
      $region14: #{csp_darknet_forward.4} parent=11 // pred_check_branch
        %120 = sbr.rel (%p118) target = $region16
      $region15: #{csp_darknet_forward.4} parent=11 // pred_region
        _
      $region16: #{csp_darknet_forward.4} parent=11 // pred_fallthru
        _
      // Predicated region
      $region17: #{csp_darknet_forward.4} parent=11 // pred_check
        %p121 = pneg %p77
      $region18: #{csp_darknet_forward.4} parent=11 // pred_check_branch
        %123 = sbr.rel (%p121) target = $region20
      $region19: #{csp_darknet_forward.4} parent=11 // pred_region
        _
      $region20: #{csp_darknet_forward.4} parent=11 // pred_fallthru
        _
    $region12: #{csp_darknet_forward.4} parent=5 // pred_fallthru
      _
    %p124 = scmp.lt.s32.totalorder %s9, 2
    // Predicated region
    $region21: #{csp_darknet_forward.4} parent=5 // pred_check
      %p125 = pneg %p124
    $region22: #{csp_darknet_forward.4} parent=5 // pred_check_branch
      %127 = sbr.rel (%p125) target = $region24
    $region23: #{csp_darknet_forward.4} parent=5 // pred_region
      // Predicated region
      $region25: #{csp_darknet_forward.4} parent=23 // pred_check
        %p128 = pneg %p29
      $region26: #{csp_darknet_forward.4} parent=23 // pred_check_branch
        %130 = sbr.rel (%p128) target = $region28
      $region27: #{csp_darknet_forward.4} parent=23 // pred_region
        %p131 = scmp.lt.s32.totalorder %s9, 1
        %s132 = scalar_select %p131, %s9, 1
        %s133 = smul.addr %s132, 44
        %s134 = smul.addr %s133, 8
        %s135 = scalar_lea.vmem %s0, %s134
      $region28: #{csp_darknet_forward.4} parent=23 // pred_fallthru
        _
    $region24: #{csp_darknet_forward.4} parent=5 // pred_fallthru
      _
    %p136 = scmp.le.s32.totalorder 1, %s9
    %p137 = scmp.lt.s32.totalorder %s9, 3
    %p138 = pnand %p136, %p137
    %p139 = pneg %p138
    // Predicated region
    $region29: #{csp_darknet_forward.4} parent=5 // pred_check
      _
    $region30: #{csp_darknet_forward.4} parent=5 // pred_check_branch
      %141 = sbr.rel (%p138) target = $region32
    $region31: #{csp_darknet_forward.4} parent=5 // pred_region
      %s142 = ssub.s32 %s9, 1
      %p143 = scmp.lt.s32.totalorder %s14, 1
      %s144 = scalar_select %p143, %s14, 1
      %s145 = smul.addr %s144, 44
      %s146 = smul.addr %s145, 8
      %s147 = scalar_lea.vmem %s0, %s146
      %p148 = pneg %p35
      %p149 = pneg %p32
      %p150 = pneg %p56
      %p151 = pneg %p53
      %p152 = pneg %p77
      %p153 = pneg %p74
      %p154 = pneg %p103
      %p155 = pneg %p100
      %p156 = scmp.lt.s32.totalorder %s14, 1
      %s157 = scalar_select %p156, %s14, 1
      %s158 = smul.addr %s157, 9
      %s159 = smul.addr %s158, 8
      %s160 = scalar_lea.vmem %s3, %s159
      %p161 = scmp.lt.s32.totalorder %s14, 1
      %s162 = scalar_select %p161, %s14, 1
      %s163 = smul.addr %s162, 44
      %s164 = smul.addr %s163, 8
      %s165 = scalar_lea.vmem %s0, %s164
      %p166 = scmp.lt.s32.totalorder %s14, 1
      %s167 = scalar_select %p166, %s14, 1
      %s168 = smul.addr %s167, 9
      %s169 = smul.addr %s168, 8
      %s170 = scalar_lea.vmem %s3, %s169
      %v172 = vld [vmem:[%s165] sm:$0xff]
      %v173 = vld [vmem:[%s165 + $0x8] sm:$0xff]
      %v174 = vld [vmem:[%s165 + $0x10] sm:$0xff]
      %v175 = vld [vmem:[%s165 + $0x18] sm:$0xff]
      %v176 = vld [vmem:[%s165 + $0x20] sm:$0xff]
      %v177 = vld [vmem:[%s165 + $0x28] sm:$0xff]
      %v178 = vld [vmem:[%s165 + $0x30] sm:$0xff]
      %v179 = vld [vmem:[%s165 + $0x38] sm:$0xff]
      %v180 = vld [vmem:[%s165 + $0x40] sm:$0xff]
      %v181 = vpack.c.bf16 %v173, %v172
      %v182 = vpack.c.bf16 %v175, %v174
      %v183 = vpack.c.bf16 %v177, %v176
      %v184 = vpack.c.bf16 %v179, %v178
      %v185 = vpack.c.bf16 %v180, %v180
      %v186 = vld [vmem:[%s1] sm:$0xf]
      %v187 = vld [vmem:[%s1 + $0x4] sm:$0xf]
      %v188 = vld [vmem:[%s165 + $0x58] sm:$0xff]
      %v189 = vld [vmem:[%s165 + $0x60] sm:$0xff]
      %v190 = vld [vmem:[%s165 + $0x68] sm:$0xff]
      %v191 = vld [vmem:[%s165 + $0x70] sm:$0xff]
      %v192 = vld [vmem:[%s165 + $0x78] sm:$0xff]
      %v193 = vld [vmem:[%s165 + $0x80] sm:$0xff]
      %v194 = vld [vmem:[%s165 + $0x88] sm:$0xff]
      %v195 = vld [vmem:[%s165 + $0x90] sm:$0xff]
      %v196 = vld [vmem:[%s165 + $0x98] sm:$0xff]
      %v197 = vpack.c.bf16 %v189, %v188
      %v198 = vpack.c.bf16 %v191, %v190
      %v199 = vpack.c.bf16 %v193, %v192
      %v200 = vpack.c.bf16 %v195, %v194
      %v201 = vpack.c.bf16 %v196, %v196
      %v202 = vld [vmem:[%s1 + $0x8] sm:$0xf]
      %v203 = vld [vmem:[%s1 + $0xc] sm:$0xf]
      %v206 = vunpack.c.l.b16 %v202
      %v207 = vunpack.c.l.b16 %v203
      %v208 = vpack.c.b16 %v207, %v206
      %vm210 = vcmask 130048
      %v212 = vsel %vm210, %v197, 0
      %v215 = vsel %vm210, %v198, 0
      %v218 = vsel %vm210, %v199, 0
      %v221 = vsel %vm210, %v200, 0
      %v224 = vsel %vm210, %v201, 0
      %226 = vmatprep.subr.bf16.mxu0 0
      %227 = vmatpush1.bf16.msra.mxu0 %v208
      %228 = vmatprep.subr.bf16.mxu0 0
      %229 = vmatpush1.bf16.msra.mxu0 0
      %230 = vmatprep.subr.bf16.mxu0 0
      %231 = vmatpush1.bf16.msra.mxu0 0
      %232 = vmatprep.subr.bf16.mxu0 0
      %233 = vmatpush1.bf16.msra.mxu0 0
      %234 = vmatprep.subr.bf16.mxu0 0
      %235 = vmatpush1.bf16.msra.mxu0 0
      %236 = vmatprep.subr.bf16.mxu0 0
      %237 = vmatpush1.bf16.msra.mxu0 0
      %238 = vmatprep.subr.bf16.mxu0 0
      %239 = vmatpush1.bf16.msra.mxu0 0
      %240 = vmatprep.subr.bf16.mxu0 0
      %241 = vmatpush1.bf16.msra.mxu0 0
      %242 = vmatprep.subr.bf16.mxu0 0
      %243 = vmatpush1.bf16.msra.mxu0 0
      %244 = vmatprep.subr.bf16.mxu0 0
      %245 = vmatpush1.bf16.msra.mxu0 0
      %246 = vmatprep.subr.bf16.mxu0 0
      %247 = vmatpush1.bf16.msra.mxu0 0
      %248 = vmatprep.subr.bf16.mxu0 0
      %249 = vmatpush1.bf16.msra.mxu0 0
      %250 = vmatprep.subr.bf16.mxu0 0
      %251 = vmatpush1.bf16.msra.mxu0 0
      %252 = vmatprep.subr.bf16.mxu0 0
      %253 = vmatpush1.bf16.msra.mxu0 0
      %254 = vmatprep.subr.bf16.mxu0 0
      %255 = vmatpush1.bf16.msra.mxu0 0
      %256 = vmatprep.subr.bf16.mxu0 0
      %257 = vmatpush1.bf16.msra.mxu0 0
      %258 = vmatprep.mubr.bf16.mxu0 0
      %259 = vmatmul.mubr.bf16.gmra.mrb[0].mxu0 %v212
      %v260 = vpop.f32.mrb[0].mxu0
      %v261 = vadd.f32 0.0, %v260
      %v262 = vpop.f32.mrb[0].mxu0
      %v263 = vpop.f32.mrb[0].mxu0
      %v264 = vadd.f32 0.0, %v263
      %v265 = vpop.f32.mrb[0].mxu0
      %266 = vmatprep.mubr.bf16.mxu0 0
      %267 = vmatmul.mubr.bf16.gmra.mrb[0].mxu0 %v215
      %v268 = vpop.f32.mrb[0].mxu0
      %v269 = vadd.f32 0.0, %v268
      %v270 = vpop.f32.mrb[0].mxu0
      %v271 = vpop.f32.mrb[0].mxu0
      %v272 = vadd.f32 0.0, %v271
      %v273 = vpop.f32.mrb[0].mxu0
      %274 = vmatprep.mubr.bf16.mxu0 0
      %275 = vmatmul.mubr.bf16.gmra.mrb[0].mxu0 %v218
      %v276 = vpop.f32.mrb[0].mxu0
      %v277 = vadd.f32 0.0, %v276
      %v278 = vpop.f32.mrb[0].mxu0
      %v279 = vpop.f32.mrb[0].mxu0
      %v280 = vadd.f32 0.0, %v279
      %v281 = vpop.f32.mrb[0].mxu0
      %282 = vmatprep.mubr.bf16.mxu0 0
      %283 = vmatmul.mubr.bf16.gmra.mrb[0].mxu0 %v221
      %v284 = vpop.f32.mrb[0].mxu0
      %v285 = vadd.f32 0.0, %v284
      %v286 = vpop.f32.mrb[0].mxu0
      %v287 = vpop.f32.mrb[0].mxu0
      %v288 = vadd.f32 0.0, %v287
      %v289 = vpop.f32.mrb[0].mxu0
      %290 = vmatprep.mubr.bf16.mxu0 0
      %291 = vmatmul.mubr.bf16.gmra.mrb[0].mxu0 %v224
      %v292 = vpop.f32.mrb[0].mxu0
      %v293 = vadd.f32 0.0, %v292
      %v294 = vpop.f32.mrb[0].mxu0
      %v295 = vpop.f32.mrb[0].mxu0
      %v296 = vpop.f32.mrb[0].mxu0
      %297 = vdwg.mxu0
      %v300 = vunpack.c.l.b16 %v186
      %v301 = vunpack.c.l.b16 %v187
      %v302 = vpack.c.b16 %v301, %v300
      %v305 = vsel %vm210, %v181, 0
      %v308 = vsel %vm210, %v182, 0
      %v311 = vsel %vm210, %v183, 0
      %v314 = vsel %vm210, %v184, 0
      %v317 = vsel %vm210, %v185, 0
      %319 = vmatprep.subr.bf16.mxu0 0
      %320 = vmatpush1.bf16.msra.mxu0 %v302
      %321 = vmatprep.subr.bf16.mxu0 0
      %322 = vmatpush1.bf16.msra.mxu0 0
      %323 = vmatprep.subr.bf16.mxu0 0
      %324 = vmatpush1.bf16.msra.mxu0 0
      %325 = vmatprep.subr.bf16.mxu0 0
      %326 = vmatpush1.bf16.msra.mxu0 0
      %327 = vmatprep.subr.bf16.mxu0 0
      %328 = vmatpush1.bf16.msra.mxu0 0
      %329 = vmatprep.subr.bf16.mxu0 0
      %330 = vmatpush1.bf16.msra.mxu0 0
      %331 = vmatprep.subr.bf16.mxu0 0
      %332 = vmatpush1.bf16.msra.mxu0 0
      %333 = vmatprep.subr.bf16.mxu0 0
      %334 = vmatpush1.bf16.msra.mxu0 0
      %335 = vmatprep.subr.bf16.mxu0 0
      %336 = vmatpush1.bf16.msra.mxu0 0
      %337 = vmatprep.subr.bf16.mxu0 0
      %338 = vmatpush1.bf16.msra.mxu0 0
      %339 = vmatprep.subr.bf16.mxu0 0
      %340 = vmatpush1.bf16.msra.mxu0 0
      %341 = vmatprep.subr.bf16.mxu0 0
      %342 = vmatpush1.bf16.msra.mxu0 0
      %343 = vmatprep.subr.bf16.mxu0 0
      %344 = vmatpush1.bf16.msra.mxu0 0
      %345 = vmatprep.subr.bf16.mxu0 0
      %346 = vmatpush1.bf16.msra.mxu0 0
      %347 = vmatprep.subr.bf16.mxu0 0
      %348 = vmatpush1.bf16.msra.mxu0 0
      %349 = vmatprep.subr.bf16.mxu0 0
      %350 = vmatpush1.bf16.msra.mxu0 0
      %351 = vmatprep.mubr.bf16.mxu0 0
      %352 = vmatmul.mubr.bf16.gmra.mrb[0].mxu0 %v305
      %v353 = vpop.f32.mrb[0].mxu0
      %v354 = vadd.f32 %v261, %v353
      %v355 = vpop.f32.mrb[0].mxu0
      %v356 = vpop.f32.mrb[0].mxu0
      %v357 = vadd.f32 %v264, %v356
      %v358 = vpop.f32.mrb[0].mxu0
      %359 = vmatprep.mubr.bf16.mxu0 0
      %360 = vmatmul.mubr.bf16.gmra.mrb[0].mxu0 %v308
      %v361 = vpop.f32.mrb[0].mxu0
      %v362 = vadd.f32 %v269, %v361
      %v363 = vpop.f32.mrb[0].mxu0
      %v364 = vpop.f32.mrb[0].mxu0
      %v365 = vadd.f32 %v272, %v364
      %v366 = vpop.f32.mrb[0].mxu0
      %367 = vmatprep.mubr.bf16.mxu0 0
      %368 = vmatmul.mubr.bf16.gmra.mrb[0].mxu0 %v311
      %v369 = vpop.f32.mrb[0].mxu0
      %v370 = vadd.f32 %v277, %v369
      %v371 = vpop.f32.mrb[0].mxu0
      %v372 = vpop.f32.mrb[0].mxu0
      %v373 = vadd.f32 %v280, %v372
      %v374 = vpop.f32.mrb[0].mxu0
      %375 = vmatprep.mubr.bf16.mxu0 0
      %376 = vmatmul.mubr.bf16.gmra.mrb[0].mxu0 %v314
      %v377 = vpop.f32.mrb[0].mxu0
      %v378 = vadd.f32 %v285, %v377
      %v379 = vpop.f32.mrb[0].mxu0
      %v380 = vpop.f32.mrb[0].mxu0
      %v381 = vadd.f32 %v288, %v380
      %v382 = vpop.f32.mrb[0].mxu0
      %383 = vmatprep.mubr.bf16.mxu0 0
      %384 = vmatmul.mubr.bf16.gmra.mrb[0].mxu0 %v317
      %v385 = vpop.f32.mrb[0].mxu0
      %v386 = vadd.f32 %v293, %v385
      %v387 = vpop.f32.mrb[0].mxu0
      %v388 = vpop.f32.mrb[0].mxu0
      %v389 = vpop.f32.mrb[0].mxu0
      %390 = vdwg.mxu0
      %v391 = vld [vmem:[%s165 + $0x1] sm:$0xff]
      %v392 = vld [vmem:[%s165 + $0x9] sm:$0xff]
      %v393 = vld [vmem:[%s165 + $0x11] sm:$0xff]
      %v394 = vld [vmem:[%s165 + $0x19] sm:$0xff]
      %v395 = vld [vmem:[%s165 + $0x21] sm:$0xff]
      %v396 = vld [vmem:[%s165 + $0x29] sm:$0xff]
      %v397 = vld [vmem:[%s165 + $0x31] sm:$0xff]
      %v398 = vld [vmem:[%s165 + $0x39] sm:$0xff]
      %v399 = vld [vmem:[%s165 + $0x41] sm:$0xff]
      %v400 = vpack.c.bf16 %v392, %v391
      %v401 = vpack.c.bf16 %v394, %v393
      %v402 = vpack.c.bf16 %v396, %v395
      %v403 = vpack.c.bf16 %v398, %v397
      %v404 = vpack.c.bf16 %v399, %v399
      %v405 = vld [vmem:[%s1 + $0x10] sm:$0xf]
      %v406 = vld [vmem:[%s1 + $0x14] sm:$0xf]
      %v409 = vunpack.c.l.b16 %v405
      %v410 = vunpack.c.l.b16 %v406
      %v411 = vpack.c.b16 %v410, %v409
      %v414 = vsel %vm210, %v400, 0
      %v417 = vsel %vm210, %v401, 0
      %v420 = vsel %vm210, %v402, 0
      %v423 = vsel %vm210, %v403, 0
      %v426 = vsel %vm210, %v404, 0
      %428 = vmatprep.subr.bf16.mxu0 0
      %429 = vmatpush1.bf16.msra.mxu0 %v411
      %430 = vmatprep.subr.bf16.mxu0 0
      %431 = vmatpush1.bf16.msra.mxu0 0
      %432 = vmatprep.subr.bf16.mxu0 0
      %433 = vmatpush1.bf16.msra.mxu0 0
      %434 = vmatprep.subr.bf16.mxu0 0
      %435 = vmatpush1.bf16.msra.mxu0 0
      %436 = vmatprep.subr.bf16.mxu0 0
      %437 = vmatpush1.bf16.msra.mxu0 0
      %438 = vmatprep.subr.bf16.mxu0 0
      %439 = vmatpush1.bf16.msra.mxu0 0
      %440 = vmatprep.subr.bf16.mxu0 0
      %441 = vmatpush1.bf16.msra.mxu0 0
      %442 = vmatprep.subr.bf16.mxu0 0
      %443 = vmatpush1.bf16.msra.mxu0 0
      %444 = vmatprep.subr.bf16.mxu0 0
      %445 = vmatpush1.bf16.msra.mxu0 0
      %446 = vmatprep.subr.bf16.mxu0 0
      %447 = vmatpush1.bf16.msra.mxu0 0
      %448 = vmatprep.subr.bf16.mxu0 0
      %449 = vmatpush1.bf16.msra.mxu0 0
      %450 = vmatprep.subr.bf16.mxu0 0
      %451 = vmatpush1.bf16.msra.mxu0 0
      %452 = vmatprep.subr.bf16.mxu0 0
      %453 = vmatpush1.bf16.msra.mxu0 0
      %454 = vmatprep.subr.bf16.mxu0 0
      %455 = vmatpush1.bf16.msra.mxu0 0
      %456 = vmatprep.subr.bf16.mxu0 0
      %457 = vmatpush1.bf16.msra.mxu0 0
      %458 = vmatprep.subr.bf16.mxu0 0
      %459 = vmatpush1.bf16.msra.mxu0 0
      %460 = vmatprep.mubr.bf16.mxu0 0
      %461 = vmatmul.mubr.bf16.gmra.mrb[0].mxu0 %v414
      %v462 = vpop.f32.mrb[0].mxu0
      %v463 = vadd.f32 0.0, %v462
      %v464 = vpop.f32.mrb[0].mxu0
      %v465 = vpop.f32.mrb[0].mxu0
      %v466 = vadd.f32 0.0, %v465
      %v467 = vpop.f32.mrb[0].mxu0
      %468 = vmatprep.mubr.bf16.mxu0 0
      %469 = vmatmul.mubr.bf16.gmra.mrb[0].mxu0 %v417
      %v470 = vpop.f32.mrb[0].mxu0
      %v471 = vadd.f32 0.0, %v470
      %v472 = vpop.f32.mrb[0].mxu0
      %v473 = vpop.f32.mrb[0].mxu0
      %v474 = vadd.f32 0.0, %v473
      %v475 = vpop.f32.mrb[0].mxu0
      %476 = vmatprep.mubr.bf16.mxu0 0
      %477 = vmatmul.mubr.bf16.gmra.mrb[0].mxu0 %v420
      %v478 = vpop.f32.mrb[0].mxu0
      %v479 = vadd.f32 0.0, %v478
      %v480 = vpop.f32.mrb[0].mxu0
      %v481 = vpop.f32.mrb[0].mxu0
      %v482 = vadd.f32 0.0, %v481
      %v483 = vpop.f32.mrb[0].mxu0
      %484 = vmatprep.mubr.bf16.mxu0 0
      %485 = vmatmul.mubr.bf16.gmra.mrb[0].mxu0 %v423
      %v486 = vpop.f32.mrb[0].mxu0
      %v487 = vadd.f32 0.0, %v486
      %v488 = vpop.f32.mrb[0].mxu0
      %v489 = vpop.f32.mrb[0].mxu0
      %v490 = vadd.f32 0.0, %v489
      %v491 = vpop.f32.mrb[0].mxu0
      %492 = vmatprep.mubr.bf16.mxu0 0
      %493 = vmatmul.mubr.bf16.gmra.mrb[0].mxu0 %v426
      %v494 = vpop.f32.mrb[0].mxu0
      %v495 = vadd.f32 0.0, %v494
      %v496 = vpop.f32.mrb[0].mxu0
      %v497 = vpop.f32.mrb[0].mxu0
      %v498 = vpop.f32.mrb[0].mxu0
      %499 = vdwg.mxu0
      %v500 = vadd.f32 %v354, %v463
      %v501 = vadd.f32 %v357, %v466
      %v502 = vadd.f32 %v362, %v471
      %v503 = vadd.f32 %v365, %v474
      %v504 = vadd.f32 %v370, %v479
      %v505 = vadd.f32 %v373, %v482
      %v506 = vadd.f32 %v378, %v487
      %v507 = vadd.f32 %v381, %v490
      %v508 = vadd.f32 %v386, %v495
      %v509 = vld [vmem:[%s165 + $0xb0] sm:$0xff]
      %v510 = vld [vmem:[%s165 + $0xb8] sm:$0xff]
      %v511 = vld [vmem:[%s165 + $0xc0] sm:$0xff]
      %v512 = vld [vmem:[%s165 + $0xc8] sm:$0xff]
      %v513 = vld [vmem:[%s165 + $0xd0] sm:$0xff]
      %v514 = vld [vmem:[%s165 + $0xd8] sm:$0xff]
      %v515 = vld [vmem:[%s165 + $0xe0] sm:$0xff]
      %v516 = vld [vmem:[%s165 + $0xe8] sm:$0xff]
      %v517 = vld [vmem:[%s165 + $0xf0] sm:$0xff]
      %v518 = vpack.c.bf16 %v510, %v509
      %v519 = vpack.c.bf16 %v512, %v511
      %v520 = vpack.c.bf16 %v514, %v513
      %v521 = vpack.c.bf16 %v516, %v515
      %v522 = vpack.c.bf16 %v517, %v517
      %v523 = vld [vmem:[%s1 + $0x18] sm:$0xf]
      %v524 = vld [vmem:[%s1 + $0x1c] sm:$0xf]
      %v527 = vunpack.c.l.b16 %v523
      %v528 = vunpack.c.l.b16 %v524
      %v529 = vpack.c.b16 %v528, %v527
      %v532 = vsel %vm210, %v518, 0
      %v535 = vsel %vm210, %v519, 0
      %v538 = vsel %vm210, %v520, 0
      %v541 = vsel %vm210, %v521, 0
      %v544 = vsel %vm210, %v522, 0
      %546 = vmatprep.subr.bf16.mxu0 0
      %547 = vmatpush1.bf16.msra.mxu0 %v529
      %548 = vmatprep.subr.bf16.mxu0 0
      %549 = vmatpush1.bf16.msra.mxu0 0
      %550 = vmatprep.subr.bf16.mxu0 0
      %551 = vmatpush1.bf16.msra.mxu0 0
      %552 = vmatprep.subr.bf16.mxu0 0
      %553 = vmatpush1.bf16.msra.mxu0 0
      %554 = vmatprep.subr.bf16.mxu0 0
      %555 = vmatpush1.bf16.msra.mxu0 0
      %556 = vmatprep.subr.bf16.mxu0 0
      %557 = vmatpush1.bf16.msra.mxu0 0
      %558 = vmatprep.subr.bf16.mxu0 0
      %559 = vmatpush1.bf16.msra.mxu0 0
      %560 = vmatprep.subr.bf16.mxu0 0
      %561 = vmatpush1.bf16.msra.mxu0 0
      %562 = vmatprep.subr.bf16.mxu0 0
      %563 = vmatpush1.bf16.msra.mxu0 0
      %564 = vmatprep.subr.bf16.mxu0 0
      %565 = vmatpush1.bf16.msra.mxu0 0
      %566 = vmatprep.subr.bf16.mxu0 0
      %567 = vmatpush1.bf16.msra.mxu0 0
      %568 = vmatprep.subr.bf16.mxu0 0
      %569 = vmatpush1.bf16.msra.mxu0 0
      %570 = vmatprep.subr.bf16.mxu0 0
      %571 = vmatpush1.bf16.msra.mxu0 0
      %572 = vmatprep.subr.bf16.mxu0 0
      %573 = vmatpush1.bf16.msra.mxu0 0
      %574 = vmatprep.subr.bf16.mxu0 0
      %575 = vmatpush1.bf16.msra.mxu0 0
      %576 = vmatprep.subr.bf16.mxu0 0
      %577 = vmatpush1.bf16.msra.mxu0 0
      %578 = vmatprep.mubr.bf16.mxu0 0
      %579 = vmatmul.mubr.bf16.gmra.mrb[0].mxu0 %v532
      %v580 = vpop.f32.mrb[0].mxu0
      %v581 = vadd.f32 0.0, %v580
      %v582 = vpop.f32.mrb[0].mxu0
      %v583 = vpop.f32.mrb[0].mxu0
      %v584 = vadd.f32 0.0, %v583
      %v585 = vpop.f32.mrb[0].mxu0
      %586 = vmatprep.mubr.bf16.mxu0 0
      %587 = vmatmul.mubr.bf16.gmra.mrb[0].mxu0 %v535
      %v588 = vpop.f32.mrb[0].mxu0
      %v589 = vadd.f32 0.0, %v588
      %v590 = vpop.f32.mrb[0].mxu0
      %v591 = vpop.f32.mrb[0].mxu0
      %v592 = vadd.f32 0.0, %v591
      %v593 = vpop.f32.mrb[0].mxu0
      %594 = vmatprep.mubr.bf16.mxu0 0
      %595 = vmatmul.mubr.bf16.gmra.mrb[0].mxu0 %v538
      %v596 = vpop.f32.mrb[0].mxu0
      %v597 = vadd.f32 0.0, %v596
      %v598 = vpop.f32.mrb[0].mxu0
      %v599 = vpop.f32.mrb[0].mxu0
      %v600 = vadd.f32 0.0, %v599
      %v601 = vpop.f32.mrb[0].mxu0
      %602 = vmatprep.mubr.bf16.mxu0 0
      %603 = vmatmul.mubr.bf16.gmra.mrb[0].mxu0 %v541
      %v604 = vpop.f32.mrb[0].mxu0
      %v605 = vadd.f32 0.0, %v604
      %v606 = vpop.f32.mrb[0].mxu0
      %v607 = vpop.f32.mrb[0].mxu0
      %v608 = vadd.f32 0.0, %v607
      %v609 = vpop.f32.mrb[0].mxu0
      %610 = vmatprep.mubr.bf16.mxu0 0
      %611 = vmatmul.mubr.bf16.gmra.mrb[0].mxu0 %v544
      %v612 = vpop.f32.mrb[0].mxu0
      %v613 = vadd.f32 0.0, %v612
      %v614 = vpop.f32.mrb[0].mxu0
      %v615 = vpop.f32.mrb[0].mxu0
      %v616 = vpop.f32.mrb[0].mxu0
      %617 = vdwg.mxu0
      %v618 = vadd.f32 %v500, %v581
      %v619 = vadd.f32 %v501, %v584
      %v620 = vadd.f32 %v502, %v589
      %v621 = vadd.f32 %v503, %v592
      %v622 = vadd.f32 %v504, %v597
      %v623 = vadd.f32 %v505, %v600
      %v624 = vadd.f32 %v506, %v605
      %v625 = vadd.f32 %v507, %v608
      %v626 = vadd.f32 %v508, %v613
      %v627 = vld [vmem:[%s165 + $0x108] sm:$0xff]
      %v628 = vld [vmem:[%s165 + $0x110] sm:$0xff]
      %v629 = vld [vmem:[%s165 + $0x118] sm:$0xff]
      %v630 = vld [vmem:[%s165 + $0x120] sm:$0xff]
      %v631 = vld [vmem:[%s165 + $0x128] sm:$0xff]
      %v632 = vld [vmem:[%s165 + $0x130] sm:$0xff]
      %v633 = vld [vmem:[%s165 + $0x138] sm:$0xff]
      %v634 = vld [vmem:[%s165 + $0x140] sm:$0xff]
      %v635 = vld [vmem:[%s165 + $0x148] sm:$0xff]
      %v636 = vpack.c.bf16 %v628, %v627
      %v637 = vpack.c.bf16 %v630, %v629
      %v638 = vpack.c.bf16 %v632, %v631
      %v639 = vpack.c.bf16 %v634, %v633
      %v640 = vpack.c.bf16 %v635, %v635
      %v641 = vld [vmem:[%s1 + $0x20] sm:$0xf]
      %v642 = vld [vmem:[%s1 + $0x24] sm:$0xf]
      %v645 = vunpack.c.l.b16 %v641
      %v646 = vunpack.c.l.b16 %v642
      %v647 = vpack.c.b16 %v646, %v645
      %v650 = vsel %vm210, %v636, 0
      %v653 = vsel %vm210, %v637, 0
      %v656 = vsel %vm210, %v638, 0
      %v659 = vsel %vm210, %v639, 0
      %v662 = vsel %vm210, %v640, 0
      %664 = vmatprep.subr.bf16.mxu0 0
      %665 = vmatpush1.bf16.msra.mxu0 %v647
      %666 = vmatprep.subr.bf16.mxu0 0
      %667 = vmatpush1.bf16.msra.mxu0 0
      %668 = vmatprep.subr.bf16.mxu0 0
      %669 = vmatpush1.bf16.msra.mxu0 0
      %670 = vmatprep.subr.bf16.mxu0 0
      %671 = vmatpush1.bf16.msra.mxu0 0
      %672 = vmatprep.subr.bf16.mxu0 0
      %673 = vmatpush1.bf16.msra.mxu0 0
      %674 = vmatprep.subr.bf16.mxu0 0
      %675 = vmatpush1.bf16.msra.mxu0 0
      %676 = vmatprep.subr.bf16.mxu0 0
      %677 = vmatpush1.bf16.msra.mxu0 0
      %678 = vmatprep.subr.bf16.mxu0 0
      %679 = vmatpush1.bf16.msra.mxu0 0
      %680 = vmatprep.subr.bf16.mxu0 0
      %681 = vmatpush1.bf16.msra.mxu0 0
      %682 = vmatprep.subr.bf16.mxu0 0
      %683 = vmatpush1.bf16.msra.mxu0 0
      %684 = vmatprep.subr.bf16.mxu0 0
      %685 = vmatpush1.bf16.msra.mxu0 0
      %686 = vmatprep.subr.bf16.mxu0 0
      %687 = vmatpush1.bf16.msra.mxu0 0
      %688 = vmatprep.subr.bf16.mxu0 0
      %689 = vmatpush1.bf16.msra.mxu0 0
      %690 = vmatprep.subr.bf16.mxu0 0
      %691 = vmatpush1.bf16.msra.mxu0 0
      %692 = vmatprep.subr.bf16.mxu0 0
      %693 = vmatpush1.bf16.msra.mxu0 0
      %694 = vmatprep.subr.bf16.mxu0 0
      %695 = vmatpush1.bf16.msra.mxu0 0
      %696 = vmatprep.mubr.bf16.mxu0 0
      %697 = vmatmul.mubr.bf16.gmra.mrb[0].mxu0 %v650
      %v698 = vpop.f32.mrb[0].mxu0
      %v699 = vadd.f32 0.0, %v698
      %v700 = vpop.f32.mrb[0].mxu0
      %v701 = vpop.f32.mrb[0].mxu0
      %v702 = vadd.f32 0.0, %v701
      %v703 = vpop.f32.mrb[0].mxu0
      %704 = vmatprep.mubr.bf16.mxu0 0
      %705 = vmatmul.mubr.bf16.gmra.mrb[0].mxu0 %v653
      %v706 = vpop.f32.mrb[0].mxu0
      %v707 = vadd.f32 0.0, %v706
      %v708 = vpop.f32.mrb[0].mxu0
      %v709 = vpop.f32.mrb[0].mxu0
      %v710 = vadd.f32 0.0, %v709
      %v711 = vpop.f32.mrb[0].mxu0
      %712 = vmatprep.mubr.bf16.mxu0 0
      %713 = vmatmul.mubr.bf16.gmra.mrb[0].mxu0 %v656
      %v714 = vpop.f32.mrb[0].mxu0
      %v715 = vadd.f32 0.0, %v714
      %v716 = vpop.f32.mrb[0].mxu0
      %v717 = vpop.f32.mrb[0].mxu0
      %v718 = vadd.f32 0.0, %v717
      %v719 = vpop.f32.mrb[0].mxu0
      %720 = vmatprep.mubr.bf16.mxu0 0
      %721 = vmatmul.mubr.bf16.gmra.mrb[0].mxu0 %v659
      %v722 = vpop.f32.mrb[0].mxu0
      %v723 = vadd.f32 0.0, %v722
      %v724 = vpop.f32.mrb[0].mxu0
      %v725 = vpop.f32.mrb[0].mxu0
      %v726 = vadd.f32 0.0, %v725
      %v727 = vpop.f32.mrb[0].mxu0
      %728 = vmatprep.mubr.bf16.mxu0 0
      %729 = vmatmul.mubr.bf16.gmra.mrb[0].mxu0 %v662
      %v730 = vpop.f32.mrb[0].mxu0
      %v731 = vadd.f32 0.0, %v730
      %v732 = vpop.f32.mrb[0].mxu0
      %v733 = vpop.f32.mrb[0].mxu0
      %v734 = vpop.f32.mrb[0].mxu0
      %735 = vdwg.mxu0
      %v736 = vadd.f32 %v618, %v699
      %v737 = vadd.f32 %v619, %v702
      %v738 = vadd.f32 %v620, %v707
      %v739 = vadd.f32 %v621, %v710
      %v740 = vadd.f32 %v622, %v715
      %v741 = vadd.f32 %v623, %v718
      %v742 = vadd.f32 %v624, %v723
      %v743 = vadd.f32 %v625, %v726
      %v744 = vadd.f32 %v626, %v731
      %v745 = vld [vmem:[%s165 + $0xb1] sm:$0xff]
      %v746 = vld [vmem:[%s165 + $0xb9] sm:$0xff]
      %v747 = vld [vmem:[%s165 + $0xc1] sm:$0xff]
      %v748 = vld [vmem:[%s165 + $0xc9] sm:$0xff]
      %v749 = vld [vmem:[%s165 + $0xd1] sm:$0xff]
      %v750 = vld [vmem:[%s165 + $0xd9] sm:$0xff]
      %v751 = vld [vmem:[%s165 + $0xe1] sm:$0xff]
      %v752 = vld [vmem:[%s165 + $0xe9] sm:$0xff]
      %v753 = vld [vmem:[%s165 + $0xf1] sm:$0xff]
      %v754 = vpack.c.bf16 %v746, %v745
      %v755 = vpack.c.bf16 %v748, %v747
      %v756 = vpack.c.bf16 %v750, %v749
      %v757 = vpack.c.bf16 %v752, %v751
      %v758 = vpack.c.bf16 %v753, %v753
      %v759 = vld [vmem:[%s1 + $0x28] sm:$0xf]
      %v760 = vld [vmem:[%s1 + $0x2c] sm:$0xf]
      %v763 = vunpack.c.l.b16 %v759
      %v764 = vunpack.c.l.b16 %v760
      %v765 = vpack.c.b16 %v764, %v763
      %v768 = vsel %vm210, %v754, 0
      %v771 = vsel %vm210, %v755, 0
      %v774 = vsel %vm210, %v756, 0
      %v777 = vsel %vm210, %v757, 0
      %v780 = vsel %vm210, %v758, 0
      %782 = vmatprep.subr.bf16.mxu0 0
      %783 = vmatpush1.bf16.msra.mxu0 %v765
      %784 = vmatprep.subr.bf16.mxu0 0
      %785 = vmatpush1.bf16.msra.mxu0 0
      %786 = vmatprep.subr.bf16.mxu0 0
      %787 = vmatpush1.bf16.msra.mxu0 0
      %788 = vmatprep.subr.bf16.mxu0 0
      %789 = vmatpush1.bf16.msra.mxu0 0
      %790 = vmatprep.subr.bf16.mxu0 0
      %791 = vmatpush1.bf16.msra.mxu0 0
      %792 = vmatprep.subr.bf16.mxu0 0
      %793 = vmatpush1.bf16.msra.mxu0 0
      %794 = vmatprep.subr.bf16.mxu0 0
      %795 = vmatpush1.bf16.msra.mxu0 0
      %796 = vmatprep.subr.bf16.mxu0 0
      %797 = vmatpush1.bf16.msra.mxu0 0
      %798 = vmatprep.subr.bf16.mxu0 0
      %799 = vmatpush1.bf16.msra.mxu0 0
      %800 = vmatprep.subr.bf16.mxu0 0
      %801 = vmatpush1.bf16.msra.mxu0 0
      %802 = vmatprep.subr.bf16.mxu0 0
      %803 = vmatpush1.bf16.msra.mxu0 0
      %804 = vmatprep.subr.bf16.mxu0 0
      %805 = vmatpush1.bf16.msra.mxu0 0
      %806 = vmatprep.subr.bf16.mxu0 0
      %807 = vmatpush1.bf16.msra.mxu0 0
      %808 = vmatprep.subr.bf16.mxu0 0
      %809 = vmatpush1.bf16.msra.mxu0 0
      %810 = vmatprep.subr.bf16.mxu0 0
      %811 = vmatpush1.bf16.msra.mxu0 0
      %812 = vmatprep.subr.bf16.mxu0 0
      %813 = vmatpush1.bf16.msra.mxu0 0
      %814 = vmatprep.mubr.bf16.mxu0 0
      %815 = vmatmul.mubr.bf16.gmra.mrb[0].mxu0 %v768
      %v816 = vpop.f32.mrb[0].mxu0
      %v817 = vadd.f32 0.0, %v816
      %v818 = vpop.f32.mrb[0].mxu0
      %v819 = vpop.f32.mrb[0].mxu0
      %v820 = vadd.f32 0.0, %v819
      %v821 = vpop.f32.mrb[0].mxu0
      %822 = vmatprep.mubr.bf16.mxu0 0
      %823 = vmatmul.mubr.bf16.gmra.mrb[0].mxu0 %v771
      %v824 = vpop.f32.mrb[0].mxu0
      %v825 = vadd.f32 0.0, %v824
      %v826 = vpop.f32.mrb[0].mxu0
      %v827 = vpop.f32.mrb[0].mxu0
      %v828 = vadd.f32 0.0, %v827
      %v829 = vpop.f32.mrb[0].mxu0
      %830 = vmatprep.mubr.bf16.mxu0 0
      %831 = vmatmul.mubr.bf16.gmra.mrb[0].mxu0 %v774
      %v832 = vpop.f32.mrb[0].mxu0
      %v833 = vadd.f32 0.0, %v832
      %v834 = vpop.f32.mrb[0].mxu0
      %v835 = vpop.f32.mrb[0].mxu0
      %v836 = vadd.f32 0.0, %v835
      %v837 = vpop.f32.mrb[0].mxu0
      %838 = vmatprep.mubr.bf16.mxu0 0
      %839 = vmatmul.mubr.bf16.gmra.mrb[0].mxu0 %v777
      %v840 = vpop.f32.mrb[0].mxu0
      %v841 = vadd.f32 0.0, %v840
      %v842 = vpop.f32.mrb[0].mxu0
      %v843 = vpop.f32.mrb[0].mxu0
      %v844 = vadd.f32 0.0, %v843
      %v845 = vpop.f32.mrb[0].mxu0
      %846 = vmatprep.mubr.bf16.mxu0 0
      %847 = vmatmul.mubr.bf16.gmra.mrb[0].mxu0 %v780
      %v848 = vpop.f32.mrb[0].mxu0
      %v849 = vadd.f32 0.0, %v848
      %v850 = vpop.f32.mrb[0].mxu0
      %v851 = vpop.f32.mrb[0].mxu0
      %v852 = vpop.f32.mrb[0].mxu0
      %853 = vdwg.mxu0
      %v854 = vadd.f32 %v736, %v817
      %v855 = vadd.f32 %v737, %v820
      %v856 = vadd.f32 %v738, %v825
      %v857 = vadd.f32 %v739, %v828
      %v858 = vadd.f32 %v740, %v833
      %v859 = vadd.f32 %v741, %v836
      %v860 = vadd.f32 %v742, %v841
      %v861 = vadd.f32 %v743, %v844
      %v862 = vadd.f32 %v744, %v849
      %v863 = vld [vmem:[%s165 + $0x9] sm:$0xff]
      %v864 = vld [vmem:[%s165 + $0x11] sm:$0xff]
      %v865 = vld [vmem:[%s165 + $0x19] sm:$0xff]
      %v866 = vld [vmem:[%s165 + $0x21] sm:$0xff]
      %v867 = vld [vmem:[%s165 + $0x29] sm:$0xff]
      %v868 = vld [vmem:[%s165 + $0x31] sm:$0xff]
      %v869 = vld [vmem:[%s165 + $0x39] sm:$0xff]
      %v870 = vld [vmem:[%s165 + $0x41] sm:$0xff]
      %v871 = vld [vmem:[%s165 + $0x49] sm:$0xff]
      %v872 = vpack.c.bf16 %v864, %v863
      %v873 = vpack.c.bf16 %v866, %v865
      %v874 = vpack.c.bf16 %v868, %v867
      %v875 = vpack.c.bf16 %v870, %v869
      %v876 = vpack.c.bf16 %v871, %v871
      %v877 = vld [vmem:[%s1 + $0x30] sm:$0xf]
      %v878 = vld [vmem:[%s1 + $0x34] sm:$0xf]
      %v881 = vunpack.c.l.b16 %v877
      %v882 = vunpack.c.l.b16 %v878
      %v883 = vpack.c.b16 %v882, %v881
      %v886 = vsel %vm210, %v872, 0
      %v889 = vsel %vm210, %v873, 0
      %v892 = vsel %vm210, %v874, 0
      %v895 = vsel %vm210, %v875, 0
      %v898 = vsel %vm210, %v876, 0
      %900 = vmatprep.subr.bf16.mxu0 0
      %901 = vmatpush1.bf16.msra.mxu0 %v883
      %902 = vmatprep.subr.bf16.mxu0 0
      %903 = vmatpush1.bf16.msra.mxu0 0
      %904 = vmatprep.subr.bf16.mxu0 0
      %905 = vmatpush1.bf16.msra.mxu0 0
      %906 = vmatprep.subr.bf16.mxu0 0
      %907 = vmatpush1.bf16.msra.mxu0 0
      %908 = vmatprep.subr.bf16.mxu0 0
      %909 = vmatpush1.bf16.msra.mxu0 0
      %910 = vmatprep.subr.bf16.mxu0 0
      %911 = vmatpush1.bf16.msra.mxu0 0
      %912 = vmatprep.subr.bf16.mxu0 0
      %913 = vmatpush1.bf16.msra.mxu0 0
      %914 = vmatprep.subr.bf16.mxu0 0
      %915 = vmatpush1.bf16.msra.mxu0 0
      %916 = vmatprep.subr.bf16.mxu0 0
      %917 = vmatpush1.bf16.msra.mxu0 0
      %918 = vmatprep.subr.bf16.mxu0 0
      %919 = vmatpush1.bf16.msra.mxu0 0
      %920 = vmatprep.subr.bf16.mxu0 0
      %921 = vmatpush1.bf16.msra.mxu0 0
      %922 = vmatprep.subr.bf16.mxu0 0
      %923 = vmatpush1.bf16.msra.mxu0 0
      %924 = vmatprep.subr.bf16.mxu0 0
      %925 = vmatpush1.bf16.msra.mxu0 0
      %926 = vmatprep.subr.bf16.mxu0 0
      %927 = vmatpush1.bf16.msra.mxu0 0
      %928 = vmatprep.subr.bf16.mxu0 0
      %929 = vmatpush1.bf16.msra.mxu0 0
      %930 = vmatprep.subr.bf16.mxu0 0
      %931 = vmatpush1.bf16.msra.mxu0 0
      %932 = vmatprep.mubr.bf16.mxu0 0
      %933 = vmatmul.mubr.bf16.gmra.mrb[0].mxu0 %v886
      %v934 = vpop.f32.mrb[0].mxu0
      %v935 = vadd.f32 0.0, %v934
      %v936 = vpop.f32.mrb[0].mxu0
      %v937 = vpop.f32.mrb[0].mxu0
      %v938 = vadd.f32 0.0, %v937
      %v939 = vpop.f32.mrb[0].mxu0
      %940 = vmatprep.mubr.bf16.mxu0 0
      %941 = vmatmul.mubr.bf16.gmra.mrb[0].mxu0 %v889
      %v942 = vpop.f32.mrb[0].mxu0
      %v943 = vadd.f32 0.0, %v942
      %v944 = vpop.f32.mrb[0].mxu0
      %v945 = vpop.f32.mrb[0].mxu0
      %v946 = vadd.f32 0.0, %v945
      %v947 = vpop.f32.mrb[0].mxu0
      %948 = vmatprep.mubr.bf16.mxu0 0
      %949 = vmatmul.mubr.bf16.gmra.mrb[0].mxu0 %v892
      %v950 = vpop.f32.mrb[0].mxu0
      %v951 = vadd.f32 0.0, %v950
      %v952 = vpop.f32.mrb[0].mxu0
      %v953 = vpop.f32.mrb[0].mxu0
      %v954 = vadd.f32 0.0, %v953
      %v955 = vpop.f32.mrb[0].mxu0
      %956 = vmatprep.mubr.bf16.mxu0 0
      %957 = vmatmul.mubr.bf16.gmra.mrb[0].mxu0 %v895
      %v958 = vpop.f32.mrb[0].mxu0
      %v959 = vadd.f32 0.0, %v958
      %v960 = vpop.f32.mrb[0].mxu0
      %v961 = vpop.f32.mrb[0].mxu0
      %v962 = vadd.f32 0.0, %v961
      %v963 = vpop.f32.mrb[0].mxu0
      %964 = vmatprep.mubr.bf16.mxu0 0
      %965 = vmatmul.mubr.bf16.gmra.mrb[0].mxu0 %v898
      %v966 = vpop.f32.mrb[0].mxu0
      %v967 = vadd.f32 0.0, %v966
      %v968 = vpop.f32.mrb[0].mxu0
      %v969 = vpop.f32.mrb[0].mxu0
      %v970 = vpop.f32.mrb[0].mxu0
      %971 = vdwg.mxu0
      %v972 = vadd.f32 %v854, %v935
      %v973 = vadd.f32 %v855, %v938
      %v974 = vadd.f32 %v856, %v943
      %v975 = vadd.f32 %v857, %v946
      %v976 = vadd.f32 %v858, %v951
      %v977 = vadd.f32 %v859, %v954
      %v978 = vadd.f32 %v860, %v959
      %v979 = vadd.f32 %v861, %v962
      %v980 = vadd.f32 %v862, %v967
      %v981 = vld [vmem:[%s165 + $0x61] sm:$0xff]
      %v982 = vld [vmem:[%s165 + $0x69] sm:$0xff]
      %v983 = vld [vmem:[%s165 + $0x71] sm:$0xff]
      %v984 = vld [vmem:[%s165 + $0x79] sm:$0xff]
      %v985 = vld [vmem:[%s165 + $0x81] sm:$0xff]
      %v986 = vld [vmem:[%s165 + $0x89] sm:$0xff]
      %v987 = vld [vmem:[%s165 + $0x91] sm:$0xff]
      %v988 = vld [vmem:[%s165 + $0x99] sm:$0xff]
      %v989 = vld [vmem:[%s165 + $0xa1] sm:$0xff]
      %v990 = vpack.c.bf16 %v982, %v981
      %v991 = vpack.c.bf16 %v984, %v983
      %v992 = vpack.c.bf16 %v986, %v985
      %v993 = vpack.c.bf16 %v988, %v987
      %v994 = vpack.c.bf16 %v989, %v989
      %v995 = vld [vmem:[%s1 + $0x38] sm:$0xf]
      %v996 = vld [vmem:[%s1 + $0x3c] sm:$0xf]
      %v999 = vunpack.c.l.b16 %v995
      %v1000 = vunpack.c.l.b16 %v996
      %v1001 = vpack.c.b16 %v1000, %v999
      %v1004 = vsel %vm210, %v990, 0
      %v1007 = vsel %vm210, %v991, 0
      %v1010 = vsel %vm210, %v992, 0
      %v1013 = vsel %vm210, %v993, 0
      %v1016 = vsel %vm210, %v994, 0
      %1018 = vmatprep.subr.bf16.mxu0 0
      %1019 = vmatpush1.bf16.msra.mxu0 %v1001
      %1020 = vmatprep.subr.bf16.mxu0 0
      %1021 = vmatpush1.bf16.msra.mxu0 0
      %1022 = vmatprep.subr.bf16.mxu0 0
      %1023 = vmatpush1.bf16.msra.mxu0 0
      %1024 = vmatprep.subr.bf16.mxu0 0
      %1025 = vmatpush1.bf16.msra.mxu0 0
      %1026 = vmatprep.subr.bf16.mxu0 0
      %1027 = vmatpush1.bf16.msra.mxu0 0
      %1028 = vmatprep.subr.bf16.mxu0 0
      %1029 = vmatpush1.bf16.msra.mxu0 0
      %1030 = vmatprep.subr.bf16.mxu0 0
      %1031 = vmatpush1.bf16.msra.mxu0 0
      %1032 = vmatprep.subr.bf16.mxu0 0
      %1033 = vmatpush1.bf16.msra.mxu0 0
      %1034 = vmatprep.subr.bf16.mxu0 0
      %1035 = vmatpush1.bf16.msra.mxu0 0
      %1036 = vmatprep.subr.bf16.mxu0 0
      %1037 = vmatpush1.bf16.msra.mxu0 0
      %1038 = vmatprep.subr.bf16.mxu0 0
      %1039 = vmatpush1.bf16.msra.mxu0 0
      %1040 = vmatprep.subr.bf16.mxu0 0
      %1041 = vmatpush1.bf16.msra.mxu0 0
      %1042 = vmatprep.subr.bf16.mxu0 0
      %1043 = vmatpush1.bf16.msra.mxu0 0
      %1044 = vmatprep.subr.bf16.mxu0 0
      %1045 = vmatpush1.bf16.msra.mxu0 0
      %1046 = vmatprep.subr.bf16.mxu0 0
      %1047 = vmatpush1.bf16.msra.mxu0 0
      %1048 = vmatprep.subr.bf16.mxu0 0
      %1049 = vmatpush1.bf16.msra.mxu0 0
      %1050 = vmatprep.mubr.bf16.mxu0 0
      %1051 = vmatmul.mubr.bf16.gmra.mrb[0].mxu0 %v1004
      %v1052 = vpop.f32.mrb[0].mxu0
      %v1053 = vadd.f32 0.0, %v1052
      %v1054 = vpop.f32.mrb[0].mxu0
      %v1055 = vpop.f32.mrb[0].mxu0
      %v1056 = vadd.f32 0.0, %v1055
      %v1057 = vpop.f32.mrb[0].mxu0
      %1058 = vmatprep.mubr.bf16.mxu0 0
      %1059 = vmatmul.mubr.bf16.gmra.mrb[0].mxu0 %v1007
      %v1060 = vpop.f32.mrb[0].mxu0
      %v1061 = vadd.f32 0.0, %v1060
      %v1062 = vpop.f32.mrb[0].mxu0
      %v1063 = vpop.f32.mrb[0].mxu0
      %v1064 = vadd.f32 0.0, %v1063
      %v1065 = vpop.f32.mrb[0].mxu0
      %1066 = vmatprep.mubr.bf16.mxu0 0
      %1067 = vmatmul.mubr.bf16.gmra.mrb[0].mxu0 %v1010
      %v1068 = vpop.f32.mrb[0].mxu0
      %v1069 = vadd.f32 0.0, %v1068
      %v1070 = vpop.f32.mrb[0].mxu0
      %v1071 = vpop.f32.mrb[0].mxu0
      %v1072 = vadd.f32 0.0, %v1071
      %v1073 = vpop.f32.mrb[0].mxu0
      %1074 = vmatprep.mubr.bf16.mxu0 0
      %1075 = vmatmul.mubr.bf16.gmra.mrb[0].mxu0 %v1013
      %v1076 = vpop.f32.mrb[0].mxu0
      %v1077 = vadd.f32 0.0, %v1076
      %v1078 = vpop.f32.mrb[0].mxu0
      %v1079 = vpop.f32.mrb[0].mxu0
      %v1080 = vadd.f32 0.0, %v1079
      %v1081 = vpop.f32.mrb[0].mxu0
      %1082 = vmatprep.mubr.bf16.mxu0 0
      %1083 = vmatmul.mubr.bf16.gmra.mrb[0].mxu0 %v1016
      %v1084 = vpop.f32.mrb[0].mxu0
      %v1085 = vadd.f32 0.0, %v1084
      %v1086 = vpop.f32.mrb[0].mxu0
      %v1087 = vpop.f32.mrb[0].mxu0
      %v1088 = vpop.f32.mrb[0].mxu0
      %1089 = vdwg.mxu0
      %v1090 = vadd.f32 %v972, %v1053
      %v1091 = vadd.f32 %v973, %v1056
      %v1092 = vadd.f32 %v974, %v1061
      %v1093 = vadd.f32 %v975, %v1064
      %v1094 = vadd.f32 %v976, %v1069
      %v1095 = vadd.f32 %v977, %v1072
      %v1096 = vadd.f32 %v978, %v1077
      %v1097 = vadd.f32 %v979, %v1080
      %v1098 = vadd.f32 %v980, %v1085
      %v1099 = vld [vmem:[%s165 + $0xa] sm:$0xff]
      %v1100 = vld [vmem:[%s165 + $0x12] sm:$0xff]
      %v1101 = vld [vmem:[%s165 + $0x1a] sm:$0xff]
      %v1102 = vld [vmem:[%s165 + $0x22] sm:$0xff]
      %v1103 = vld [vmem:[%s165 + $0x2a] sm:$0xff]
      %v1104 = vld [vmem:[%s165 + $0x32] sm:$0xff]
      %v1105 = vld [vmem:[%s165 + $0x3a] sm:$0xff]
      %v1106 = vld [vmem:[%s165 + $0x42] sm:$0xff]
      %v1107 = vld [vmem:[%s165 + $0x4a] sm:$0xff]
      %v1108 = vpack.c.bf16 %v1100, %v1099
      %v1109 = vpack.c.bf16 %v1102, %v1101
      %v1110 = vpack.c.bf16 %v1104, %v1103
      %v1111 = vpack.c.bf16 %v1106, %v1105
      %v1112 = vpack.c.bf16 %v1107, %v1107
      %v1113 = vld [vmem:[%s1 + $0x40] sm:$0xf]
      %v1114 = vld [vmem:[%s1 + $0x44] sm:$0xf]
      %v1117 = vunpack.c.l.b16 %v1113
      %v1118 = vunpack.c.l.b16 %v1114
      %v1119 = vpack.c.b16 %v1118, %v1117
      %v1122 = vsel %vm210, %v1108, 0
      %v1125 = vsel %vm210, %v1109, 0
      %v1128 = vsel %vm210, %v1110, 0
      %v1131 = vsel %vm210, %v1111, 0
      %v1134 = vsel %vm210, %v1112, 0
      %1136 = vmatprep.subr.bf16.mxu0 0
      %1137 = vmatpush1.bf16.msra.mxu0 %v1119
      %1138 = vmatprep.subr.bf16.mxu0 0
      %1139 = vmatpush1.bf16.msra.mxu0 0
      %1140 = vmatprep.subr.bf16.mxu0 0
      %1141 = vmatpush1.bf16.msra.mxu0 0
      %1142 = vmatprep.subr.bf16.mxu0 0
      %1143 = vmatpush1.bf16.msra.mxu0 0
      %1144 = vmatprep.subr.bf16.mxu0 0
      %1145 = vmatpush1.bf16.msra.mxu0 0
      %1146 = vmatprep.subr.bf16.mxu0 0
      %1147 = vmatpush1.bf16.msra.mxu0 0
      %1148 = vmatprep.subr.bf16.mxu0 0
      %1149 = vmatpush1.bf16.msra.mxu0 0
      %1150 = vmatprep.subr.bf16.mxu0 0
      %1151 = vmatpush1.bf16.msra.mxu0 0
      %1152 = vmatprep.subr.bf16.mxu0 0
      %1153 = vmatpush1.bf16.msra.mxu0 0
      %1154 = vmatprep.subr.bf16.mxu0 0
      %1155 = vmatpush1.bf16.msra.mxu0 0
      %1156 = vmatprep.subr.bf16.mxu0 0
      %1157 = vmatpush1.bf16.msra.mxu0 0
      %1158 = vmatprep.subr.bf16.mxu0 0
      %1159 = vmatpush1.bf16.msra.mxu0 0
      %1160 = vmatprep.subr.bf16.mxu0 0
      %1161 = vmatpush1.bf16.msra.mxu0 0
      %1162 = vmatprep.subr.bf16.mxu0 0
      %1163 = vmatpush1.bf16.msra.mxu0 0
      %1164 = vmatprep.subr.bf16.mxu0 0
      %1165 = vmatpush1.bf16.msra.mxu0 0
      %1166 = vmatprep.subr.bf16.mxu0 0
      %1167 = vmatpush1.bf16.msra.mxu0 0
      %1168 = vmatprep.mubr.bf16.mxu0 0
      %1169 = vmatmul.mubr.bf16.gmra.mrb[0].mxu0 %v1122
      %v1170 = vpop.f32.mrb[0].mxu0
      %v1171 = vadd.f32 0.0, %v1170
      %v1172 = vpop.f32.mrb[0].mxu0
      %v1173 = vpop.f32.mrb[0].mxu0
      %v1174 = vadd.f32 0.0, %v1173
      %v1175 = vpop.f32.mrb[0].mxu0
      %1176 = vmatprep.mubr.bf16.mxu0 0
      %1177 = vmatmul.mubr.bf16.gmra.mrb[0].mxu0 %v1125
      %v1178 = vpop.f32.mrb[0].mxu0
      %v1179 = vadd.f32 0.0, %v1178
      %v1180 = vpop.f32.mrb[0].mxu0
      %v1181 = vpop.f32.mrb[0].mxu0
      %v1182 = vadd.f32 0.0, %v1181
      %v1183 = vpop.f32.mrb[0].mxu0
      %1184 = vmatprep.mubr.bf16.mxu0 0
      %1185 = vmatmul.mubr.bf16.gmra.mrb[0].mxu0 %v1128
      %v1186 = vpop.f32.mrb[0].mxu0
      %v1187 = vadd.f32 0.0, %v1186
      %v1188 = vpop.f32.mrb[0].mxu0
      %v1189 = vpop.f32.mrb[0].mxu0
      %v1190 = vadd.f32 0.0, %v1189
      %v1191 = vpop.f32.mrb[0].mxu0
      %1192 = vmatprep.mubr.bf16.mxu0 0
      %1193 = vmatmul.mubr.bf16.gmra.mrb[0].mxu0 %v1131
      %v1194 = vpop.f32.mrb[0].mxu0
      %v1195 = vadd.f32 0.0, %v1194
      %v1196 = vpop.f32.mrb[0].mxu0
      %v1197 = vpop.f32.mrb[0].mxu0
      %v1198 = vadd.f32 0.0, %v1197
      %v1199 = vpop.f32.mrb[0].mxu0
      %1200 = vmatprep.mubr.bf16.mxu0 0
      %1201 = vmatmul.mubr.bf16.gmra.mrb[0].mxu0 %v1134
      %v1202 = vpop.f32.mrb[0].mxu0
      %v1203 = vadd.f32 0.0, %v1202
      %v1204 = vpop.f32.mrb[0].mxu0
      %v1205 = vpop.f32.mrb[0].mxu0
      %v1206 = vpop.f32.mrb[0].mxu0
      %1207 = vdwg.mxu0
      %v1208 = vadd.f32 %v1090, %v1171
      %v1209 = vadd.f32 %v1091, %v1174
      %v1210 = vadd.f32 %v1092, %v1179
      %v1211 = vadd.f32 %v1093, %v1182
      %v1212 = vadd.f32 %v1094, %v1187
      %v1213 = vadd.f32 %v1095, %v1190
      %v1214 = vadd.f32 %v1096, %v1195
      %v1215 = vadd.f32 %v1097, %v1198
      %v1216 = vadd.f32 %v1098, %v1203
      %v1217 = vld [vmem:[%s2] sm:$0x1]
      %v1219 = vlaneseq
      %v1220 = vshrl.u32 %v1219, 7
      %v1221 = vsub.s32 0, %v1220
      %v1222 = vrot.slane %v1217, %v1221
      %v1224 = vadd.f32 %v1208, %v1222
      %v1225 = vadd.f32 %v1209, %v1222
      %v1226 = vadd.f32 %v1210, %v1222
      %v1227 = vadd.f32 %v1211, %v1222
      %v1228 = vadd.f32 %v1212, %v1222
      %v1229 = vadd.f32 %v1213, %v1222
      %v1230 = vadd.f32 %v1214, %v1222
      %v1231 = vadd.f32 %v1215, %v1222
      %v1232 = vadd.f32 %v1216, %v1222
      %v1233 = vsub.f32 0.0, %v1224
      %v1234 = vsub.f32 0.0, %v1225
      %v1235 = vsub.f32 0.0, %v1226
      %v1236 = vsub.f32 0.0, %v1227
      %v1237 = vsub.f32 0.0, %v1228
      %v1238 = vsub.f32 0.0, %v1229
      %v1239 = vsub.f32 0.0, %v1230
      %v1240 = vsub.f32 0.0, %v1231
      %v1241 = vsub.f32 0.0, %v1232
      %v1242 = vmul.f32 %v1233, 1.442695
      %v1243 = vpow.pop %v1242
      %v1244 = vmul.f32 %v1234, 1.442695
      %v1245 = vpow.pop %v1244
      %v1246 = vmul.f32 %v1235, 1.442695
      %v1247 = vpow.pop %v1246
      %v1248 = vmul.f32 %v1236, 1.442695
      %v1249 = vpow.pop %v1248
      %v1250 = vmul.f32 %v1237, 1.442695
      %v1251 = vpow.pop %v1250
      %v1252 = vmul.f32 %v1238, 1.442695
      %v1253 = vpow.pop %v1252
      %v1254 = vmul.f32 %v1239, 1.442695
      %v1255 = vpow.pop %v1254
      %v1256 = vmul.f32 %v1240, 1.442695
      %v1257 = vpow.pop %v1256
      %v1258 = vmul.f32 %v1241, 1.442695
      %v1259 = vpow.pop %v1258
      %v1260 = vadd.f32 %v1243, 1.0
      %v1261 = vadd.f32 %v1245, 1.0
      %v1262 = vadd.f32 %v1247, 1.0
      %v1263 = vadd.f32 %v1249, 1.0
      %v1264 = vadd.f32 %v1251, 1.0
      %v1265 = vadd.f32 %v1253, 1.0
      %v1266 = vadd.f32 %v1255, 1.0
      %v1267 = vadd.f32 %v1257, 1.0
      %v1268 = vadd.f32 %v1259, 1.0
      %v1269 = vrcp.pop %v1260
      %v1270 = vrcp.pop %v1261
      %v1271 = vrcp.pop %v1262
      %v1272 = vrcp.pop %v1263
      %v1273 = vrcp.pop %v1264
      %v1274 = vrcp.pop %v1265
      %v1275 = vrcp.pop %v1266
      %v1276 = vrcp.pop %v1267
      %v1277 = vrcp.pop %v1268
      %v1278 = vmul.f32 %v1224, %v1269
      %v1279 = vmul.f32 %v1225, %v1270
      %v1280 = vmul.f32 %v1226, %v1271
      %v1281 = vmul.f32 %v1227, %v1272
      %v1282 = vmul.f32 %v1228, %v1273
      %v1283 = vmul.f32 %v1229, %v1274
      %v1284 = vmul.f32 %v1230, %v1275
      %v1285 = vmul.f32 %v1231, %v1276
      %v1286 = vmul.f32 %v1232, %v1277
      %vm1287 = vcmask 261120
      %1288 = vst.msk [vmem:[%s170] sm:$0xff] %vm1287, %v1278
      %1289 = vst.msk [vmem:[%s170 + $0x8] sm:$0xff] %vm1287, %v1279
      %1290 = vst.msk [vmem:[%s170 + $0x10] sm:$0xff] %vm1287, %v1280
      %1291 = vst.msk [vmem:[%s170 + $0x18] sm:$0xff] %vm1287, %v1281
      %1292 = vst.msk [vmem:[%s170 + $0x20] sm:$0xff] %vm1287, %v1282
      %1293 = vst.msk [vmem:[%s170 + $0x28] sm:$0xff] %vm1287, %v1283
      %1294 = vst.msk [vmem:[%s170 + $0x30] sm:$0xff] %vm1287, %v1284
      %1295 = vst.msk [vmem:[%s170 + $0x38] sm:$0xff] %vm1287, %v1285
      %1296 = vst.msk [vmem:[%s170 + $0x40] sm:$0xff] %vm1287, %v1286
      %p1297 = scmp.lt.s32.totalorder %s14, 1
      %s1298 = scalar_select %p1297, %s14, 1
      %s1299 = smul.addr %s1298, 9
      %s1300 = smul.addr %s1299, 8
      %s1301 = scalar_lea.vmem %s3, %s1300
      // Predicated region
      $region33: #{csp_darknet_forward.4} parent=31 // pred_check
        %p1302 = pneg %p100
      $region34: #{csp_darknet_forward.4} parent=31 // pred_check_branch
        %1304 = sbr.rel (%p1302) target = $region36
      $region35: #{csp_darknet_forward.4} parent=31 // pred_region
        _
      $region36: #{csp_darknet_forward.4} parent=31 // pred_fallthru
        _
    $region32: #{csp_darknet_forward.4} parent=5 // pred_fallthru
      _
    %p1305 = scmp.le.s32.totalorder 2, %s9
    // Predicated region
    $region37: #{csp_darknet_forward.4} parent=5 // pred_check
      %p1306 = pneg %p1305
    $region38: #{csp_darknet_forward.4} parent=5 // pred_check_branch
      %1308 = sbr.rel (%p1306) target = $region40
    $region39: #{csp_darknet_forward.4} parent=5 // pred_region
      %s1309 = ssub.s32 %s9, 2
      // Predicated region
      $region41: #{csp_darknet_forward.4} parent=39 // pred_check
        %p1310 = pneg %p106
      $region42: #{csp_darknet_forward.4} parent=39 // pred_check_branch
        %1312 = sbr.rel (%p1310) target = $region44
      $region43: #{csp_darknet_forward.4} parent=39 // pred_region
        %p1313 = scmp.lt.s32.totalorder %s15, 1
        %s1314 = scalar_select %p1313, %s15, 1
        %s1315 = smul.addr %s1314, 9
        %s1316 = smul.addr %s1315, 8
        %s1317 = scalar_lea.vmem %s3, %s1316
      $region44: #{csp_darknet_forward.4} parent=39 // pred_fallthru
        _
    $region40: #{csp_darknet_forward.4} parent=5 // pred_fallthru
      _
  $region6: #{csp_darknet_forward.4} parent=0 // loop_footer
    %s13 = sadd.s32 1, %s9
  $region7: #{csp_darknet_forward.4} parent=0 // loop_footer_branch
    %8 = sbr.rel target = $region3
  $region8: #{csp_darknet_forward.4} parent=0 // loop_exit
    _

</llo_original>
